<compile_context>
chip_gen: v7x
topology: tpu7x:2x2x1
jax: 0.10.0
libtpu: 0.0.40
codegen_flags: <defaults>
</compile_context>

<pallas_src>
import jax
import jax.numpy as jnp
from jax.experimental import pallas as pl
from jax.experimental.pallas import tpu as pltpu

CP = 128        # padded channel width -> lane-dense (M, 128) output slabs
BN_EPS = 1e-5


def _full_spec(shape):
    zeros = (0,) * len(shape)
    return pl.BlockSpec(shape, lambda i: zeros)


# ---------------------------------------------------------------------------
# Pallas kernels
# ---------------------------------------------------------------------------

def conv_pool_bn_kernel(patches_ref, w_ref, b_ref, gamma_ref, beta_ref, out_ref):
    """Fused conv3x3(pad=1) + bias + ReLU + MaxPool(2,2) + BatchNorm(train).

    patches_ref: (M, 16*Cin) bf16   -- 4x4 receptive field of each pooled output
    w_ref:       (16*Cin, 4*CP) bf16 -- 4 column blocks = 2x2 pool positions
    b_ref/gamma_ref/beta_ref: (1, CP) f32 (zero-padded past Cout)
    out_ref:     (M, CP) f32, M = N*Ho*Wo
    """
    m = out_ref.shape[0]
    cp = out_ref.shape[1]

    # Single MXU call covering all 4 pool positions (f32 accumulation).
    y = jnp.dot(patches_ref[...], w_ref[...], preferred_element_type=jnp.float32)

    # 2x2 max-pool = max over the 4 position blocks (128-lane-aligned slices),
    # then bias + ReLU (equivalent to ReLU-then-pool since bias is per-channel
    # and ReLU is monotone).
    pooled = jnp.maximum(jnp.maximum(y[:, 0 * cp:1 * cp], y[:, 1 * cp:2 * cp]),
                         jnp.maximum(y[:, 2 * cp:3 * cp], y[:, 3 * cp:4 * cp]))
    z = jnp.maximum(pooled + b_ref[...], 0.0)

    # BatchNorm2d (training mode): batch statistics over all M = N*Ho*Wo rows.
    # One pass: accumulate sum and sumsq, var = E[x^2] - mean^2, fold
    # scale/shift so the per-element normalize is one mul + one add.
    inv_m = 1.0 / m
    mean = jnp.sum(z, axis=0, keepdims=True) * inv_m
    var = jnp.maximum(
        jnp.sum(z * z, axis=0, keepdims=True) * inv_m - mean * mean, 0.0)
    scale = gamma_ref[...] * jax.lax.rsqrt(var + BN_EPS)
    shift = beta_ref[...] - mean * scale
    out_ref[...] = z * scale + shift
    # TODO(synk): nn.BatchNorm2d running_mean/running_var buffer updates
    # (stateful side effect) are not emitted; they do not affect this output.


def head_kernel(x_ref, w1_ref, b1_ref, w2_ref, feat_ref, mu_ref):
    """Linear(1024->128) + ReLU, then Linear(128->1, no bias)."""
    h = jnp.dot(x_ref[...], w1_ref[...], preferred_element_type=jnp.float32)
    h = jnp.maximum(h + b1_ref[...], 0.0)
    feat_ref[...] = h
    # 128 -> 1 projection as VPU multiply + cross-lane reduce (avoids a
    # 1-column MXU matmul that would waste 127/128 of the output tile).
    mu_ref[...] = jnp.sum(h * w2_ref[...], axis=1, keepdims=True)


# ---------------------------------------------------------------------------
# Stage wrappers (plain-JAX glue: padding / reduced im2col / weight embedding)
# ---------------------------------------------------------------------------

def conv_pool_bn_stage(x_nhwc, w, b, gamma, beta):
    """x_nhwc: (N,H,W,Cin) f32, w: (3,3,Cin,Cout) -> (N,H//2,W//2,Cout) f32."""
    N, H, W, Cin = x_nhwc.shape
    Cout = w.shape[-1]
    Ho, Wo = H // 2, W // 2
    M = N * Ho * Wo
    K = 16 * Cin

    xp = jnp.pad(x_nhwc, ((0, 0), (1, 1), (1, 1), (0, 0)))

    # Reduced im2col: only the unique 4x4 receptive field of each pooled
    # output (16*Cin columns instead of 4*9*Cin), cast to bf16.
    taps = [xp[:, ry:ry + 2 * Ho:2, rx:rx + 2 * Wo:2, :]
            for ry in range(4) for rx in range(4)]            # each (N,Ho,Wo,Cin)
    patches = jnp.concatenate(taps, axis=-1).reshape(M, K).astype(jnp.bfloat16)

    # Embed the 3x3 kernel into the 4x4 receptive field once per pool
    # position p=(dy,dx): Wbig[(ry,rx,ci),(p,co)] = w[ry-dy, rx-dx, ci, co].
    wbig = jnp.zeros((4, 4, Cin, 4, CP), jnp.float32)
    for dy in range(2):
        for dx in range(2):
            p = dy * 2 + dx
            wbig = wbig.at[dy:dy + 3, dx:dx + 3, :, p, :Cout].set(w)
    wbig = wbig.reshape(K, 4 * CP).astype(jnp.bfloat16)

    def pad_c(v):  # (Cout,) -> (1, CP), zero-padded
        return jnp.pad(v, (0, CP - Cout)).reshape(1, CP)

    out = pl.pallas_call(
        conv_pool_bn_kernel,
        grid=(1,),
        in_specs=[_full_spec((M, K)),
                  _full_spec((K, 4 * CP)),
                  _full_spec((1, CP)),
                  _full_spec((1, CP)),
                  _full_spec((1, CP))],
        out_specs=_full_spec((M, CP)),
        out_shape=jax.ShapeDtypeStruct((M, CP), jnp.float32),
        compiler_params=pltpu.CompilerParams(
            dimension_semantics=("arbitrary",),
            vmem_limit_bytes=32 * 1024 * 1024),
    )(patches, wbig, pad_c(b), pad_c(gamma), pad_c(beta))

    # Drop the lane padding before the next (small) stage.
    return out[:, :Cout].reshape(N, Ho, Wo, Cout)


def head(flat, w_fc1, b_fc1, w_fc2):
    """flat: (N, 1024) -> (mu (N,1), feature (N,128))."""
    N, D = flat.shape
    F = w_fc1.shape[1]
    feat, mu = pl.pallas_call(
        head_kernel,
        grid=(1,),
        in_specs=[_full_spec((N, D)),
                  _full_spec((D, F)),
                  _full_spec((1, F)),
                  _full_spec((1, F))],
        out_specs=(_full_spec((N, F)), _full_spec((N, 1))),
        out_shape=(jax.ShapeDtypeStruct((N, F), jnp.float32),
                   jax.ShapeDtypeStruct((N, 1), jnp.float32)),
        compiler_params=pltpu.CompilerParams(
            dimension_semantics=("arbitrary",),
            vmem_limit_bytes=32 * 1024 * 1024),
    )(flat, w_fc1, b_fc1.reshape(1, F), w_fc2.reshape(1, F))
    return mu, feat


# ---------------------------------------------------------------------------
# Full forward (matches MiniConv.forward: returns (mu, feature))
# ---------------------------------------------------------------------------

def mini_conv_forward(x_nchw, params):
    x = jnp.transpose(x_nchw, (0, 2, 3, 1))  # NCHW -> NHWC
    for s in ("s1", "s2", "s3"):
        p = params[s]
        x = conv_pool_bn_stage(x, p["w"], p["b"], p["gamma"], p["beta"])
    # x: (N, 4, 4, 64).  The NCHW-flatten permutation is folded into w_fc1
    # (its rows are stored in (h, w, c) order), so flatten NHWC directly.
    N = x.shape[0]
    flat = x.reshape(N, 4 * 4 * 64)
    mu, feature = head(flat, params["w_fc1"], params["b_fc1"], params["w_fc2"])
    return mu, feature


# ---------------------------------------------------------------------------
# Deterministic synthetic parameter init
# ---------------------------------------------------------------------------

def init_params(key, in_channel):
    # Conv weights are HWIO (a PyTorch (Cout,Cin,3,3) weight maps via
    # transpose(2,3,1,0)).  w_fc1 rows are stored directly in (h, w, c)
    # flatten order (a PyTorch-layout (1024,128) weight with rows in (c,h,w)
    # order maps via reshape(64,4,4,128).transpose(1,2,0,3).reshape(1024,128)).
    def conv_stage_params(k, cin, cout):
        kw, kb, kg, kbt = jax.random.split(k, 4)
        return dict(
            w=0.1 * jax.random.normal(kw, (3, 3, cin, cout), jnp.float32),
            b=0.05 * jax.random.normal(kb, (cout,), jnp.float32),
            gamma=1.0 + 0.1 * jax.random.normal(kg, (cout,), jnp.float32),
            beta=0.05 * jax.random.normal(kbt, (cout,), jnp.float32),
        )

    k1, k2, k3, k4, k5, k6 = jax.random.split(key, 6)
    return dict(
        s1=conv_stage_params(k1, in_channel, 16),
        s2=conv_stage_params(k2, 16, 32),
        s3=conv_stage_params(k3, 32, 64),
        w_fc1=0.02 * jax.random.normal(k4, (64 * 4 * 4, 128), jnp.float32),
        b_fc1=0.02 * jax.random.normal(k5, (128,), jnp.float32),
        w_fc2=0.02 * jax.random.normal(k6, (128, 1), jnp.float32),
    )


if __name__ == "__main__":
    in_channel = 3
    batch = 2

    root = jax.random.PRNGKey(0)
    kp, kx = jax.random.split(root)
    params = init_params(kp, in_channel)
    # 32x32 spatial is implied by Linear(64*4*4, 128) after three 2x2 pools.
    x = jax.random.normal(kx, (batch, in_channel, 32, 32), jnp.float32)

    fwd = jax.jit(mini_conv_forward)
    mu, feature = fwd(x, params)
    jax.block_until_ready((mu, feature))

    assert mu.shape == (batch, 1), mu.shape
    assert feature.shape == (batch, 128), feature.shape
    assert mu.dtype == jnp.float32 and feature.dtype == jnp.float32
    assert bool(jnp.isfinite(mu).all()) and bool(jnp.isfinite(feature).all())
    print("KERNEL_OK")
</pallas_src>

<mosaic_0001>
module attributes {stable_mosaic.version = 11 : i64} {
  func.func @conv_pool_bn_kernel(%arg0: i32, %arg1: memref<512x48xbf16, #tpu.memory_space<vmem>>, %arg2: memref<48x512xbf16, #tpu.memory_space<vmem>>, %arg3: memref<1x128xf32, #tpu.memory_space<vmem>>, %arg4: memref<1x128xf32, #tpu.memory_space<vmem>>, %arg5: memref<1x128xf32, #tpu.memory_space<vmem>>, %arg6: memref<512x128xf32, #tpu.memory_space<vmem>>) attributes {dimension_semantics = [#tpu.dimension_semantics<arbitrary>], iteration_bounds = array<i64: 1>, scalar_prefetch = 0 : i64, scratch_operands = 0 : i64, tpu.core_type = #tpu.core_type<tc>, window_params = [{pipeline_mode = #tpu.pipeline_mode<synchronous>, transform_indices = @transform_0, window_bounds = array<i64: 512, 48>}, {pipeline_mode = #tpu.pipeline_mode<synchronous>, transform_indices = @transform_1, window_bounds = array<i64: 48, 512>}, {pipeline_mode = #tpu.pipeline_mode<synchronous>, transform_indices = @transform_2, window_bounds = array<i64: 1, 128>}, {pipeline_mode = #tpu.pipeline_mode<synchronous>, transform_indices = @transform_3, window_bounds = array<i64: 1, 128>}, {pipeline_mode = #tpu.pipeline_mode<synchronous>, transform_indices = @transform_4, window_bounds = array<i64: 1, 128>}, {pipeline_mode = #tpu.pipeline_mode<synchronous>, transform_indices = @transform_5, window_bounds = array<i64: 512, 128>}]} {
    %c0 = arith.constant 0 : index
    %c0_0 = arith.constant 0 : index
    %0 = vector.load %arg1[%c0, %c0_0] : memref<512x48xbf16, #tpu.memory_space<vmem>>, vector<512x48xbf16>
    %c0_1 = arith.constant 0 : index
    %c0_2 = arith.constant 0 : index
    %1 = vector.load %arg2[%c0_1, %c0_2] : memref<48x512xbf16, #tpu.memory_space<vmem>>, vector<48x512xbf16>
    %cst = arith.constant dense<0.000000e+00> : vector<512x512xf32>
    %2 = tpu.matmul %0, %1, %cst {dimension_numbers = #tpu.dot_dimension_numbers<[1], [0], [0], [1], [0, 0, 1, 1], [], []>} : vector<512x48xbf16>, vector<48x512xbf16>, vector<512x512xf32> -> vector<512x512xf32>
    %3 = vector.extract_strided_slice %2 {offsets = [0, 0], sizes = [512, 128], strides = [1, 1]} : vector<512x512xf32> to vector<512x128xf32>
    %4 = vector.extract_strided_slice %2 {offsets = [0, 128], sizes = [512, 128], strides = [1, 1]} : vector<512x512xf32> to vector<512x128xf32>
    %5 = arith.maximumf %3, %4 : vector<512x128xf32>
    %6 = vector.extract_strided_slice %2 {offsets = [0, 256], sizes = [512, 128], strides = [1, 1]} : vector<512x512xf32> to vector<512x128xf32>
    %7 = vector.extract_strided_slice %2 {offsets = [0, 384], sizes = [512, 128], strides = [1, 1]} : vector<512x512xf32> to vector<512x128xf32>
    %8 = arith.maximumf %6, %7 : vector<512x128xf32>
    %9 = arith.maximumf %5, %8 : vector<512x128xf32>
    %c0_3 = arith.constant 0 : index
    %c0_4 = arith.constant 0 : index
    %10 = vector.load %arg3[%c0_3, %c0_4] : memref<1x128xf32, #tpu.memory_space<vmem>>, vector<1x128xf32>
    %11 = vector.broadcast %10 : vector<1x128xf32> to vector<512x128xf32>
    %12 = arith.addf %9, %11 : vector<512x128xf32>
    %cst_5 = arith.constant 0.000000e+00 : f32
    %13 = vector.broadcast %cst_5 : f32 to vector<512x128xf32>
    %14 = arith.maximumf %12, %13 : vector<512x128xf32>
    %cst_6 = arith.constant dense<0.000000e+00> : vector<128xf32>
    %15 = vector.multi_reduction <add>, %14, %cst_6 [0] : vector<512x128xf32> to vector<128xf32>
    %16 = vector.shape_cast %15 : vector<128xf32> to vector<1x128xf32>
    %cst_7 = arith.constant 0.001953125 : f32
    %17 = vector.broadcast %cst_7 : f32 to vector<1x128xf32>
    %18 = arith.mulf %16, %17 : vector<1x128xf32>
    %19 = arith.mulf %14, %14 : vector<512x128xf32>
    %cst_8 = arith.constant dense<0.000000e+00> : vector<128xf32>
    %20 = vector.multi_reduction <add>, %19, %cst_8 [0] : vector<512x128xf32> to vector<128xf32>
    %21 = vector.shape_cast %20 : vector<128xf32> to vector<1x128xf32>
    %cst_9 = arith.constant 0.001953125 : f32
    %22 = vector.broadcast %cst_9 : f32 to vector<1x128xf32>
    %23 = arith.mulf %21, %22 : vector<1x128xf32>
    %24 = arith.mulf %18, %18 : vector<1x128xf32>
    %25 = arith.subf %23, %24 : vector<1x128xf32>
    %cst_10 = arith.constant 0.000000e+00 : f32
    %26 = vector.broadcast %cst_10 : f32 to vector<1x128xf32>
    %27 = arith.maximumf %25, %26 : vector<1x128xf32>
    %c0_11 = arith.constant 0 : index
    %c0_12 = arith.constant 0 : index
    %28 = vector.load %arg4[%c0_11, %c0_12] : memref<1x128xf32, #tpu.memory_space<vmem>>, vector<1x128xf32>
    %cst_13 = arith.constant 9.99999974E-6 : f32
    %29 = vector.broadcast %cst_13 : f32 to vector<1x128xf32>
    %30 = arith.addf %27, %29 : vector<1x128xf32>
    %31 = math.rsqrt %30 : vector<1x128xf32>
    %32 = arith.mulf %28, %31 : vector<1x128xf32>
    %c0_14 = arith.constant 0 : index
    %c0_15 = arith.constant 0 : index
    %33 = vector.load %arg5[%c0_14, %c0_15] : memref<1x128xf32, #tpu.memory_space<vmem>>, vector<1x128xf32>
    %34 = arith.mulf %18, %32 : vector<1x128xf32>
    %35 = arith.subf %33, %34 : vector<1x128xf32>
    %36 = vector.broadcast %32 : vector<1x128xf32> to vector<512x128xf32>
    %37 = arith.mulf %14, %36 : vector<512x128xf32>
    %38 = vector.broadcast %35 : vector<1x128xf32> to vector<512x128xf32>
    %39 = arith.addf %37, %38 : vector<512x128xf32>
    %c0_16 = arith.constant 0 : index
    %c0_17 = arith.constant 0 : index
    %40 = vector.load %arg6[%c0_16, %c0_17] : memref<512x128xf32, #tpu.memory_space<vmem>>, vector<512x128xf32>
    tpu.vector_store %arg6[%c0_16, %c0_17], %39 {strides = array<i32>} : memref<512x128xf32, #tpu.memory_space<vmem>>, vector<512x128xf32>,
    return
  }
  func.func @transform_0(%arg0: i32) -> (i32, i32) {
    %c0_i32 = arith.constant 0 : i32
    %c0_i32_0 = arith.constant 0 : i32
    %c0_i32_1 = arith.constant 0 : i32
    return %c0_i32, %c0_i32_0 : i32, i32
  }
  func.func @transform_1(%arg0: i32) -> (i32, i32) {
    %c0_i32 = arith.constant 0 : i32
    %c0_i32_0 = arith.constant 0 : i32
    %c0_i32_1 = arith.constant 0 : i32
    return %c0_i32, %c0_i32_0 : i32, i32
  }
  func.func @transform_2(%arg0: i32) -> (i32, i32) {
    %c0_i32 = arith.constant 0 : i32
    %c0_i32_0 = arith.constant 0 : i32
    %c0_i32_1 = arith.constant 0 : i32
    return %c0_i32, %c0_i32_0 : i32, i32
  }
  func.func @transform_3(%arg0: i32) -> (i32, i32) {
    %c0_i32 = arith.constant 0 : i32
    %c0_i32_0 = arith.constant 0 : i32
    %c0_i32_1 = arith.constant 0 : i32
    return %c0_i32, %c0_i32_0 : i32, i32
  }
  func.func @transform_4(%arg0: i32) -> (i32, i32) {
    %c0_i32 = arith.constant 0 : i32
    %c0_i32_0 = arith.constant 0 : i32
    %c0_i32_1 = arith.constant 0 : i32
    return %c0_i32, %c0_i32_0 : i32, i32
  }
  func.func @transform_5(%arg0: i32) -> (i32, i32) {
    %c0_i32 = arith.constant 0 : i32
    %c0_i32_0 = arith.constant 0 : i32
    %c0_i32_1 = arith.constant 0 : i32
    return %c0_i32, %c0_i32_0 : i32, i32
  }
}

module attributes {stable_mosaic.version = 11 : i64} {
  func.func @conv_pool_bn_kernel(%arg0: i32, %arg1: memref<128x256xbf16, #tpu.memory_space<vmem>>, %arg2: memref<256x512xbf16, #tpu.memory_space<vmem>>, %arg3: memref<1x128xf32, #tpu.memory_space<vmem>>, %arg4: memref<1x128xf32, #tpu.memory_space<vmem>>, %arg5: memref<1x128xf32, #tpu.memory_space<vmem>>, %arg6: memref<128x128xf32, #tpu.memory_space<vmem>>) attributes {dimension_semantics = [#tpu.dimension_semantics<arbitrary>], iteration_bounds = array<i64: 1>, scalar_prefetch = 0 : i64, scratch_operands = 0 : i64, tpu.core_type = #tpu.core_type<tc>, window_params = [{pipeline_mode = #tpu.pipeline_mode<synchronous>, transform_indices = @transform_0, window_bounds = array<i64: 128, 256>}, {pipeline_mode = #tpu.pipeline_mode<synchronous>, transform_indices = @transform_1, window_bounds = array<i64: 256, 512>}, {pipeline_mode = #tpu.pipeline_mode<synchronous>, transform_indices = @transform_2, window_bounds = array<i64: 1, 128>}, {pipeline_mode = #tpu.pipeline_mode<synchronous>, transform_indices = @transform_3, window_bounds = array<i64: 1, 128>}, {pipeline_mode = #tpu.pipeline_mode<synchronous>, transform_indices = @transform_4, window_bounds = array<i64: 1, 128>}, {pipeline_mode = #tpu.pipeline_mode<synchronous>, transform_indices = @transform_5, window_bounds = array<i64: 128, 128>}]} {
    %c0 = arith.constant 0 : index
    %c0_0 = arith.constant 0 : index
    %0 = vector.load %arg1[%c0, %c0_0] : memref<128x256xbf16, #tpu.memory_space<vmem>>, vector<128x256xbf16>
    %c0_1 = arith.constant 0 : index
    %c0_2 = arith.constant 0 : index
    %1 = vector.load %arg2[%c0_1, %c0_2] : memref<256x512xbf16, #tpu.memory_space<vmem>>, vector<256x512xbf16>
    %cst = arith.constant dense<0.000000e+00> : vector<128x512xf32>
    %2 = tpu.matmul %0, %1, %cst {dimension_numbers = #tpu.dot_dimension_numbers<[1], [0], [0], [1], [0, 0, 1, 1], [], []>} : vector<128x256xbf16>, vector<256x512xbf16>, vector<128x512xf32> -> vector<128x512xf32>
    %3 = vector.extract_strided_slice %2 {offsets = [0, 0], sizes = [128, 128], strides = [1, 1]} : vector<128x512xf32> to vector<128x128xf32>
    %4 = vector.extract_strided_slice %2 {offsets = [0, 128], sizes = [128, 128], strides = [1, 1]} : vector<128x512xf32> to vector<128x128xf32>
    %5 = arith.maximumf %3, %4 : vector<128x128xf32>
    %6 = vector.extract_strided_slice %2 {offsets = [0, 256], sizes = [128, 128], strides = [1, 1]} : vector<128x512xf32> to vector<128x128xf32>
    %7 = vector.extract_strided_slice %2 {offsets = [0, 384], sizes = [128, 128], strides = [1, 1]} : vector<128x512xf32> to vector<128x128xf32>
    %8 = arith.maximumf %6, %7 : vector<128x128xf32>
    %9 = arith.maximumf %5, %8 : vector<128x128xf32>
    %c0_3 = arith.constant 0 : index
    %c0_4 = arith.constant 0 : index
    %10 = vector.load %arg3[%c0_3, %c0_4] : memref<1x128xf32, #tpu.memory_space<vmem>>, vector<1x128xf32>
    %11 = vector.broadcast %10 : vector<1x128xf32> to vector<128x128xf32>
    %12 = arith.addf %9, %11 : vector<128x128xf32>
    %cst_5 = arith.constant 0.000000e+00 : f32
    %13 = vector.broadcast %cst_5 : f32 to vector<128x128xf32>
    %14 = arith.maximumf %12, %13 : vector<128x128xf32>
    %cst_6 = arith.constant dense<0.000000e+00> : vector<128xf32>
    %15 = vector.multi_reduction <add>, %14, %cst_6 [0] : vector<128x128xf32> to vector<128xf32>
    %16 = vector.shape_cast %15 : vector<128xf32> to vector<1x128xf32>
    %cst_7 = arith.constant 7.812500e-03 : f32
    %17 = vector.broadcast %cst_7 : f32 to vector<1x128xf32>
    %18 = arith.mulf %16, %17 : vector<1x128xf32>
    %19 = arith.mulf %14, %14 : vector<128x128xf32>
    %cst_8 = arith.constant dense<0.000000e+00> : vector<128xf32>
    %20 = vector.multi_reduction <add>, %19, %cst_8 [0] : vector<128x128xf32> to vector<128xf32>
    %21 = vector.shape_cast %20 : vector<128xf32> to vector<1x128xf32>
    %cst_9 = arith.constant 7.812500e-03 : f32
    %22 = vector.broadcast %cst_9 : f32 to vector<1x128xf32>
    %23 = arith.mulf %21, %22 : vector<1x128xf32>
    %24 = arith.mulf %18, %18 : vector<1x128xf32>
    %25 = arith.subf %23, %24 : vector<1x128xf32>
    %cst_10 = arith.constant 0.000000e+00 : f32
    %26 = vector.broadcast %cst_10 : f32 to vector<1x128xf32>
    %27 = arith.maximumf %25, %26 : vector<1x128xf32>
    %c0_11 = arith.constant 0 : index
    %c0_12 = arith.constant 0 : index
    %28 = vector.load %arg4[%c0_11, %c0_12] : memref<1x128xf32, #tpu.memory_space<vmem>>, vector<1x128xf32>
    %cst_13 = arith.constant 9.99999974E-6 : f32
    %29 = vector.broadcast %cst_13 : f32 to vector<1x128xf32>
    %30 = arith.addf %27, %29 : vector<1x128xf32>
    %31 = math.rsqrt %30 : vector<1x128xf32>
    %32 = arith.mulf %28, %31 : vector<1x128xf32>
    %c0_14 = arith.constant 0 : index
    %c0_15 = arith.constant 0 : index
    %33 = vector.load %arg5[%c0_14, %c0_15] : memref<1x128xf32, #tpu.memory_space<vmem>>, vector<1x128xf32>
    %34 = arith.mulf %18, %32 : vector<1x128xf32>
    %35 = arith.subf %33, %34 : vector<1x128xf32>
    %36 = vector.broadcast %32 : vector<1x128xf32> to vector<128x128xf32>
    %37 = arith.mulf %14, %36 : vector<128x128xf32>
    %38 = vector.broadcast %35 : vector<1x128xf32> to vector<128x128xf32>
    %39 = arith.addf %37, %38 : vector<128x128xf32>
    %c0_16 = arith.constant 0 : index
    %c0_17 = arith.constant 0 : index
    %40 = vector.load %arg6[%c0_16, %c0_17] : memref<128x128xf32, #tpu.memory_space<vmem>>, vector<128x128xf32>
    tpu.vector_store %arg6[%c0_16, %c0_17], %39 {strides = array<i32>} : memref<128x128xf32, #tpu.memory_space<vmem>>, vector<128x128xf32>,
    return
  }
  func.func @transform_0(%arg0: i32) -> (i32, i32) {
    %c0_i32 = arith.constant 0 : i32
    %c0_i32_0 = arith.constant 0 : i32
    %c0_i32_1 = arith.constant 0 : i32
    return %c0_i32, %c0_i32_0 : i32, i32
  }
  func.func @transform_1(%arg0: i32) -> (i32, i32) {
    %c0_i32 = arith.constant 0 : i32
    %c0_i32_0 = arith.constant 0 : i32
    %c0_i32_1 = arith.constant 0 : i32
    return %c0_i32, %c0_i32_0 : i32, i32
  }
  func.func @transform_2(%arg0: i32) -> (i32, i32) {
    %c0_i32 = arith.constant 0 : i32
    %c0_i32_0 = arith.constant 0 : i32
    %c0_i32_1 = arith.constant 0 : i32
    return %c0_i32, %c0_i32_0 : i32, i32
  }
  func.func @transform_3(%arg0: i32) -> (i32, i32) {
    %c0_i32 = arith.constant 0 : i32
    %c0_i32_0 = arith.constant 0 : i32
    %c0_i32_1 = arith.constant 0 : i32
    return %c0_i32, %c0_i32_0 : i32, i32
  }
  func.func @transform_4(%arg0: i32) -> (i32, i32) {
    %c0_i32 = arith.constant 0 : i32
    %c0_i32_0 = arith.constant 0 : i32
    %c0_i32_1 = arith.constant 0 : i32
    return %c0_i32, %c0_i32_0 : i32, i32
  }
  func.func @transform_5(%arg0: i32) -> (i32, i32) {
    %c0_i32 = arith.constant 0 : i32
    %c0_i32_0 = arith.constant 0 : i32
    %c0_i32_1 = arith.constant 0 : i32
    return %c0_i32, %c0_i32_0 : i32, i32
  }
}

module attributes {stable_mosaic.version = 11 : i64} {
  func.func @conv_pool_bn_kernel(%arg0: i32, %arg1: memref<32x512xbf16, #tpu.memory_space<vmem>>, %arg2: memref<512x512xbf16, #tpu.memory_space<vmem>>, %arg3: memref<1x128xf32, #tpu.memory_space<vmem>>, %arg4: memref<1x128xf32, #tpu.memory_space<vmem>>, %arg5: memref<1x128xf32, #tpu.memory_space<vmem>>, %arg6: memref<32x128xf32, #tpu.memory_space<vmem>>) attributes {dimension_semantics = [#tpu.dimension_semantics<arbitrary>], iteration_bounds = array<i64: 1>, scalar_prefetch = 0 : i64, scratch_operands = 0 : i64, tpu.core_type = #tpu.core_type<tc>, window_params = [{pipeline_mode = #tpu.pipeline_mode<synchronous>, transform_indices = @transform_0, window_bounds = array<i64: 32, 512>}, {pipeline_mode = #tpu.pipeline_mode<synchronous>, transform_indices = @transform_1, window_bounds = array<i64: 512, 512>}, {pipeline_mode = #tpu.pipeline_mode<synchronous>, transform_indices = @transform_2, window_bounds = array<i64: 1, 128>}, {pipeline_mode = #tpu.pipeline_mode<synchronous>, transform_indices = @transform_3, window_bounds = array<i64: 1, 128>}, {pipeline_mode = #tpu.pipeline_mode<synchronous>, transform_indices = @transform_4, window_bounds = array<i64: 1, 128>}, {pipeline_mode = #tpu.pipeline_mode<synchronous>, transform_indices = @transform_5, window_bounds = array<i64: 32, 128>}]} {
    %c0 = arith.constant 0 : index
    %c0_0 = arith.constant 0 : index
    %0 = vector.load %arg1[%c0, %c0_0] : memref<32x512xbf16, #tpu.memory_space<vmem>>, vector<32x512xbf16>
    %c0_1 = arith.constant 0 : index
    %c0_2 = arith.constant 0 : index
    %1 = vector.load %arg2[%c0_1, %c0_2] : memref<512x512xbf16, #tpu.memory_space<vmem>>, vector<512x512xbf16>
    %cst = arith.constant dense<0.000000e+00> : vector<32x512xf32>
    %2 = tpu.matmul %0, %1, %cst {dimension_numbers = #tpu.dot_dimension_numbers<[1], [0], [0], [1], [0, 0, 1, 1], [], []>} : vector<32x512xbf16>, vector<512x512xbf16>, vector<32x512xf32> -> vector<32x512xf32>
    %3 = vector.extract_strided_slice %2 {offsets = [0, 0], sizes = [32, 128], strides = [1, 1]} : vector<32x512xf32> to vector<32x128xf32>
    %4 = vector.extract_strided_slice %2 {offsets = [0, 128], sizes = [32, 128], strides = [1, 1]} : vector<32x512xf32> to vector<32x128xf32>
    %5 = arith.maximumf %3, %4 : vector<32x128xf32>
    %6 = vector.extract_strided_slice %2 {offsets = [0, 256], sizes = [32, 128], strides = [1, 1]} : vector<32x512xf32> to vector<32x128xf32>
    %7 = vector.extract_strided_slice %2 {offsets = [0, 384], sizes = [32, 128], strides = [1, 1]} : vector<32x512xf32> to vector<32x128xf32>
    %8 = arith.maximumf %6, %7 : vector<32x128xf32>
    %9 = arith.maximumf %5, %8 : vector<32x128xf32>
    %c0_3 = arith.constant 0 : index
    %c0_4 = arith.constant 0 : index
    %10 = vector.load %arg3[%c0_3, %c0_4] : memref<1x128xf32, #tpu.memory_space<vmem>>, vector<1x128xf32>
    %11 = vector.broadcast %10 : vector<1x128xf32> to vector<32x128xf32>
    %12 = arith.addf %9, %11 : vector<32x128xf32>
    %cst_5 = arith.constant 0.000000e+00 : f32
    %13 = vector.broadcast %cst_5 : f32 to vector<32x128xf32>
    %14 = arith.maximumf %12, %13 : vector<32x128xf32>
    %cst_6 = arith.constant dense<0.000000e+00> : vector<128xf32>
    %15 = vector.multi_reduction <add>, %14, %cst_6 [0] : vector<32x128xf32> to vector<128xf32>
    %16 = vector.shape_cast %15 : vector<128xf32> to vector<1x128xf32>
    %cst_7 = arith.constant 3.125000e-02 : f32
    %17 = vector.broadcast %cst_7 : f32 to vector<1x128xf32>
    %18 = arith.mulf %16, %17 : vector<1x128xf32>
    %19 = arith.mulf %14, %14 : vector<32x128xf32>
    %cst_8 = arith.constant dense<0.000000e+00> : vector<128xf32>
    %20 = vector.multi_reduction <add>, %19, %cst_8 [0] : vector<32x128xf32> to vector<128xf32>
    %21 = vector.shape_cast %20 : vector<128xf32> to vector<1x128xf32>
    %cst_9 = arith.constant 3.125000e-02 : f32
    %22 = vector.broadcast %cst_9 : f32 to vector<1x128xf32>
    %23 = arith.mulf %21, %22 : vector<1x128xf32>
    %24 = arith.mulf %18, %18 : vector<1x128xf32>
    %25 = arith.subf %23, %24 : vector<1x128xf32>
    %cst_10 = arith.constant 0.000000e+00 : f32
    %26 = vector.broadcast %cst_10 : f32 to vector<1x128xf32>
    %27 = arith.maximumf %25, %26 : vector<1x128xf32>
    %c0_11 = arith.constant 0 : index
    %c0_12 = arith.constant 0 : index
    %28 = vector.load %arg4[%c0_11, %c0_12] : memref<1x128xf32, #tpu.memory_space<vmem>>, vector<1x128xf32>
    %cst_13 = arith.constant 9.99999974E-6 : f32
    %29 = vector.broadcast %cst_13 : f32 to vector<1x128xf32>
    %30 = arith.addf %27, %29 : vector<1x128xf32>
    %31 = math.rsqrt %30 : vector<1x128xf32>
    %32 = arith.mulf %28, %31 : vector<1x128xf32>
    %c0_14 = arith.constant 0 : index
    %c0_15 = arith.constant 0 : index
    %33 = vector.load %arg5[%c0_14, %c0_15] : memref<1x128xf32, #tpu.memory_space<vmem>>, vector<1x128xf32>
    %34 = arith.mulf %18, %32 : vector<1x128xf32>
    %35 = arith.subf %33, %34 : vector<1x128xf32>
    %36 = vector.broadcast %32 : vector<1x128xf32> to vector<32x128xf32>
    %37 = arith.mulf %14, %36 : vector<32x128xf32>
    %38 = vector.broadcast %35 : vector<1x128xf32> to vector<32x128xf32>
    %39 = arith.addf %37, %38 : vector<32x128xf32>
    %c0_16 = arith.constant 0 : index
    %c0_17 = arith.constant 0 : index
    %40 = vector.load %arg6[%c0_16, %c0_17] : memref<32x128xf32, #tpu.memory_space<vmem>>, vector<32x128xf32>
    tpu.vector_store %arg6[%c0_16, %c0_17], %39 {strides = array<i32>} : memref<32x128xf32, #tpu.memory_space<vmem>>, vector<32x128xf32>,
    return
  }
  func.func @transform_0(%arg0: i32) -> (i32, i32) {
    %c0_i32 = arith.constant 0 : i32
    %c0_i32_0 = arith.constant 0 : i32
    %c0_i32_1 = arith.constant 0 : i32
    return %c0_i32, %c0_i32_0 : i32, i32
  }
  func.func @transform_1(%arg0: i32) -> (i32, i32) {
    %c0_i32 = arith.constant 0 : i32
    %c0_i32_0 = arith.constant 0 : i32
    %c0_i32_1 = arith.constant 0 : i32
    return %c0_i32, %c0_i32_0 : i32, i32
  }
  func.func @transform_2(%arg0: i32) -> (i32, i32) {
    %c0_i32 = arith.constant 0 : i32
    %c0_i32_0 = arith.constant 0 : i32
    %c0_i32_1 = arith.constant 0 : i32
    return %c0_i32, %c0_i32_0 : i32, i32
  }
  func.func @transform_3(%arg0: i32) -> (i32, i32) {
    %c0_i32 = arith.constant 0 : i32
    %c0_i32_0 = arith.constant 0 : i32
    %c0_i32_1 = arith.constant 0 : i32
    return %c0_i32, %c0_i32_0 : i32, i32
  }
  func.func @transform_4(%arg0: i32) -> (i32, i32) {
    %c0_i32 = arith.constant 0 : i32
    %c0_i32_0 = arith.constant 0 : i32
    %c0_i32_1 = arith.constant 0 : i32
    return %c0_i32, %c0_i32_0 : i32, i32
  }
  func.func @transform_5(%arg0: i32) -> (i32, i32) {
    %c0_i32 = arith.constant 0 : i32
    %c0_i32_0 = arith.constant 0 : i32
    %c0_i32_1 = arith.constant 0 : i32
    return %c0_i32, %c0_i32_0 : i32, i32
  }
}

module attributes {stable_mosaic.version = 11 : i64} {
  func.func @head_kernel(%arg0: i32, %arg1: memref<2x1024xf32, #tpu.memory_space<vmem>>, %arg2: memref<1024x128xf32, #tpu.memory_space<vmem>>, %arg3: memref<1x128xf32, #tpu.memory_space<vmem>>, %arg4: memref<1x128xf32, #tpu.memory_space<vmem>>, %arg5: memref<2x128xf32, #tpu.memory_space<vmem>>, %arg6: memref<2x1xf32, #tpu.memory_space<vmem>>) attributes {dimension_semantics = [#tpu.dimension_semantics<arbitrary>], iteration_bounds = array<i64: 1>, scalar_prefetch = 0 : i64, scratch_operands = 0 : i64, tpu.core_type = #tpu.core_type<tc>, window_params = [{pipeline_mode = #tpu.pipeline_mode<synchronous>, transform_indices = @transform_0, window_bounds = array<i64: 2, 1024>}, {pipeline_mode = #tpu.pipeline_mode<synchronous>, transform_indices = @transform_1, window_bounds = array<i64: 1024, 128>}, {pipeline_mode = #tpu.pipeline_mode<synchronous>, transform_indices = @transform_2, window_bounds = array<i64: 1, 128>}, {pipeline_mode = #tpu.pipeline_mode<synchronous>, transform_indices = @transform_3, window_bounds = array<i64: 1, 128>}, {pipeline_mode = #tpu.pipeline_mode<synchronous>, transform_indices = @transform_4, window_bounds = array<i64: 2, 128>}, {pipeline_mode = #tpu.pipeline_mode<synchronous>, transform_indices = @transform_5, window_bounds = array<i64: 2, 1>}]} {
    %c0 = arith.constant 0 : index
    %c0_0 = arith.constant 0 : index
    %0 = vector.load %arg1[%c0, %c0_0] : memref<2x1024xf32, #tpu.memory_space<vmem>>, vector<2x1024xf32>
    %c0_1 = arith.constant 0 : index
    %c0_2 = arith.constant 0 : index
    %1 = vector.load %arg2[%c0_1, %c0_2] : memref<1024x128xf32, #tpu.memory_space<vmem>>, vector<1024x128xf32>
    %cst = arith.constant dense<0.000000e+00> : vector<2x128xf32>
    %2 = tpu.matmul %0, %1, %cst {dimension_numbers = #tpu.dot_dimension_numbers<[1], [0], [0], [1], [0, 0, 1, 1], [], []>} : vector<2x1024xf32>, vector<1024x128xf32>, vector<2x128xf32> -> vector<2x128xf32>
    %c0_3 = arith.constant 0 : index
    %c0_4 = arith.constant 0 : index
    %3 = vector.load %arg3[%c0_3, %c0_4] : memref<1x128xf32, #tpu.memory_space<vmem>>, vector<1x128xf32>
    %4 = vector.broadcast %3 : vector<1x128xf32> to vector<2x128xf32>
    %5 = arith.addf %2, %4 : vector<2x128xf32>
    %cst_5 = arith.constant 0.000000e+00 : f32
    %6 = vector.broadcast %cst_5 : f32 to vector<2x128xf32>
    %7 = arith.maximumf %5, %6 : vector<2x128xf32>
    %c0_6 = arith.constant 0 : index
    %c0_7 = arith.constant 0 : index
    %8 = vector.load %arg5[%c0_6, %c0_7] : memref<2x128xf32, #tpu.memory_space<vmem>>, vector<2x128xf32>
    tpu.vector_store %arg5[%c0_6, %c0_7], %7 {strides = array<i32>} : memref<2x128xf32, #tpu.memory_space<vmem>>, vector<2x128xf32>,
    %c0_8 = arith.constant 0 : index
    %c0_9 = arith.constant 0 : index
    %9 = vector.load %arg4[%c0_8, %c0_9] : memref<1x128xf32, #tpu.memory_space<vmem>>, vector<1x128xf32>
    %10 = vector.broadcast %9 : vector<1x128xf32> to vector<2x128xf32>
    %11 = arith.mulf %7, %10 : vector<2x128xf32>
    %cst_10 = arith.constant dense<0.000000e+00> : vector<2xf32>
    %12 = vector.multi_reduction <add>, %11, %cst_10 [1] : vector<2x128xf32> to vector<2xf32>
    %13 = vector.shape_cast %12 : vector<2xf32> to vector<2x1xf32>
    %c0_11 = arith.constant 0 : index
    %c0_12 = arith.constant 0 : index
    %14 = vector.load %arg6[%c0_11, %c0_12] : memref<2x1xf32, #tpu.memory_space<vmem>>, vector<2x1xf32>
    tpu.vector_store %arg6[%c0_11, %c0_12], %13 {strides = array<i32>} : memref<2x1xf32, #tpu.memory_space<vmem>>, vector<2x1xf32>,
    return
  }
  func.func @transform_0(%arg0: i32) -> (i32, i32) {
    %c0_i32 = arith.constant 0 : i32
    %c0_i32_0 = arith.constant 0 : i32
    %c0_i32_1 = arith.constant 0 : i32
    return %c0_i32, %c0_i32_0 : i32, i32
  }
  func.func @transform_1(%arg0: i32) -> (i32, i32) {
    %c0_i32 = arith.constant 0 : i32
    %c0_i32_0 = arith.constant 0 : i32
    %c0_i32_1 = arith.constant 0 : i32
    return %c0_i32, %c0_i32_0 : i32, i32
  }
  func.func @transform_2(%arg0: i32) -> (i32, i32) {
    %c0_i32 = arith.constant 0 : i32
    %c0_i32_0 = arith.constant 0 : i32
    %c0_i32_1 = arith.constant 0 : i32
    return %c0_i32, %c0_i32_0 : i32, i32
  }
  func.func @transform_3(%arg0: i32) -> (i32, i32) {
    %c0_i32 = arith.constant 0 : i32
    %c0_i32_0 = arith.constant 0 : i32
    %c0_i32_1 = arith.constant 0 : i32
    return %c0_i32, %c0_i32_0 : i32, i32
  }
  func.func @transform_4(%arg0: i32) -> (i32, i32) {
    %c0_i32 = arith.constant 0 : i32
    %c0_i32_0 = arith.constant 0 : i32
    %c0_i32_1 = arith.constant 0 : i32
    return %c0_i32, %c0_i32_0 : i32, i32
  }
  func.func @transform_5(%arg0: i32) -> (i32, i32) {
    %c0_i32 = arith.constant 0 : i32
    %c0_i32_0 = arith.constant 0 : i32
    %c0_i32_1 = arith.constant 0 : i32
    return %c0_i32, %c0_i32_0 : i32, i32
  }
}

</mosaic_0001>

<llo_original>
// kernel: mini_conv_forward.4
$region0: #{mini_conv_forward.4}
  #allocation0 [shape = 'u32[]', space=smem, size = 0x4, offset = 0x4, fixed_abs, tag = 'smem constant byte address 0x4 - core index']
  #allocation1 [shape = 'u32[144,128]{1,0:T(1,128)}', space=vmem, size = 0x12000, scoped, tag = 'internal scratch']
  %s0 = inlined_call_operand.vmem [shape: bf16[512,48], index: 0, kind: input, shape index: {}]
  %s1 = inlined_call_operand.vmem [shape: bf16[48,512], index: 1, kind: input, shape index: {}]
  %s2 = inlined_call_operand.vmem [shape: f32[1,128], index: 2, kind: input, shape index: {}]
  %s3 = inlined_call_operand.vmem [shape: f32[1,128], index: 3, kind: input, shape index: {}]
  %s4 = inlined_call_operand.vmem [shape: f32[1,128], index: 4, kind: input, shape index: {}]
  %s5 = inlined_call_operand.vmem [shape: f32[512,128], index: 5, kind: output, shape index: {}]
  %s6 = sld [smem:[#allocation0]]
  $region30: #{mini_conv_forward.4} parent=0
    _
  %s8 = ssub.s32 1, %s6
  %s9 = scalar_select 0, %s8, %s6
  // Predicated region
  $region2: #{mini_conv_forward.4} parent=0 // pred_check
    _
  $region3: #{mini_conv_forward.4} parent=0 // pred_check_branch
    %11 = sbr.rel (0) target = $region5
  $region4: #{mini_conv_forward.4} parent=0 // pred_region
    _
  $region5: #{mini_conv_forward.4} parent=0 // pred_fallthru
    _
  // Predicated region
  $region6: #{mini_conv_forward.4} parent=0 // pred_check
    _
  $region7: #{mini_conv_forward.4} parent=0 // pred_check_branch
    %13 = sbr.rel (0) target = $region9
  $region8: #{mini_conv_forward.4} parent=0 // pred_region
    _
  $region9: #{mini_conv_forward.4} parent=0 // pred_fallthru
    _
  // Predicated region
  $region10: #{mini_conv_forward.4} parent=0 // pred_check
    _
  $region11: #{mini_conv_forward.4} parent=0 // pred_check_branch
    %15 = sbr.rel (0) target = $region13
  $region12: #{mini_conv_forward.4} parent=0 // pred_region
    _
  $region13: #{mini_conv_forward.4} parent=0 // pred_fallthru
    _
  // Predicated region
  $region14: #{mini_conv_forward.4} parent=0 // pred_check
    _
  $region15: #{mini_conv_forward.4} parent=0 // pred_check_branch
    %17 = sbr.rel (0) target = $region17
  $region16: #{mini_conv_forward.4} parent=0 // pred_region
    _
  $region17: #{mini_conv_forward.4} parent=0 // pred_fallthru
    _
  // Predicated region
  $region18: #{mini_conv_forward.4} parent=0 // pred_check
    _
  $region19: #{mini_conv_forward.4} parent=0 // pred_check_branch
    %19 = sbr.rel (0) target = $region21
  $region20: #{mini_conv_forward.4} parent=0 // pred_region
    _
  $region21: #{mini_conv_forward.4} parent=0 // pred_fallthru
    _
  %v21 = vld [vmem:[%s0] sm:$0xf]
  %v22 = vld [vmem:[%s0 + $0x4] sm:$0xf]
  %v23 = vld [vmem:[%s0 + $0x8] sm:$0xf]
  %v24 = vld [vmem:[%s0 + $0xc] sm:$0xf]
  %v25 = vld [vmem:[%s0 + $0x10] sm:$0xf]
  %v26 = vld [vmem:[%s0 + $0x14] sm:$0xf]
  %v27 = vld [vmem:[%s0 + $0x18] sm:$0xf]
  %v28 = vld [vmem:[%s0 + $0x1c] sm:$0xf]
  %v29 = vld [vmem:[%s0 + $0x20] sm:$0xf]
  %v30 = vld [vmem:[%s0 + $0x24] sm:$0xf]
  %v31 = vld [vmem:[%s0 + $0x28] sm:$0xf]
  %v32 = vld [vmem:[%s0 + $0x2c] sm:$0xf]
  %v33 = vld [vmem:[%s0 + $0x30] sm:$0xf]
  %v34 = vld [vmem:[%s0 + $0x34] sm:$0xf]
  %v35 = vld [vmem:[%s0 + $0x38] sm:$0xf]
  %v36 = vld [vmem:[%s0 + $0x3c] sm:$0xf]
  %v37 = vld [vmem:[%s0 + $0x40] sm:$0xf]
  %v38 = vld [vmem:[%s0 + $0x44] sm:$0xf]
  %v39 = vld [vmem:[%s0 + $0x48] sm:$0xf]
  %v40 = vld [vmem:[%s0 + $0x4c] sm:$0xf]
  %v41 = vld [vmem:[%s0 + $0x50] sm:$0xf]
  %v42 = vld [vmem:[%s0 + $0x54] sm:$0xf]
  %v43 = vld [vmem:[%s0 + $0x58] sm:$0xf]
  %v44 = vld [vmem:[%s0 + $0x5c] sm:$0xf]
  %v45 = vld [vmem:[%s0 + $0x60] sm:$0xf]
  %v46 = vld [vmem:[%s0 + $0x64] sm:$0xf]
  %v47 = vld [vmem:[%s0 + $0x68] sm:$0xf]
  %v48 = vld [vmem:[%s0 + $0x6c] sm:$0xf]
  %v49 = vld [vmem:[%s0 + $0x70] sm:$0xf]
  %v50 = vld [vmem:[%s0 + $0x74] sm:$0xf]
  %v51 = vld [vmem:[%s0 + $0x78] sm:$0xf]
  %v52 = vld [vmem:[%s0 + $0x7c] sm:$0xf]
  %v53 = vld [vmem:[%s0 + $0x80] sm:$0xf]
  %v54 = vld [vmem:[%s0 + $0x84] sm:$0xf]
  %v55 = vld [vmem:[%s0 + $0x88] sm:$0xf]
  %v56 = vld [vmem:[%s0 + $0x8c] sm:$0xf]
  %v57 = vld [vmem:[%s0 + $0x90] sm:$0xf]
  %v58 = vld [vmem:[%s0 + $0x94] sm:$0xf]
  %v59 = vld [vmem:[%s0 + $0x98] sm:$0xf]
  %v60 = vld [vmem:[%s0 + $0x9c] sm:$0xf]
  %v61 = vld [vmem:[%s0 + $0xa0] sm:$0xf]
  %v62 = vld [vmem:[%s0 + $0xa4] sm:$0xf]
  %v63 = vld [vmem:[%s0 + $0xa8] sm:$0xf]
  %v64 = vld [vmem:[%s0 + $0xac] sm:$0xf]
  %v65 = vld [vmem:[%s0 + $0xb0] sm:$0xf]
  %v66 = vld [vmem:[%s0 + $0xb4] sm:$0xf]
  %v67 = vld [vmem:[%s0 + $0xb8] sm:$0xf]
  %v68 = vld [vmem:[%s0 + $0xbc] sm:$0xf]
  %v69 = vld [vmem:[%s0 + $0xc0] sm:$0xf]
  %v70 = vld [vmem:[%s0 + $0xc4] sm:$0xf]
  %v71 = vld [vmem:[%s0 + $0xc8] sm:$0xf]
  %v72 = vld [vmem:[%s0 + $0xcc] sm:$0xf]
  %v73 = vld [vmem:[%s0 + $0xd0] sm:$0xf]
  %v74 = vld [vmem:[%s0 + $0xd4] sm:$0xf]
  %v75 = vld [vmem:[%s0 + $0xd8] sm:$0xf]
  %v76 = vld [vmem:[%s0 + $0xdc] sm:$0xf]
  %v77 = vld [vmem:[%s0 + $0xe0] sm:$0xf]
  %v78 = vld [vmem:[%s0 + $0xe4] sm:$0xf]
  %v79 = vld [vmem:[%s0 + $0xe8] sm:$0xf]
  %v80 = vld [vmem:[%s0 + $0xec] sm:$0xf]
  %v81 = vld [vmem:[%s0 + $0xf0] sm:$0xf]
  %v82 = vld [vmem:[%s0 + $0xf4] sm:$0xf]
  %v83 = vld [vmem:[%s0 + $0xf8] sm:$0xf]
  %v84 = vld [vmem:[%s0 + $0xfc] sm:$0xf]
  %v85 = vld [vmem:[%s1] sm:$0xff]
  %v86 = vld [vmem:[%s1 + $0x8] sm:$0xff]
  %v87 = vld [vmem:[%s1 + $0x10] sm:$0xff]
  %v88 = vld [vmem:[%s1 + $0x18] sm:$0xff]
  %v89 = vld [vmem:[%s1 + $0x20] sm:$0xff]
  %v90 = vld [vmem:[%s1 + $0x28] sm:$0xff]
  %v91 = vld [vmem:[%s1 + $0x30] sm:$0xff]
  %v92 = vld [vmem:[%s1 + $0x38] sm:$0xff]
  %v93 = vld [vmem:[%s1 + $0x40] sm:$0xff]
  %v94 = vld [vmem:[%s1 + $0x48] sm:$0xff]
  %v95 = vld [vmem:[%s1 + $0x50] sm:$0xff]
  %v96 = vld [vmem:[%s1 + $0x58] sm:$0xff]
  %v161 = vunpack.c.l.b16 %v21
  %v162 = vunpack.c.l.b16 %v22
  %v163 = vunpack.c.l.b16 %v23
  %v164 = vunpack.c.l.b16 %v24
  %v165 = vunpack.c.l.b16 %v25
  %v166 = vunpack.c.l.b16 %v26
  %v167 = vunpack.c.l.b16 %v27
  %v168 = vunpack.c.l.b16 %v28
  %v169 = vunpack.c.l.b16 %v29
  %v170 = vunpack.c.l.b16 %v30
  %v171 = vunpack.c.l.b16 %v31
  %v172 = vunpack.c.l.b16 %v32
  %v173 = vunpack.c.l.b16 %v33
  %v174 = vunpack.c.l.b16 %v34
  %v175 = vunpack.c.l.b16 %v35
  %v176 = vunpack.c.l.b16 %v36
  %v177 = vunpack.c.l.b16 %v37
  %v178 = vunpack.c.l.b16 %v38
  %v179 = vunpack.c.l.b16 %v39
  %v180 = vunpack.c.l.b16 %v40
  %v181 = vunpack.c.l.b16 %v41
  %v182 = vunpack.c.l.b16 %v42
  %v183 = vunpack.c.l.b16 %v43
  %v184 = vunpack.c.l.b16 %v44
  %v185 = vunpack.c.l.b16 %v45
  %v186 = vunpack.c.l.b16 %v46
  %v187 = vunpack.c.l.b16 %v47
  %v188 = vunpack.c.l.b16 %v48
  %v189 = vunpack.c.l.b16 %v49
  %v190 = vunpack.c.l.b16 %v50
  %v191 = vunpack.c.l.b16 %v51
  %v192 = vunpack.c.l.b16 %v52
  %v193 = vunpack.c.l.b16 %v53
  %v194 = vunpack.c.l.b16 %v54
  %v195 = vunpack.c.l.b16 %v55
  %v196 = vunpack.c.l.b16 %v56
  %v197 = vunpack.c.l.b16 %v57
  %v198 = vunpack.c.l.b16 %v58
  %v199 = vunpack.c.l.b16 %v59
  %v200 = vunpack.c.l.b16 %v60
  %v201 = vunpack.c.l.b16 %v61
  %v202 = vunpack.c.l.b16 %v62
  %v203 = vunpack.c.l.b16 %v63
  %v204 = vunpack.c.l.b16 %v64
  %v205 = vunpack.c.l.b16 %v65
  %v206 = vunpack.c.l.b16 %v66
  %v207 = vunpack.c.l.b16 %v67
  %v208 = vunpack.c.l.b16 %v68
  %v209 = vunpack.c.l.b16 %v69
  %v210 = vunpack.c.l.b16 %v70
  %v211 = vunpack.c.l.b16 %v71
  %v212 = vunpack.c.l.b16 %v72
  %v213 = vunpack.c.l.b16 %v73
  %v214 = vunpack.c.l.b16 %v74
  %v215 = vunpack.c.l.b16 %v75
  %v216 = vunpack.c.l.b16 %v76
  %v217 = vunpack.c.l.b16 %v77
  %v218 = vunpack.c.l.b16 %v78
  %v219 = vunpack.c.l.b16 %v79
  %v220 = vunpack.c.l.b16 %v80
  %v221 = vunpack.c.l.b16 %v81
  %v222 = vunpack.c.l.b16 %v82
  %v223 = vunpack.c.l.b16 %v83
  %v224 = vunpack.c.l.b16 %v84
  %v225 = vpack.c.b16 %v162, %v161
  %v226 = vpack.c.b16 %v164, %v163
  %v227 = vpack.c.b16 %v166, %v165
  %v228 = vpack.c.b16 %v168, %v167
  %v229 = vpack.c.b16 %v170, %v169
  %v230 = vpack.c.b16 %v172, %v171
  %v231 = vpack.c.b16 %v174, %v173
  %v232 = vpack.c.b16 %v176, %v175
  %v233 = vpack.c.b16 %v178, %v177
  %v234 = vpack.c.b16 %v180, %v179
  %v235 = vpack.c.b16 %v182, %v181
  %v236 = vpack.c.b16 %v184, %v183
  %v237 = vpack.c.b16 %v186, %v185
  %v238 = vpack.c.b16 %v188, %v187
  %v239 = vpack.c.b16 %v190, %v189
  %v240 = vpack.c.b16 %v192, %v191
  %v241 = vpack.c.b16 %v194, %v193
  %v242 = vpack.c.b16 %v196, %v195
  %v243 = vpack.c.b16 %v198, %v197
  %v244 = vpack.c.b16 %v200, %v199
  %v245 = vpack.c.b16 %v202, %v201
  %v246 = vpack.c.b16 %v204, %v203
  %v247 = vpack.c.b16 %v206, %v205
  %v248 = vpack.c.b16 %v208, %v207
  %v249 = vpack.c.b16 %v210, %v209
  %v250 = vpack.c.b16 %v212, %v211
  %v251 = vpack.c.b16 %v214, %v213
  %v252 = vpack.c.b16 %v216, %v215
  %v253 = vpack.c.b16 %v218, %v217
  %v254 = vpack.c.b16 %v220, %v219
  %v255 = vpack.c.b16 %v222, %v221
  %v256 = vpack.c.b16 %v224, %v223
  %v269 = vunpack.c.l.b16 %v85
  %v270 = vunpack.c.h.b16 %v85
  %v271 = vunpack.c.l.b16 %v86
  %v272 = vunpack.c.h.b16 %v86
  %v273 = vunpack.c.l.b16 %v87
  %v274 = vunpack.c.h.b16 %v87
  %v275 = vunpack.c.l.b16 %v88
  %v276 = vunpack.c.h.b16 %v88
  %v277 = vunpack.c.l.b16 %v89
  %v278 = vunpack.c.h.b16 %v89
  %v279 = vunpack.c.l.b16 %v90
  %v280 = vunpack.c.h.b16 %v90
  %v281 = vunpack.c.l.b16 %v91
  %v282 = vunpack.c.h.b16 %v91
  %v283 = vunpack.c.l.b16 %v92
  %v284 = vunpack.c.h.b16 %v92
  %v285 = vunpack.c.l.b16 %v93
  %v286 = vunpack.c.h.b16 %v93
  %v287 = vunpack.c.l.b16 %v94
  %v288 = vunpack.c.h.b16 %v94
  %v289 = vunpack.c.l.b16 %v95
  %v290 = vunpack.c.h.b16 %v95
  %v291 = vunpack.c.l.b16 %v96
  %v292 = vunpack.c.h.b16 %v96
  %v293 = vpack.c.b16 %v273, %v269
  %v294 = vpack.c.b16 %v274, %v270
  %v295 = vpack.c.b16 %v275, %v271
  %v296 = vpack.c.b16 %v276, %v272
  %v297 = vpack.c.b16 %v281, %v277
  %v298 = vpack.c.b16 %v282, %v278
  %v299 = vpack.c.b16 %v283, %v279
  %v300 = vpack.c.b16 %v284, %v280
  %v301 = vpack.c.b16 %v289, %v285
  %v302 = vpack.c.b16 %v290, %v286
  %v303 = vpack.c.b16 %v291, %v287
  %v304 = vpack.c.b16 %v292, %v288
  %vm317 = vcmask 392192
  %v319 = vsel %vm317, %v225, 0
  %v322 = vsel %vm317, %v226, 0
  %v325 = vsel %vm317, %v227, 0
  %v328 = vsel %vm317, %v228, 0
  %v331 = vsel %vm317, %v229, 0
  %v334 = vsel %vm317, %v230, 0
  %v337 = vsel %vm317, %v231, 0
  %v340 = vsel %vm317, %v232, 0
  %v343 = vsel %vm317, %v233, 0
  %v346 = vsel %vm317, %v234, 0
  %v349 = vsel %vm317, %v235, 0
  %v352 = vsel %vm317, %v236, 0
  %v355 = vsel %vm317, %v237, 0
  %v358 = vsel %vm317, %v238, 0
  %v361 = vsel %vm317, %v239, 0
  %v364 = vsel %vm317, %v240, 0
  %v367 = vsel %vm317, %v241, 0
  %v370 = vsel %vm317, %v242, 0
  %v373 = vsel %vm317, %v243, 0
  %v376 = vsel %vm317, %v244, 0
  %v379 = vsel %vm317, %v245, 0
  %v382 = vsel %vm317, %v246, 0
  %v385 = vsel %vm317, %v247, 0
  %v388 = vsel %vm317, %v248, 0
  %v391 = vsel %vm317, %v249, 0
  %v394 = vsel %vm317, %v250, 0
  %v397 = vsel %vm317, %v251, 0
  %v400 = vsel %vm317, %v252, 0
  %v403 = vsel %vm317, %v253, 0
  %v406 = vsel %vm317, %v254, 0
  %v409 = vsel %vm317, %v255, 0
  %v412 = vsel %vm317, %v256, 0
  %414 = vmatprep.subr.bf16.mxu0 %v294
  %415 = vmatpush1.bf16.msra.mxu0 %v293
  %416 = vmatprep.subr.bf16.mxu0 %v298
  %417 = vmatpush1.bf16.msra.mxu0 %v297
  %418 = vmatprep.subr.bf16.mxu0 %v302
  %419 = vmatpush1.bf16.msra.mxu0 %v301
  %420 = vmatprep.subr.bf16.mxu0 0
  %421 = vmatpush1.bf16.msra.mxu0 0
  %422 = vmatprep.subr.bf16.mxu0 0
  %423 = vmatpush1.bf16.msra.mxu0 0
  %424 = vmatprep.subr.bf16.mxu0 0
  %425 = vmatpush1.bf16.msra.mxu0 0
  %426 = vmatprep.subr.bf16.mxu0 0
  %427 = vmatpush1.bf16.msra.mxu0 0
  %428 = vmatprep.subr.bf16.mxu0 0
  %429 = vmatpush1.bf16.msra.mxu0 0
  %430 = vmatprep.subr.bf16.mxu0 0
  %431 = vmatpush1.bf16.msra.mxu0 0
  %432 = vmatprep.subr.bf16.mxu0 0
  %433 = vmatpush1.bf16.msra.mxu0 0
  %434 = vmatprep.subr.bf16.mxu0 0
  %435 = vmatpush1.bf16.msra.mxu0 0
  %436 = vmatprep.subr.bf16.mxu0 0
  %437 = vmatpush1.bf16.msra.mxu0 0
  %438 = vmatprep.subr.bf16.mxu0 0
  %439 = vmatpush1.bf16.msra.mxu0 0
  %440 = vmatprep.subr.bf16.mxu0 0
  %441 = vmatpush1.bf16.msra.mxu0 0
  %442 = vmatprep.subr.bf16.mxu0 0
  %443 = vmatpush1.bf16.msra.mxu0 0
  %444 = vmatprep.subr.bf16.mxu0 0
  %445 = vmatpush1.bf16.msra.mxu0 0
  %446 = vmatprep.mubr.bf16.mxu0 0
  %447 = vmatmul.mubr.bf16.gmra.mrb[0].mxu0 %v319
  %v448 = vpop.f32.mrb[0].mxu0
  %v449 = vadd.f32 0.0, %v448
  %v450 = vpop.f32.mrb[0].mxu0
  %v451 = vadd.f32 0.0, %v450
  %v452 = vpop.f32.mrb[0].mxu0
  %v453 = vadd.f32 0.0, %v452
  %v454 = vpop.f32.mrb[0].mxu0
  %v455 = vadd.f32 0.0, %v454
  %456 = vmatprep.mubr.bf16.mxu0 0
  %457 = vmatmul.mubr.bf16.gmra.mrb[0].mxu0 %v322
  %v458 = vpop.f32.mrb[0].mxu0
  %v459 = vadd.f32 0.0, %v458
  %v460 = vpop.f32.mrb[0].mxu0
  %v461 = vadd.f32 0.0, %v460
  %v462 = vpop.f32.mrb[0].mxu0
  %v463 = vadd.f32 0.0, %v462
  %v464 = vpop.f32.mrb[0].mxu0
  %v465 = vadd.f32 0.0, %v464
  %466 = vmatprep.mubr.bf16.mxu0 0
  %467 = vmatmul.mubr.bf16.gmra.mrb[0].mxu0 %v325
  %v468 = vpop.f32.mrb[0].mxu0
  %v469 = vadd.f32 0.0, %v468
  %v470 = vpop.f32.mrb[0].mxu0
  %v471 = vadd.f32 0.0, %v470
  %v472 = vpop.f32.mrb[0].mxu0
  %v473 = vadd.f32 0.0, %v472
  %v474 = vpop.f32.mrb[0].mxu0
  %v475 = vadd.f32 0.0, %v474
  %476 = vmatprep.mubr.bf16.mxu0 0
  %477 = vmatmul.mubr.bf16.gmra.mrb[0].mxu0 %v328
  %v478 = vpop.f32.mrb[0].mxu0
  %v479 = vadd.f32 0.0, %v478
  %v480 = vpop.f32.mrb[0].mxu0
  %v481 = vadd.f32 0.0, %v480
  %v482 = vpop.f32.mrb[0].mxu0
  %v483 = vadd.f32 0.0, %v482
  %v484 = vpop.f32.mrb[0].mxu0
  %v485 = vadd.f32 0.0, %v484
  %486 = vmatprep.mubr.bf16.mxu0 0
  %487 = vmatmul.mubr.bf16.gmra.mrb[0].mxu0 %v331
  %v488 = vpop.f32.mrb[0].mxu0
  %v489 = vadd.f32 0.0, %v488
  %v490 = vpop.f32.mrb[0].mxu0
  %v491 = vadd.f32 0.0, %v490
  %v492 = vpop.f32.mrb[0].mxu0
  %v493 = vadd.f32 0.0, %v492
  %v494 = vpop.f32.mrb[0].mxu0
  %v495 = vadd.f32 0.0, %v494
  %496 = vmatprep.mubr.bf16.mxu0 0
  %497 = vmatmul.mubr.bf16.gmra.mrb[0].mxu0 %v334
  %v498 = vpop.f32.mrb[0].mxu0
  %v499 = vadd.f32 0.0, %v498
  %v500 = vpop.f32.mrb[0].mxu0
  %v501 = vadd.f32 0.0, %v500
  %v502 = vpop.f32.mrb[0].mxu0
  %v503 = vadd.f32 0.0, %v502
  %v504 = vpop.f32.mrb[0].mxu0
  %v505 = vadd.f32 0.0, %v504
  %506 = vmatprep.mubr.bf16.mxu0 0
  %507 = vmatmul.mubr.bf16.gmra.mrb[0].mxu0 %v337
  %v508 = vpop.f32.mrb[0].mxu0
  %v509 = vadd.f32 0.0, %v508
  %v510 = vpop.f32.mrb[0].mxu0
  %v511 = vadd.f32 0.0, %v510
  %v512 = vpop.f32.mrb[0].mxu0
  %v513 = vadd.f32 0.0, %v512
  %v514 = vpop.f32.mrb[0].mxu0
  %v515 = vadd.f32 0.0, %v514
  %516 = vmatprep.mubr.bf16.mxu0 0
  %517 = vmatmul.mubr.bf16.gmra.mrb[0].mxu0 %v340
  %v518 = vpop.f32.mrb[0].mxu0
  %v519 = vadd.f32 0.0, %v518
  %v520 = vpop.f32.mrb[0].mxu0
  %v521 = vadd.f32 0.0, %v520
  %v522 = vpop.f32.mrb[0].mxu0
  %v523 = vadd.f32 0.0, %v522
  %v524 = vpop.f32.mrb[0].mxu0
  %v525 = vadd.f32 0.0, %v524
  %526 = vmatprep.mubr.bf16.mxu0 0
  %527 = vmatmul.mubr.bf16.gmra.mrb[0].mxu0 %v343
  %v528 = vpop.f32.mrb[0].mxu0
  %v529 = vadd.f32 0.0, %v528
  %v530 = vpop.f32.mrb[0].mxu0
  %v531 = vadd.f32 0.0, %v530
  %v532 = vpop.f32.mrb[0].mxu0
  %v533 = vadd.f32 0.0, %v532
  %v534 = vpop.f32.mrb[0].mxu0
  %v535 = vadd.f32 0.0, %v534
  %536 = vmatprep.mubr.bf16.mxu0 0
  %537 = vmatmul.mubr.bf16.gmra.mrb[0].mxu0 %v346
  %v538 = vpop.f32.mrb[0].mxu0
  %v539 = vadd.f32 0.0, %v538
  %v540 = vpop.f32.mrb[0].mxu0
  %v541 = vadd.f32 0.0, %v540
  %v542 = vpop.f32.mrb[0].mxu0
  %v543 = vadd.f32 0.0, %v542
  %v544 = vpop.f32.mrb[0].mxu0
  %v545 = vadd.f32 0.0, %v544
  %546 = vmatprep.mubr.bf16.mxu0 0
  %547 = vmatmul.mubr.bf16.gmra.mrb[0].mxu0 %v349
  %v548 = vpop.f32.mrb[0].mxu0
  %v549 = vadd.f32 0.0, %v548
  %v550 = vpop.f32.mrb[0].mxu0
  %v551 = vadd.f32 0.0, %v550
  %v552 = vpop.f32.mrb[0].mxu0
  %v553 = vadd.f32 0.0, %v552
  %v554 = vpop.f32.mrb[0].mxu0
  %v555 = vadd.f32 0.0, %v554
  %556 = vmatprep.mubr.bf16.mxu0 0
  %557 = vmatmul.mubr.bf16.gmra.mrb[0].mxu0 %v352
  %v558 = vpop.f32.mrb[0].mxu0
  %v559 = vadd.f32 0.0, %v558
  %v560 = vpop.f32.mrb[0].mxu0
  %v561 = vadd.f32 0.0, %v560
  %v562 = vpop.f32.mrb[0].mxu0
  %v563 = vadd.f32 0.0, %v562
  %v564 = vpop.f32.mrb[0].mxu0
  %v565 = vadd.f32 0.0, %v564
  %566 = vmatprep.mubr.bf16.mxu0 0
  %567 = vmatmul.mubr.bf16.gmra.mrb[0].mxu0 %v355
  %v568 = vpop.f32.mrb[0].mxu0
  %v569 = vadd.f32 0.0, %v568
  %v570 = vpop.f32.mrb[0].mxu0
  %v571 = vadd.f32 0.0, %v570
  %v572 = vpop.f32.mrb[0].mxu0
  %v573 = vadd.f32 0.0, %v572
  %v574 = vpop.f32.mrb[0].mxu0
  %v575 = vadd.f32 0.0, %v574
  %576 = vmatprep.mubr.bf16.mxu0 0
  %577 = vmatmul.mubr.bf16.gmra.mrb[0].mxu0 %v358
  %v578 = vpop.f32.mrb[0].mxu0
  %v579 = vadd.f32 0.0, %v578
  %v580 = vpop.f32.mrb[0].mxu0
  %v581 = vadd.f32 0.0, %v580
  %v582 = vpop.f32.mrb[0].mxu0
  %v583 = vadd.f32 0.0, %v582
  %v584 = vpop.f32.mrb[0].mxu0
  %v585 = vadd.f32 0.0, %v584
  %586 = vmatprep.mubr.bf16.mxu0 0
  %587 = vmatmul.mubr.bf16.gmra.mrb[0].mxu0 %v361
  %v588 = vpop.f32.mrb[0].mxu0
  %v589 = vadd.f32 0.0, %v588
  %v590 = vpop.f32.mrb[0].mxu0
  %v591 = vadd.f32 0.0, %v590
  %v592 = vpop.f32.mrb[0].mxu0
  %v593 = vadd.f32 0.0, %v592
  %v594 = vpop.f32.mrb[0].mxu0
  %v595 = vadd.f32 0.0, %v594
  %596 = vmatprep.mubr.bf16.mxu0 0
  %597 = vmatmul.mubr.bf16.gmra.mrb[0].mxu0 %v364
  %v598 = vpop.f32.mrb[0].mxu0
  %v599 = vadd.f32 0.0, %v598
  %v600 = vpop.f32.mrb[0].mxu0
  %v601 = vadd.f32 0.0, %v600
  %v602 = vpop.f32.mrb[0].mxu0
  %v603 = vadd.f32 0.0, %v602
  %v604 = vpop.f32.mrb[0].mxu0
  %v605 = vadd.f32 0.0, %v604
  %606 = vmatprep.mubr.bf16.mxu0 0
  %607 = vmatmul.mubr.bf16.gmra.mrb[0].mxu0 %v367
  %v608 = vpop.f32.mrb[0].mxu0
  %v609 = vadd.f32 0.0, %v608
  %v610 = vpop.f32.mrb[0].mxu0
  %v611 = vadd.f32 0.0, %v610
  %v612 = vpop.f32.mrb[0].mxu0
  %v613 = vadd.f32 0.0, %v612
  %v614 = vpop.f32.mrb[0].mxu0
  %v615 = vadd.f32 0.0, %v614
  %616 = vmatprep.mubr.bf16.mxu0 0
  %617 = vmatmul.mubr.bf16.gmra.mrb[0].mxu0 %v370
  %v618 = vpop.f32.mrb[0].mxu0
  %v619 = vadd.f32 0.0, %v618
  %v620 = vpop.f32.mrb[0].mxu0
  %v621 = vadd.f32 0.0, %v620
  %v622 = vpop.f32.mrb[0].mxu0
  %v623 = vadd.f32 0.0, %v622
  %v624 = vpop.f32.mrb[0].mxu0
  %v625 = vadd.f32 0.0, %v624
  %626 = vmatprep.mubr.bf16.mxu0 0
  %627 = vmatmul.mubr.bf16.gmra.mrb[0].mxu0 %v373
  %v628 = vpop.f32.mrb[0].mxu0
  %v629 = vadd.f32 0.0, %v628
  %v630 = vpop.f32.mrb[0].mxu0
  %v631 = vadd.f32 0.0, %v630
  %v632 = vpop.f32.mrb[0].mxu0
  %v633 = vadd.f32 0.0, %v632
  %v634 = vpop.f32.mrb[0].mxu0
  %v635 = vadd.f32 0.0, %v634
  %636 = vmatprep.mubr.bf16.mxu0 0
  %637 = vmatmul.mubr.bf16.gmra.mrb[0].mxu0 %v376
  %v638 = vpop.f32.mrb[0].mxu0
  %v639 = vadd.f32 0.0, %v638
  %v640 = vpop.f32.mrb[0].mxu0
  %v641 = vadd.f32 0.0, %v640
  %v642 = vpop.f32.mrb[0].mxu0
  %v643 = vadd.f32 0.0, %v642
  %v644 = vpop.f32.mrb[0].mxu0
  %v645 = vadd.f32 0.0, %v644
  %646 = vmatprep.mubr.bf16.mxu0 0
  %647 = vmatmul.mubr.bf16.gmra.mrb[0].mxu0 %v379
  %v648 = vpop.f32.mrb[0].mxu0
  %v649 = vadd.f32 0.0, %v648
  %v650 = vpop.f32.mrb[0].mxu0
  %v651 = vadd.f32 0.0, %v650
  %v652 = vpop.f32.mrb[0].mxu0
  %v653 = vadd.f32 0.0, %v652
  %v654 = vpop.f32.mrb[0].mxu0
  %v655 = vadd.f32 0.0, %v654
  %656 = vmatprep.mubr.bf16.mxu0 0
  %657 = vmatmul.mubr.bf16.gmra.mrb[0].mxu0 %v382
  %v658 = vpop.f32.mrb[0].mxu0
  %v659 = vadd.f32 0.0, %v658
  %v660 = vpop.f32.mrb[0].mxu0
  %v661 = vadd.f32 0.0, %v660
  %v662 = vpop.f32.mrb[0].mxu0
  %v663 = vadd.f32 0.0, %v662
  %v664 = vpop.f32.mrb[0].mxu0
  %v665 = vadd.f32 0.0, %v664
  %666 = vmatprep.mubr.bf16.mxu0 0
  %667 = vmatmul.mubr.bf16.gmra.mrb[0].mxu0 %v385
  %v668 = vpop.f32.mrb[0].mxu0
  %v669 = vadd.f32 0.0, %v668
  %v670 = vpop.f32.mrb[0].mxu0
  %v671 = vadd.f32 0.0, %v670
  %v672 = vpop.f32.mrb[0].mxu0
  %v673 = vadd.f32 0.0, %v672
  %v674 = vpop.f32.mrb[0].mxu0
  %v675 = vadd.f32 0.0, %v674
  %676 = vmatprep.mubr.bf16.mxu0 0
  %677 = vmatmul.mubr.bf16.gmra.mrb[0].mxu0 %v388
  %v678 = vpop.f32.mrb[0].mxu0
  %v679 = vadd.f32 0.0, %v678
  %v680 = vpop.f32.mrb[0].mxu0
  %v681 = vadd.f32 0.0, %v680
  %v682 = vpop.f32.mrb[0].mxu0
  %v683 = vadd.f32 0.0, %v682
  %v684 = vpop.f32.mrb[0].mxu0
  %v685 = vadd.f32 0.0, %v684
  %686 = vmatprep.mubr.bf16.mxu0 0
  %687 = vmatmul.mubr.bf16.gmra.mrb[0].mxu0 %v391
  %v688 = vpop.f32.mrb[0].mxu0
  %v689 = vadd.f32 0.0, %v688
  %v690 = vpop.f32.mrb[0].mxu0
  %v691 = vadd.f32 0.0, %v690
  %v692 = vpop.f32.mrb[0].mxu0
  %v693 = vadd.f32 0.0, %v692
  %v694 = vpop.f32.mrb[0].mxu0
  %v695 = vadd.f32 0.0, %v694
  %696 = vmatprep.mubr.bf16.mxu0 0
  %697 = vmatmul.mubr.bf16.gmra.mrb[0].mxu0 %v394
  %v698 = vpop.f32.mrb[0].mxu0
  %v699 = vadd.f32 0.0, %v698
  %v700 = vpop.f32.mrb[0].mxu0
  %v701 = vadd.f32 0.0, %v700
  %v702 = vpop.f32.mrb[0].mxu0
  %v703 = vadd.f32 0.0, %v702
  %v704 = vpop.f32.mrb[0].mxu0
  %v705 = vadd.f32 0.0, %v704
  %706 = vmatprep.mubr.bf16.mxu0 0
  %707 = vmatmul.mubr.bf16.gmra.mrb[0].mxu0 %v397
  %v708 = vpop.f32.mrb[0].mxu0
  %v709 = vadd.f32 0.0, %v708
  %v710 = vpop.f32.mrb[0].mxu0
  %v711 = vadd.f32 0.0, %v710
  %v712 = vpop.f32.mrb[0].mxu0
  %v713 = vadd.f32 0.0, %v712
  %v714 = vpop.f32.mrb[0].mxu0
  %v715 = vadd.f32 0.0, %v714
  %716 = vmatprep.mubr.bf16.mxu0 0
  %717 = vmatmul.mubr.bf16.gmra.mrb[0].mxu0 %v400
  %v718 = vpop.f32.mrb[0].mxu0
  %v719 = vadd.f32 0.0, %v718
  %v720 = vpop.f32.mrb[0].mxu0
  %v721 = vadd.f32 0.0, %v720
  %v722 = vpop.f32.mrb[0].mxu0
  %v723 = vadd.f32 0.0, %v722
  %v724 = vpop.f32.mrb[0].mxu0
  %v725 = vadd.f32 0.0, %v724
  %726 = vmatprep.mubr.bf16.mxu0 0
  %727 = vmatmul.mubr.bf16.gmra.mrb[0].mxu0 %v403
  %v728 = vpop.f32.mrb[0].mxu0
  %v729 = vadd.f32 0.0, %v728
  %v730 = vpop.f32.mrb[0].mxu0
  %v731 = vadd.f32 0.0, %v730
  %v732 = vpop.f32.mrb[0].mxu0
  %v733 = vadd.f32 0.0, %v732
  %v734 = vpop.f32.mrb[0].mxu0
  %v735 = vadd.f32 0.0, %v734
  %736 = vmatprep.mubr.bf16.mxu0 0
  %737 = vmatmul.mubr.bf16.gmra.mrb[0].mxu0 %v406
  %v738 = vpop.f32.mrb[0].mxu0
  %v739 = vadd.f32 0.0, %v738
  %v740 = vpop.f32.mrb[0].mxu0
  %v741 = vadd.f32 0.0, %v740
  %v742 = vpop.f32.mrb[0].mxu0
  %v743 = vadd.f32 0.0, %v742
  %v744 = vpop.f32.mrb[0].mxu0
  %v745 = vadd.f32 0.0, %v744
  %746 = vmatprep.mubr.bf16.mxu0 0
  %747 = vmatmul.mubr.bf16.gmra.mrb[0].mxu0 %v409
  %v748 = vpop.f32.mrb[0].mxu0
  %v749 = vadd.f32 0.0, %v748
  %v750 = vpop.f32.mrb[0].mxu0
  %v751 = vadd.f32 0.0, %v750
  %v752 = vpop.f32.mrb[0].mxu0
  %v753 = vadd.f32 0.0, %v752
  %v754 = vpop.f32.mrb[0].mxu0
  %v755 = vadd.f32 0.0, %v754
  %756 = vmatprep.mubr.bf16.mxu0 0
  %757 = vmatmul.mubr.bf16.gmra.mrb[0].mxu0 %v412
  %v758 = vpop.f32.mrb[0].mxu0
  %v759 = vadd.f32 0.0, %v758
  %v760 = vpop.f32.mrb[0].mxu0
  %v761 = vadd.f32 0.0, %v760
  %v762 = vpop.f32.mrb[0].mxu0
  %v763 = vadd.f32 0.0, %v762
  %v764 = vpop.f32.mrb[0].mxu0
  %v765 = vadd.f32 0.0, %v764
  %766 = vdwg.mxu0
  %767 = vmatprep.subr.bf16.mxu0 %v296
  %768 = vmatpush1.bf16.msra.mxu0 %v295
  %769 = vmatprep.subr.bf16.mxu0 %v300
  %770 = vmatpush1.bf16.msra.mxu0 %v299
  %771 = vmatprep.subr.bf16.mxu0 %v304
  %772 = vmatpush1.bf16.msra.mxu0 %v303
  %773 = vmatprep.subr.bf16.mxu0 0
  %774 = vmatpush1.bf16.msra.mxu0 0
  %775 = vmatprep.subr.bf16.mxu0 0
  %776 = vmatpush1.bf16.msra.mxu0 0
  %777 = vmatprep.subr.bf16.mxu0 0
  %778 = vmatpush1.bf16.msra.mxu0 0
  %779 = vmatprep.subr.bf16.mxu0 0
  %780 = vmatpush1.bf16.msra.mxu0 0
  %781 = vmatprep.subr.bf16.mxu0 0
  %782 = vmatpush1.bf16.msra.mxu0 0
  %783 = vmatprep.subr.bf16.mxu0 0
  %784 = vmatpush1.bf16.msra.mxu0 0
  %785 = vmatprep.subr.bf16.mxu0 0
  %786 = vmatpush1.bf16.msra.mxu0 0
  %787 = vmatprep.subr.bf16.mxu0 0
  %788 = vmatpush1.bf16.msra.mxu0 0
  %789 = vmatprep.subr.bf16.mxu0 0
  %790 = vmatpush1.bf16.msra.mxu0 0
  %791 = vmatprep.subr.bf16.mxu0 0
  %792 = vmatpush1.bf16.msra.mxu0 0
  %793 = vmatprep.subr.bf16.mxu0 0
  %794 = vmatpush1.bf16.msra.mxu0 0
  %795 = vmatprep.subr.bf16.mxu0 0
  %796 = vmatpush1.bf16.msra.mxu0 0
  %797 = vmatprep.subr.bf16.mxu0 0
  %798 = vmatpush1.bf16.msra.mxu0 0
  %799 = vmatprep.mubr.bf16.mxu0 0
  %800 = vmatmul.mubr.bf16.gmra.mrb[0].mxu0 %v319
  %v801 = vpop.f32.mrb[0].mxu0
  %v802 = vadd.f32 0.0, %v801
  %v803 = vpop.f32.mrb[0].mxu0
  %v804 = vadd.f32 0.0, %v803
  %v805 = vpop.f32.mrb[0].mxu0
  %v806 = vadd.f32 0.0, %v805
  %v807 = vpop.f32.mrb[0].mxu0
  %v808 = vadd.f32 0.0, %v807
  %809 = vmatprep.mubr.bf16.mxu0 0
  %810 = vmatmul.mubr.bf16.gmra.mrb[0].mxu0 %v322
  %v811 = vpop.f32.mrb[0].mxu0
  %v812 = vadd.f32 0.0, %v811
  %v813 = vpop.f32.mrb[0].mxu0
  %v814 = vadd.f32 0.0, %v813
  %v815 = vpop.f32.mrb[0].mxu0
  %v816 = vadd.f32 0.0, %v815
  %v817 = vpop.f32.mrb[0].mxu0
  %v818 = vadd.f32 0.0, %v817
  %819 = vmatprep.mubr.bf16.mxu0 0
  %820 = vmatmul.mubr.bf16.gmra.mrb[0].mxu0 %v325
  %v821 = vpop.f32.mrb[0].mxu0
  %v822 = vadd.f32 0.0, %v821
  %v823 = vpop.f32.mrb[0].mxu0
  %v824 = vadd.f32 0.0, %v823
  %v825 = vpop.f32.mrb[0].mxu0
  %v826 = vadd.f32 0.0, %v825
  %v827 = vpop.f32.mrb[0].mxu0
  %v828 = vadd.f32 0.0, %v827
  %829 = vmatprep.mubr.bf16.mxu0 0
  %830 = vmatmul.mubr.bf16.gmra.mrb[0].mxu0 %v328
  %v831 = vpop.f32.mrb[0].mxu0
  %v832 = vadd.f32 0.0, %v831
  %v833 = vpop.f32.mrb[0].mxu0
  %v834 = vadd.f32 0.0, %v833
  %v835 = vpop.f32.mrb[0].mxu0
  %v836 = vadd.f32 0.0, %v835
  %v837 = vpop.f32.mrb[0].mxu0
  %v838 = vadd.f32 0.0, %v837
  %839 = vmatprep.mubr.bf16.mxu0 0
  %840 = vmatmul.mubr.bf16.gmra.mrb[0].mxu0 %v331
  %v841 = vpop.f32.mrb[0].mxu0
  %v842 = vadd.f32 0.0, %v841
  %v843 = vpop.f32.mrb[0].mxu0
  %v844 = vadd.f32 0.0, %v843
  %v845 = vpop.f32.mrb[0].mxu0
  %v846 = vadd.f32 0.0, %v845
  %v847 = vpop.f32.mrb[0].mxu0
  %v848 = vadd.f32 0.0, %v847
  %849 = vmatprep.mubr.bf16.mxu0 0
  %850 = vmatmul.mubr.bf16.gmra.mrb[0].mxu0 %v334
  %v851 = vpop.f32.mrb[0].mxu0
  %v852 = vadd.f32 0.0, %v851
  %v853 = vpop.f32.mrb[0].mxu0
  %v854 = vadd.f32 0.0, %v853
  %v855 = vpop.f32.mrb[0].mxu0
  %v856 = vadd.f32 0.0, %v855
  %v857 = vpop.f32.mrb[0].mxu0
  %v858 = vadd.f32 0.0, %v857
  %859 = vmatprep.mubr.bf16.mxu0 0
  %860 = vmatmul.mubr.bf16.gmra.mrb[0].mxu0 %v337
  %v861 = vpop.f32.mrb[0].mxu0
  %v862 = vadd.f32 0.0, %v861
  %v863 = vpop.f32.mrb[0].mxu0
  %v864 = vadd.f32 0.0, %v863
  %v865 = vpop.f32.mrb[0].mxu0
  %v866 = vadd.f32 0.0, %v865
  %v867 = vpop.f32.mrb[0].mxu0
  %v868 = vadd.f32 0.0, %v867
  %869 = vmatprep.mubr.bf16.mxu0 0
  %870 = vmatmul.mubr.bf16.gmra.mrb[0].mxu0 %v340
  %v871 = vpop.f32.mrb[0].mxu0
  %v872 = vadd.f32 0.0, %v871
  %v873 = vpop.f32.mrb[0].mxu0
  %v874 = vadd.f32 0.0, %v873
  %v875 = vpop.f32.mrb[0].mxu0
  %v876 = vadd.f32 0.0, %v875
  %v877 = vpop.f32.mrb[0].mxu0
  %v878 = vadd.f32 0.0, %v877
  %879 = vmatprep.mubr.bf16.mxu0 0
  %880 = vmatmul.mubr.bf16.gmra.mrb[0].mxu0 %v343
  %v881 = vpop.f32.mrb[0].mxu0
  %v882 = vadd.f32 0.0, %v881
  %v883 = vpop.f32.mrb[0].mxu0
  %v884 = vadd.f32 0.0, %v883
  %v885 = vpop.f32.mrb[0].mxu0
  %v886 = vadd.f32 0.0, %v885
  %v887 = vpop.f32.mrb[0].mxu0
  %v888 = vadd.f32 0.0, %v887
  %889 = vmatprep.mubr.bf16.mxu0 0
  %890 = vmatmul.mubr.bf16.gmra.mrb[0].mxu0 %v346
  %v891 = vpop.f32.mrb[0].mxu0
  %v892 = vadd.f32 0.0, %v891
  %v893 = vpop.f32.mrb[0].mxu0
  %v894 = vadd.f32 0.0, %v893
  %v895 = vpop.f32.mrb[0].mxu0
  %v896 = vadd.f32 0.0, %v895
  %v897 = vpop.f32.mrb[0].mxu0
  %v898 = vadd.f32 0.0, %v897
  %899 = vmatprep.mubr.bf16.mxu0 0
  %900 = vmatmul.mubr.bf16.gmra.mrb[0].mxu0 %v349
  %v901 = vpop.f32.mrb[0].mxu0
  %v902 = vadd.f32 0.0, %v901
  %v903 = vpop.f32.mrb[0].mxu0
  %v904 = vadd.f32 0.0, %v903
  %v905 = vpop.f32.mrb[0].mxu0
  %v906 = vadd.f32 0.0, %v905
  %v907 = vpop.f32.mrb[0].mxu0
  %v908 = vadd.f32 0.0, %v907
  %909 = vmatprep.mubr.bf16.mxu0 0
  %910 = vmatmul.mubr.bf16.gmra.mrb[0].mxu0 %v352
  %v911 = vpop.f32.mrb[0].mxu0
  %v912 = vadd.f32 0.0, %v911
  %v913 = vpop.f32.mrb[0].mxu0
  %v914 = vadd.f32 0.0, %v913
  %v915 = vpop.f32.mrb[0].mxu0
  %v916 = vadd.f32 0.0, %v915
  %v917 = vpop.f32.mrb[0].mxu0
  %v918 = vadd.f32 0.0, %v917
  %919 = vmatprep.mubr.bf16.mxu0 0
  %920 = vmatmul.mubr.bf16.gmra.mrb[0].mxu0 %v355
  %v921 = vpop.f32.mrb[0].mxu0
  %v922 = vadd.f32 0.0, %v921
  %v923 = vpop.f32.mrb[0].mxu0
  %v924 = vadd.f32 0.0, %v923
  %v925 = vpop.f32.mrb[0].mxu0
  %v926 = vadd.f32 0.0, %v925
  %v927 = vpop.f32.mrb[0].mxu0
  %v928 = vadd.f32 0.0, %v927
  %929 = vmatprep.mubr.bf16.mxu0 0
  %930 = vmatmul.mubr.bf16.gmra.mrb[0].mxu0 %v358
  %v931 = vpop.f32.mrb[0].mxu0
  %v932 = vadd.f32 0.0, %v931
  %v933 = vpop.f32.mrb[0].mxu0
  %v934 = vadd.f32 0.0, %v933
  %v935 = vpop.f32.mrb[0].mxu0
  %v936 = vadd.f32 0.0, %v935
  %v937 = vpop.f32.mrb[0].mxu0
  %v938 = vadd.f32 0.0, %v937
  %939 = vmatprep.mubr.bf16.mxu0 0
  %940 = vmatmul.mubr.bf16.gmra.mrb[0].mxu0 %v361
  %v941 = vpop.f32.mrb[0].mxu0
  %v942 = vadd.f32 0.0, %v941
  %v943 = vpop.f32.mrb[0].mxu0
  %v944 = vadd.f32 0.0, %v943
  %v945 = vpop.f32.mrb[0].mxu0
  %v946 = vadd.f32 0.0, %v945
  %v947 = vpop.f32.mrb[0].mxu0
  %v948 = vadd.f32 0.0, %v947
  %949 = vmatprep.mubr.bf16.mxu0 0
  %950 = vmatmul.mubr.bf16.gmra.mrb[0].mxu0 %v364
  %v951 = vpop.f32.mrb[0].mxu0
  %v952 = vadd.f32 0.0, %v951
  %v953 = vpop.f32.mrb[0].mxu0
  %v954 = vadd.f32 0.0, %v953
  %v955 = vpop.f32.mrb[0].mxu0
  %v956 = vadd.f32 0.0, %v955
  %v957 = vpop.f32.mrb[0].mxu0
  %v958 = vadd.f32 0.0, %v957
  %959 = vmatprep.mubr.bf16.mxu0 0
  %960 = vmatmul.mubr.bf16.gmra.mrb[0].mxu0 %v367
  %v961 = vpop.f32.mrb[0].mxu0
  %v962 = vadd.f32 0.0, %v961
  %v963 = vpop.f32.mrb[0].mxu0
  %v964 = vadd.f32 0.0, %v963
  %v965 = vpop.f32.mrb[0].mxu0
  %v966 = vadd.f32 0.0, %v965
  %v967 = vpop.f32.mrb[0].mxu0
  %v968 = vadd.f32 0.0, %v967
  %969 = vmatprep.mubr.bf16.mxu0 0
  %970 = vmatmul.mubr.bf16.gmra.mrb[0].mxu0 %v370
  %v971 = vpop.f32.mrb[0].mxu0
  %v972 = vadd.f32 0.0, %v971
  %v973 = vpop.f32.mrb[0].mxu0
  %v974 = vadd.f32 0.0, %v973
  %v975 = vpop.f32.mrb[0].mxu0
  %v976 = vadd.f32 0.0, %v975
  %v977 = vpop.f32.mrb[0].mxu0
  %v978 = vadd.f32 0.0, %v977
  %979 = vmatprep.mubr.bf16.mxu0 0
  %980 = vmatmul.mubr.bf16.gmra.mrb[0].mxu0 %v373
  %v981 = vpop.f32.mrb[0].mxu0
  %v982 = vadd.f32 0.0, %v981
  %v983 = vpop.f32.mrb[0].mxu0
  %v984 = vadd.f32 0.0, %v983
  %v985 = vpop.f32.mrb[0].mxu0
  %v986 = vadd.f32 0.0, %v985
  %v987 = vpop.f32.mrb[0].mxu0
  %v988 = vadd.f32 0.0, %v987
  %989 = vmatprep.mubr.bf16.mxu0 0
  %990 = vmatmul.mubr.bf16.gmra.mrb[0].mxu0 %v376
  %v991 = vpop.f32.mrb[0].mxu0
  %v992 = vadd.f32 0.0, %v991
  %v993 = vpop.f32.mrb[0].mxu0
  %v994 = vadd.f32 0.0, %v993
  %v995 = vpop.f32.mrb[0].mxu0
  %v996 = vadd.f32 0.0, %v995
  %v997 = vpop.f32.mrb[0].mxu0
  %v998 = vadd.f32 0.0, %v997
  %999 = vmatprep.mubr.bf16.mxu0 0
  %1000 = vmatmul.mubr.bf16.gmra.mrb[0].mxu0 %v379
  %v1001 = vpop.f32.mrb[0].mxu0
  %v1002 = vadd.f32 0.0, %v1001
  %v1003 = vpop.f32.mrb[0].mxu0
  %v1004 = vadd.f32 0.0, %v1003
  %v1005 = vpop.f32.mrb[0].mxu0
  %v1006 = vadd.f32 0.0, %v1005
  %v1007 = vpop.f32.mrb[0].mxu0
  %v1008 = vadd.f32 0.0, %v1007
  %1009 = vmatprep.mubr.bf16.mxu0 0
  %1010 = vmatmul.mubr.bf16.gmra.mrb[0].mxu0 %v382
  %v1011 = vpop.f32.mrb[0].mxu0
  %v1012 = vadd.f32 0.0, %v1011
  %v1013 = vpop.f32.mrb[0].mxu0
  %v1014 = vadd.f32 0.0, %v1013
  %v1015 = vpop.f32.mrb[0].mxu0
  %v1016 = vadd.f32 0.0, %v1015
  %v1017 = vpop.f32.mrb[0].mxu0
  %v1018 = vadd.f32 0.0, %v1017
  %1019 = vmatprep.mubr.bf16.mxu0 0
  %1020 = vmatmul.mubr.bf16.gmra.mrb[0].mxu0 %v385
  %v1021 = vpop.f32.mrb[0].mxu0
  %v1022 = vadd.f32 0.0, %v1021
  %v1023 = vpop.f32.mrb[0].mxu0
  %v1024 = vadd.f32 0.0, %v1023
  %v1025 = vpop.f32.mrb[0].mxu0
  %v1026 = vadd.f32 0.0, %v1025
  %v1027 = vpop.f32.mrb[0].mxu0
  %v1028 = vadd.f32 0.0, %v1027
  %1029 = vmatprep.mubr.bf16.mxu0 0
  %1030 = vmatmul.mubr.bf16.gmra.mrb[0].mxu0 %v388
  %v1031 = vpop.f32.mrb[0].mxu0
  %v1032 = vadd.f32 0.0, %v1031
  %v1033 = vpop.f32.mrb[0].mxu0
  %v1034 = vadd.f32 0.0, %v1033
  %v1035 = vpop.f32.mrb[0].mxu0
  %v1036 = vadd.f32 0.0, %v1035
  %v1037 = vpop.f32.mrb[0].mxu0
  %v1038 = vadd.f32 0.0, %v1037
  %1039 = vmatprep.mubr.bf16.mxu0 0
  %1040 = vmatmul.mubr.bf16.gmra.mrb[0].mxu0 %v391
  %v1041 = vpop.f32.mrb[0].mxu0
  %v1042 = vadd.f32 0.0, %v1041
  %v1043 = vpop.f32.mrb[0].mxu0
  %v1044 = vadd.f32 0.0, %v1043
  %v1045 = vpop.f32.mrb[0].mxu0
  %v1046 = vadd.f32 0.0, %v1045
  %v1047 = vpop.f32.mrb[0].mxu0
  %v1048 = vadd.f32 0.0, %v1047
  %1049 = vmatprep.mubr.bf16.mxu0 0
  %1050 = vmatmul.mubr.bf16.gmra.mrb[0].mxu0 %v394
  %v1051 = vpop.f32.mrb[0].mxu0
  %v1052 = vadd.f32 0.0, %v1051
  %v1053 = vpop.f32.mrb[0].mxu0
  %v1054 = vadd.f32 0.0, %v1053
  %v1055 = vpop.f32.mrb[0].mxu0
  %v1056 = vadd.f32 0.0, %v1055
  %v1057 = vpop.f32.mrb[0].mxu0
  %v1058 = vadd.f32 0.0, %v1057
  %1059 = vmatprep.mubr.bf16.mxu0 0
  %1060 = vmatmul.mubr.bf16.gmra.mrb[0].mxu0 %v397
  %v1061 = vpop.f32.mrb[0].mxu0
  %v1062 = vadd.f32 0.0, %v1061
  %v1063 = vpop.f32.mrb[0].mxu0
  %v1064 = vadd.f32 0.0, %v1063
  %v1065 = vpop.f32.mrb[0].mxu0
  %v1066 = vadd.f32 0.0, %v1065
  %v1067 = vpop.f32.mrb[0].mxu0
  %v1068 = vadd.f32 0.0, %v1067
  %1069 = vmatprep.mubr.bf16.mxu0 0
  %1070 = vmatmul.mubr.bf16.gmra.mrb[0].mxu0 %v400
  %v1071 = vpop.f32.mrb[0].mxu0
  %v1072 = vadd.f32 0.0, %v1071
  %v1073 = vpop.f32.mrb[0].mxu0
  %v1074 = vadd.f32 0.0, %v1073
  %v1075 = vpop.f32.mrb[0].mxu0
  %v1076 = vadd.f32 0.0, %v1075
  %v1077 = vpop.f32.mrb[0].mxu0
  %v1078 = vadd.f32 0.0, %v1077
  %1079 = vmatprep.mubr.bf16.mxu0 0
  %1080 = vmatmul.mubr.bf16.gmra.mrb[0].mxu0 %v403
  %v1081 = vpop.f32.mrb[0].mxu0
  %v1082 = vadd.f32 0.0, %v1081
  %v1083 = vpop.f32.mrb[0].mxu0
  %v1084 = vadd.f32 0.0, %v1083
  %v1085 = vpop.f32.mrb[0].mxu0
  %v1086 = vadd.f32 0.0, %v1085
  %v1087 = vpop.f32.mrb[0].mxu0
  %v1088 = vadd.f32 0.0, %v1087
  %1089 = vmatprep.mubr.bf16.mxu0 0
  %1090 = vmatmul.mubr.bf16.gmra.mrb[0].mxu0 %v406
  %v1091 = vpop.f32.mrb[0].mxu0
  %v1092 = vadd.f32 0.0, %v1091
  %v1093 = vpop.f32.mrb[0].mxu0
  %v1094 = vadd.f32 0.0, %v1093
  %v1095 = vpop.f32.mrb[0].mxu0
  %v1096 = vadd.f32 0.0, %v1095
  %v1097 = vpop.f32.mrb[0].mxu0
  %v1098 = vadd.f32 0.0, %v1097
  %1099 = vmatprep.mubr.bf16.mxu0 0
  %1100 = vmatmul.mubr.bf16.gmra.mrb[0].mxu0 %v409
  %v1101 = vpop.f32.mrb[0].mxu0
  %v1102 = vadd.f32 0.0, %v1101
  %v1103 = vpop.f32.mrb[0].mxu0
  %v1104 = vadd.f32 0.0, %v1103
  %v1105 = vpop.f32.mrb[0].mxu0
  %v1106 = vadd.f32 0.0, %v1105
  %v1107 = vpop.f32.mrb[0].mxu0
  %v1108 = vadd.f32 0.0, %v1107
  %1109 = vmatprep.mubr.bf16.mxu0 0
  %1110 = vmatmul.mubr.bf16.gmra.mrb[0].mxu0 %v412
  %v1111 = vpop.f32.mrb[0].mxu0
  %v1112 = vadd.f32 0.0, %v1111
  %v1113 = vpop.f32.mrb[0].mxu0
  %v1114 = vadd.f32 0.0, %v1113
  %v1115 = vpop.f32.mrb[0].mxu0
  %v1116 = vadd.f32 0.0, %v1115
  %v1117 = vpop.f32.mrb[0].mxu0
  %v1118 = vadd.f32 0.0, %v1117
  %1119 = vdwg.mxu0
  %v1120 = vmax.f32 %v449, %v451
  %v1121 = vmax.f32 %v453, %v455
  %v1122 = vmax.f32 %v459, %v461
  %v1123 = vmax.f32 %v463, %v465
  %v1124 = vmax.f32 %v469, %v471
  %v1125 = vmax.f32 %v473, %v475
  %v1126 = vmax.f32 %v479, %v481
  %v1127 = vmax.f32 %v483, %v485
  %v1128 = vmax.f32 %v489, %v491
  %v1129 = vmax.f32 %v493, %v495
  %v1130 = vmax.f32 %v499, %v501
  %v1131 = vmax.f32 %v503, %v505
  %v1132 = vmax.f32 %v509, %v511
  %v1133 = vmax.f32 %v513, %v515
  %v1134 = vmax.f32 %v519, %v521
  %v1135 = vmax.f32 %v523, %v525
  %v1136 = vmax.f32 %v529, %v531
  %v1137 = vmax.f32 %v533, %v535
  %v1138 = vmax.f32 %v539, %v541
  %v1139 = vmax.f32 %v543, %v545
  %v1140 = vmax.f32 %v549, %v551
  %v1141 = vmax.f32 %v553, %v555
  %v1142 = vmax.f32 %v559, %v561
  %v1143 = vmax.f32 %v563, %v565
  %v1144 = vmax.f32 %v569, %v571
  %v1145 = vmax.f32 %v573, %v575
  %v1146 = vmax.f32 %v579, %v581
  %v1147 = vmax.f32 %v583, %v585
  %v1148 = vmax.f32 %v589, %v591
  %v1149 = vmax.f32 %v593, %v595
  %v1150 = vmax.f32 %v599, %v601
  %v1151 = vmax.f32 %v603, %v605
  %v1152 = vmax.f32 %v609, %v611
  %v1153 = vmax.f32 %v613, %v615
  %v1154 = vmax.f32 %v619, %v621
  %v1155 = vmax.f32 %v623, %v625
  %v1156 = vmax.f32 %v629, %v631
  %v1157 = vmax.f32 %v633, %v635
  %v1158 = vmax.f32 %v639, %v641
  %v1159 = vmax.f32 %v643, %v645
  %v1160 = vmax.f32 %v649, %v651
  %v1161 = vmax.f32 %v653, %v655
  %v1162 = vmax.f32 %v659, %v661
  %v1163 = vmax.f32 %v663, %v665
  %v1164 = vmax.f32 %v669, %v671
  %v1165 = vmax.f32 %v673, %v675
  %v1166 = vmax.f32 %v679, %v681
  %v1167 = vmax.f32 %v683, %v685
  %v1168 = vmax.f32 %v689, %v691
  %v1169 = vmax.f32 %v693, %v695
  %v1170 = vmax.f32 %v699, %v701
  %v1171 = vmax.f32 %v703, %v705
  %v1172 = vmax.f32 %v709, %v711
  %v1173 = vmax.f32 %v713, %v715
  %v1174 = vmax.f32 %v719, %v721
  %v1175 = vmax.f32 %v723, %v725
  %v1176 = vmax.f32 %v729, %v731
  %v1177 = vmax.f32 %v733, %v735
  %v1178 = vmax.f32 %v739, %v741
  %v1179 = vmax.f32 %v743, %v745
  %v1180 = vmax.f32 %v749, %v751
  %v1181 = vmax.f32 %v753, %v755
  %v1182 = vmax.f32 %v759, %v761
  %v1183 = vmax.f32 %v763, %v765
  %v1184 = vmax.f32 %v802, %v804
  %v1185 = vmax.f32 %v806, %v808
  %v1186 = vmax.f32 %v812, %v814
  %v1187 = vmax.f32 %v816, %v818
  %v1188 = vmax.f32 %v822, %v824
  %v1189 = vmax.f32 %v826, %v828
  %v1190 = vmax.f32 %v832, %v834
  %v1191 = vmax.f32 %v836, %v838
  %v1192 = vmax.f32 %v842, %v844
  %v1193 = vmax.f32 %v846, %v848
  %v1194 = vmax.f32 %v852, %v854
  %v1195 = vmax.f32 %v856, %v858
  %v1196 = vmax.f32 %v862, %v864
  %v1197 = vmax.f32 %v866, %v868
  %v1198 = vmax.f32 %v872, %v874
  %v1199 = vmax.f32 %v876, %v878
  %v1200 = vmax.f32 %v882, %v884
  %v1201 = vmax.f32 %v886, %v888
  %v1202 = vmax.f32 %v892, %v894
  %v1203 = vmax.f32 %v896, %v898
  %v1204 = vmax.f32 %v902, %v904
  %v1205 = vmax.f32 %v906, %v908
  %v1206 = vmax.f32 %v912, %v914
  %v1207 = vmax.f32 %v916, %v918
  %v1208 = vmax.f32 %v922, %v924
  %v1209 = vmax.f32 %v926, %v928
  %v1210 = vmax.f32 %v932, %v934
  %v1211 = vmax.f32 %v936, %v938
  %v1212 = vmax.f32 %v942, %v944
  %v1213 = vmax.f32 %v946, %v948
  %v1214 = vmax.f32 %v952, %v954
  %v1215 = vmax.f32 %v956, %v958
  %v1216 = vmax.f32 %v962, %v964
  %v1217 = vmax.f32 %v966, %v968
  %v1218 = vmax.f32 %v972, %v974
  %v1219 = vmax.f32 %v976, %v978
  %v1220 = vmax.f32 %v982, %v984
  %v1221 = vmax.f32 %v986, %v988
  %v1222 = vmax.f32 %v992, %v994
  %v1223 = vmax.f32 %v996, %v998
  %v1224 = vmax.f32 %v1002, %v1004
  %v1225 = vmax.f32 %v1006, %v1008
  %v1226 = vmax.f32 %v1012, %v1014
  %v1227 = vmax.f32 %v1016, %v1018
  %v1228 = vmax.f32 %v1022, %v1024
  %v1229 = vmax.f32 %v1026, %v1028
  %v1230 = vmax.f32 %v1032, %v1034
  %v1231 = vmax.f32 %v1036, %v1038
  %v1232 = vmax.f32 %v1042, %v1044
  %v1233 = vmax.f32 %v1046, %v1048
  %v1234 = vmax.f32 %v1052, %v1054
  %v1235 = vmax.f32 %v1056, %v1058
  %v1236 = vmax.f32 %v1062, %v1064
  %v1237 = vmax.f32 %v1066, %v1068
  %v1238 = vmax.f32 %v1072, %v1074
  %v1239 = vmax.f32 %v1076, %v1078
  %v1240 = vmax.f32 %v1082, %v1084
  %v1241 = vmax.f32 %v1086, %v1088
  %v1242 = vmax.f32 %v1092, %v1094
  %v1243 = vmax.f32 %v1096, %v1098
  %v1244 = vmax.f32 %v1102, %v1104
  %v1245 = vmax.f32 %v1106, %v1108
  %v1246 = vmax.f32 %v1112, %v1114
  %v1247 = vmax.f32 %v1116, %v1118
  %v1248 = vmax.f32 %v1120, %v1184
  %v1249 = vmax.f32 %v1121, %v1185
  %v1250 = vmax.f32 %v1122, %v1186
  %v1251 = vmax.f32 %v1123, %v1187
  %v1252 = vmax.f32 %v1124, %v1188
  %v1253 = vmax.f32 %v1125, %v1189
  %v1254 = vmax.f32 %v1126, %v1190
  %v1255 = vmax.f32 %v1127, %v1191
  %v1256 = vmax.f32 %v1128, %v1192
  %v1257 = vmax.f32 %v1129, %v1193
  %v1258 = vmax.f32 %v1130, %v1194
  %v1259 = vmax.f32 %v1131, %v1195
  %v1260 = vmax.f32 %v1132, %v1196
  %v1261 = vmax.f32 %v1133, %v1197
  %v1262 = vmax.f32 %v1134, %v1198
  %v1263 = vmax.f32 %v1135, %v1199
  %v1264 = vmax.f32 %v1136, %v1200
  %v1265 = vmax.f32 %v1137, %v1201
  %v1266 = vmax.f32 %v1138, %v1202
  %v1267 = vmax.f32 %v1139, %v1203
  %v1268 = vmax.f32 %v1140, %v1204
  %v1269 = vmax.f32 %v1141, %v1205
  %v1270 = vmax.f32 %v1142, %v1206
  %v1271 = vmax.f32 %v1143, %v1207
  %v1272 = vmax.f32 %v1144, %v1208
  %v1273 = vmax.f32 %v1145, %v1209
  %v1274 = vmax.f32 %v1146, %v1210
  %v1275 = vmax.f32 %v1147, %v1211
  %v1276 = vmax.f32 %v1148, %v1212
  %v1277 = vmax.f32 %v1149, %v1213
  %v1278 = vmax.f32 %v1150, %v1214
  %v1279 = vmax.f32 %v1151, %v1215
  %v1280 = vmax.f32 %v1152, %v1216
  %v1281 = vmax.f32 %v1153, %v1217
  %v1282 = vmax.f32 %v1154, %v1218
  %v1283 = vmax.f32 %v1155, %v1219
  %v1284 = vmax.f32 %v1156, %v1220
  %v1285 = vmax.f32 %v1157, %v1221
  %v1286 = vmax.f32 %v1158, %v1222
  %v1287 = vmax.f32 %v1159, %v1223
  %v1288 = vmax.f32 %v1160, %v1224
  %v1289 = vmax.f32 %v1161, %v1225
  %v1290 = vmax.f32 %v1162, %v1226
  %v1291 = vmax.f32 %v1163, %v1227
  %v1292 = vmax.f32 %v1164, %v1228
  %v1293 = vmax.f32 %v1165, %v1229
  %v1294 = vmax.f32 %v1166, %v1230
  %v1295 = vmax.f32 %v1167, %v1231
  %v1296 = vmax.f32 %v1168, %v1232
  %v1297 = vmax.f32 %v1169, %v1233
  %v1298 = vmax.f32 %v1170, %v1234
  %v1299 = vmax.f32 %v1171, %v1235
  %v1300 = vmax.f32 %v1172, %v1236
  %v1301 = vmax.f32 %v1173, %v1237
  %v1302 = vmax.f32 %v1174, %v1238
  %v1303 = vmax.f32 %v1175, %v1239
  %v1304 = vmax.f32 %v1176, %v1240
  %v1305 = vmax.f32 %v1177, %v1241
  %v1306 = vmax.f32 %v1178, %v1242
  %v1307 = vmax.f32 %v1179, %v1243
  %v1308 = vmax.f32 %v1180, %v1244
  %v1309 = vmax.f32 %v1181, %v1245
  %v1310 = vmax.f32 %v1182, %v1246
  %v1311 = vmax.f32 %v1183, %v1247
  %v1312 = vld [vmem:[%s2] sm:$0x1]
  %v1314 = vlaneseq
  %v1315 = vshrl.u32 %v1314, 7
  %v1316 = vsub.s32 0, %v1315
  %v1317 = vrot.slane %v1312, %v1316
  %v1319 = vadd.f32 %v1248, %v1317
  %v1320 = vadd.f32 %v1249, %v1317
  %v1321 = vadd.f32 %v1250, %v1317
  %v1322 = vadd.f32 %v1251, %v1317
  %v1323 = vadd.f32 %v1252, %v1317
  %v1324 = vadd.f32 %v1253, %v1317
  %v1325 = vadd.f32 %v1254, %v1317
  %v1326 = vadd.f32 %v1255, %v1317
  %v1327 = vadd.f32 %v1256, %v1317
  %v1328 = vadd.f32 %v1257, %v1317
  %v1329 = vadd.f32 %v1258, %v1317
  %v1330 = vadd.f32 %v1259, %v1317
  %v1331 = vadd.f32 %v1260, %v1317
  %v1332 = vadd.f32 %v1261, %v1317
  %v1333 = vadd.f32 %v1262, %v1317
  %v1334 = vadd.f32 %v1263, %v1317
  %v1335 = vadd.f32 %v1264, %v1317
  %v1336 = vadd.f32 %v1265, %v1317
  %v1337 = vadd.f32 %v1266, %v1317
  %v1338 = vadd.f32 %v1267, %v1317
  %v1339 = vadd.f32 %v1268, %v1317
  %v1340 = vadd.f32 %v1269, %v1317
  %v1341 = vadd.f32 %v1270, %v1317
  %v1342 = vadd.f32 %v1271, %v1317
  %v1343 = vadd.f32 %v1272, %v1317
  %v1344 = vadd.f32 %v1273, %v1317
  %v1345 = vadd.f32 %v1274, %v1317
  %v1346 = vadd.f32 %v1275, %v1317
  %v1347 = vadd.f32 %v1276, %v1317
  %v1348 = vadd.f32 %v1277, %v1317
  %v1349 = vadd.f32 %v1278, %v1317
  %v1350 = vadd.f32 %v1279, %v1317
  %v1351 = vadd.f32 %v1280, %v1317
  %v1352 = vadd.f32 %v1281, %v1317
  %v1353 = vadd.f32 %v1282, %v1317
  %v1354 = vadd.f32 %v1283, %v1317
  %v1355 = vadd.f32 %v1284, %v1317
  %v1356 = vadd.f32 %v1285, %v1317
  %v1357 = vadd.f32 %v1286, %v1317
  %v1358 = vadd.f32 %v1287, %v1317
  %v1359 = vadd.f32 %v1288, %v1317
  %v1360 = vadd.f32 %v1289, %v1317
  %v1361 = vadd.f32 %v1290, %v1317
  %v1362 = vadd.f32 %v1291, %v1317
  %v1363 = vadd.f32 %v1292, %v1317
  %v1364 = vadd.f32 %v1293, %v1317
  %v1365 = vadd.f32 %v1294, %v1317
  %v1366 = vadd.f32 %v1295, %v1317
  %v1367 = vadd.f32 %v1296, %v1317
  %v1368 = vadd.f32 %v1297, %v1317
  %v1369 = vadd.f32 %v1298, %v1317
  %v1370 = vadd.f32 %v1299, %v1317
  %v1371 = vadd.f32 %v1300, %v1317
  %v1372 = vadd.f32 %v1301, %v1317
  %v1373 = vadd.f32 %v1302, %v1317
  %v1374 = vadd.f32 %v1303, %v1317
  %v1375 = vadd.f32 %v1304, %v1317
  %v1376 = vadd.f32 %v1305, %v1317
  %v1377 = vadd.f32 %v1306, %v1317
  %v1378 = vadd.f32 %v1307, %v1317
  %v1379 = vadd.f32 %v1308, %v1317
  %v1380 = vadd.f32 %v1309, %v1317
  %v1381 = vadd.f32 %v1310, %v1317
  %v1382 = vadd.f32 %v1311, %v1317
  %v1383 = vmax.f32 %v1319, 0.0
  %v1384 = vmax.f32 %v1320, 0.0
  %v1385 = vmax.f32 %v1321, 0.0
  %v1386 = vmax.f32 %v1322, 0.0
  %v1387 = vmax.f32 %v1323, 0.0
  %v1388 = vmax.f32 %v1324, 0.0
  %v1389 = vmax.f32 %v1325, 0.0
  %v1390 = vmax.f32 %v1326, 0.0
  %v1391 = vmax.f32 %v1327, 0.0
  %v1392 = vmax.f32 %v1328, 0.0
  %v1393 = vmax.f32 %v1329, 0.0
  %v1394 = vmax.f32 %v1330, 0.0
  %v1395 = vmax.f32 %v1331, 0.0
  %v1396 = vmax.f32 %v1332, 0.0
  %v1397 = vmax.f32 %v1333, 0.0
  %v1398 = vmax.f32 %v1334, 0.0
  %v1399 = vmax.f32 %v1335, 0.0
  %v1400 = vmax.f32 %v1336, 0.0
  %v1401 = vmax.f32 %v1337, 0.0
  %v1402 = vmax.f32 %v1338, 0.0
  %v1403 = vmax.f32 %v1339, 0.0
  %v1404 = vmax.f32 %v1340, 0.0
  %v1405 = vmax.f32 %v1341, 0.0
  %v1406 = vmax.f32 %v1342, 0.0
  %v1407 = vmax.f32 %v1343, 0.0
  %v1408 = vmax.f32 %v1344, 0.0
  %v1409 = vmax.f32 %v1345, 0.0
  %v1410 = vmax.f32 %v1346, 0.0
  %v1411 = vmax.f32 %v1347, 0.0
  %v1412 = vmax.f32 %v1348, 0.0
  %v1413 = vmax.f32 %v1349, 0.0
  %v1414 = vmax.f32 %v1350, 0.0
  %v1415 = vmax.f32 %v1351, 0.0
  %v1416 = vmax.f32 %v1352, 0.0
  %v1417 = vmax.f32 %v1353, 0.0
  %v1418 = vmax.f32 %v1354, 0.0
  %v1419 = vmax.f32 %v1355, 0.0
  %v1420 = vmax.f32 %v1356, 0.0
  %v1421 = vmax.f32 %v1357, 0.0
  %v1422 = vmax.f32 %v1358, 0.0
  %v1423 = vmax.f32 %v1359, 0.0
  %v1424 = vmax.f32 %v1360, 0.0
  %v1425 = vmax.f32 %v1361, 0.0
  %v1426 = vmax.f32 %v1362, 0.0
  %v1427 = vmax.f32 %v1363, 0.0
  %v1428 = vmax.f32 %v1364, 0.0
  %v1429 = vmax.f32 %v1365, 0.0
  %v1430 = vmax.f32 %v1366, 0.0
  %v1431 = vmax.f32 %v1367, 0.0
  %v1432 = vmax.f32 %v1368, 0.0
  %v1433 = vmax.f32 %v1369, 0.0
  %v1434 = vmax.f32 %v1370, 0.0
  %v1435 = vmax.f32 %v1371, 0.0
  %v1436 = vmax.f32 %v1372, 0.0
  %v1437 = vmax.f32 %v1373, 0.0
  %v1438 = vmax.f32 %v1374, 0.0
  %v1439 = vmax.f32 %v1375, 0.0
  %v1440 = vmax.f32 %v1376, 0.0
  %v1441 = vmax.f32 %v1377, 0.0
  %v1442 = vmax.f32 %v1378, 0.0
  %v1443 = vmax.f32 %v1379, 0.0
  %v1444 = vmax.f32 %v1380, 0.0
  %v1445 = vmax.f32 %v1381, 0.0
  %v1446 = vmax.f32 %v1382, 0.0
  %v1447 = vadd.f32 %v1383, %v1384
  %v1448 = vadd.f32 %v1447, %v1385
  %v1449 = vadd.f32 %v1448, %v1386
  %v1450 = vadd.f32 %v1449, %v1387
  %v1451 = vadd.f32 %v1450, %v1388
  %v1452 = vadd.f32 %v1451, %v1389
  %v1453 = vadd.f32 %v1452, %v1390
  %v1454 = vadd.f32 %v1453, %v1391
  %v1455 = vadd.f32 %v1454, %v1392
  %v1456 = vadd.f32 %v1455, %v1393
  %v1457 = vadd.f32 %v1456, %v1394
  %v1458 = vadd.f32 %v1457, %v1395
  %v1459 = vadd.f32 %v1458, %v1396
  %v1460 = vadd.f32 %v1459, %v1397
  %v1461 = vadd.f32 %v1460, %v1398
  %v1462 = vadd.f32 %v1461, %v1399
  %v1463 = vadd.f32 %v1462, %v1400
  %v1464 = vadd.f32 %v1463, %v1401
  %v1465 = vadd.f32 %v1464, %v1402
  %v1466 = vadd.f32 %v1465, %v1403
  %v1467 = vadd.f32 %v1466, %v1404
  %v1468 = vadd.f32 %v1467, %v1405
  %v1469 = vadd.f32 %v1468, %v1406
  %v1470 = vadd.f32 %v1469, %v1407
  %v1471 = vadd.f32 %v1470, %v1408
  %v1472 = vadd.f32 %v1471, %v1409
  %v1473 = vadd.f32 %v1472, %v1410
  %v1474 = vadd.f32 %v1473, %v1411
  %v1475 = vadd.f32 %v1474, %v1412
  %v1476 = vadd.f32 %v1475, %v1413
  %v1477 = vadd.f32 %v1476, %v1414
  %v1478 = vadd.f32 %v1477, %v1415
  %v1479 = vadd.f32 %v1478, %v1416
  %v1480 = vadd.f32 %v1479, %v1417
  %v1481 = vadd.f32 %v1480, %v1418
  %v1482 = vadd.f32 %v1481, %v1419
  %v1483 = vadd.f32 %v1482, %v1420
  %v1484 = vadd.f32 %v1483, %v1421
  %v1485 = vadd.f32 %v1484, %v1422
  %v1486 = vadd.f32 %v1485, %v1423
  %v1487 = vadd.f32 %v1486, %v1424
  %v1488 = vadd.f32 %v1487, %v1425
  %v1489 = vadd.f32 %v1488, %v1426
  %v1490 = vadd.f32 %v1489, %v1427
  %v1491 = vadd.f32 %v1490, %v1428
  %v1492 = vadd.f32 %v1491, %v1429
  %v1493 = vadd.f32 %v1492, %v1430
  %v1494 = vadd.f32 %v1493, %v1431
  %v1495 = vadd.f32 %v1494, %v1432
  %v1496 = vadd.f32 %v1495, %v1433
  %v1497 = vadd.f32 %v1496, %v1434
  %v1498 = vadd.f32 %v1497, %v1435
  %v1499 = vadd.f32 %v1498, %v1436
  %v1500 = vadd.f32 %v1499, %v1437
  %v1501 = vadd.f32 %v1500, %v1438
  %v1502 = vadd.f32 %v1501, %v1439
  %v1503 = vadd.f32 %v1502, %v1440
  %v1504 = vadd.f32 %v1503, %v1441
  %v1505 = vadd.f32 %v1504, %v1442
  %v1506 = vadd.f32 %v1505, %v1443
  %v1507 = vadd.f32 %v1506, %v1444
  %v1508 = vadd.f32 %v1507, %v1445
  %v1509 = vadd.f32 %v1508, %v1446
  %v1510 = vrot.slane %v1509, 4
  %v1511 = vadd.f32 %v1509, %v1510
  %v1512 = vrot.slane %v1511, 2
  %v1513 = vadd.f32 %v1511, %v1512
  %v1514 = vrot.slane %v1513, 1
  %v1515 = vadd.f32 %v1513, %v1514
  %v1516 = vmul.f32 %v1515, 0.001953125
  %v1517 = vmul.f32 %v1383, %v1383
  %v1518 = vmul.f32 %v1384, %v1384
  %v1519 = vmul.f32 %v1385, %v1385
  %v1520 = vmul.f32 %v1386, %v1386
  %v1521 = vmul.f32 %v1387, %v1387
  %v1522 = vmul.f32 %v1388, %v1388
  %v1523 = vmul.f32 %v1389, %v1389
  %v1524 = vmul.f32 %v1390, %v1390
  %v1525 = vmul.f32 %v1391, %v1391
  %v1526 = vmul.f32 %v1392, %v1392
  %v1527 = vmul.f32 %v1393, %v1393
  %v1528 = vmul.f32 %v1394, %v1394
  %v1529 = vmul.f32 %v1395, %v1395
  %v1530 = vmul.f32 %v1396, %v1396
  %v1531 = vmul.f32 %v1397, %v1397
  %v1532 = vmul.f32 %v1398, %v1398
  %v1533 = vmul.f32 %v1399, %v1399
  %v1534 = vmul.f32 %v1400, %v1400
  %v1535 = vmul.f32 %v1401, %v1401
  %v1536 = vmul.f32 %v1402, %v1402
  %v1537 = vmul.f32 %v1403, %v1403
  %v1538 = vmul.f32 %v1404, %v1404
  %v1539 = vmul.f32 %v1405, %v1405
  %v1540 = vmul.f32 %v1406, %v1406
  %v1541 = vmul.f32 %v1407, %v1407
  %v1542 = vmul.f32 %v1408, %v1408
  %v1543 = vmul.f32 %v1409, %v1409
  %v1544 = vmul.f32 %v1410, %v1410
  %v1545 = vmul.f32 %v1411, %v1411
  %v1546 = vmul.f32 %v1412, %v1412
  %v1547 = vmul.f32 %v1413, %v1413
  %v1548 = vmul.f32 %v1414, %v1414
  %v1549 = vmul.f32 %v1415, %v1415
  %v1550 = vmul.f32 %v1416, %v1416
  %v1551 = vmul.f32 %v1417, %v1417
  %v1552 = vmul.f32 %v1418, %v1418
  %v1553 = vmul.f32 %v1419, %v1419
  %v1554 = vmul.f32 %v1420, %v1420
  %v1555 = vmul.f32 %v1421, %v1421
  %v1556 = vmul.f32 %v1422, %v1422
  %v1557 = vmul.f32 %v1423, %v1423
  %v1558 = vmul.f32 %v1424, %v1424
  %v1559 = vmul.f32 %v1425, %v1425
  %v1560 = vmul.f32 %v1426, %v1426
  %v1561 = vmul.f32 %v1427, %v1427
  %v1562 = vmul.f32 %v1428, %v1428
  %v1563 = vmul.f32 %v1429, %v1429
  %v1564 = vmul.f32 %v1430, %v1430
  %v1565 = vmul.f32 %v1431, %v1431
  %v1566 = vmul.f32 %v1432, %v1432
  %v1567 = vmul.f32 %v1433, %v1433
  %v1568 = vmul.f32 %v1434, %v1434
  %v1569 = vmul.f32 %v1435, %v1435
  %v1570 = vmul.f32 %v1436, %v1436
  %v1571 = vmul.f32 %v1437, %v1437
  %v1572 = vmul.f32 %v1438, %v1438
  %v1573 = vmul.f32 %v1439, %v1439
  %v1574 = vmul.f32 %v1440, %v1440
  %v1575 = vmul.f32 %v1441, %v1441
  %v1576 = vmul.f32 %v1442, %v1442
  %v1577 = vmul.f32 %v1443, %v1443
  %v1578 = vmul.f32 %v1444, %v1444
  %v1579 = vmul.f32 %v1445, %v1445
  %v1580 = vmul.f32 %v1446, %v1446
  %v1581 = vadd.f32 %v1517, %v1518
  %v1582 = vadd.f32 %v1581, %v1519
  %v1583 = vadd.f32 %v1582, %v1520
  %v1584 = vadd.f32 %v1583, %v1521
  %v1585 = vadd.f32 %v1584, %v1522
  %v1586 = vadd.f32 %v1585, %v1523
  %v1587 = vadd.f32 %v1586, %v1524
  %v1588 = vadd.f32 %v1587, %v1525
  %v1589 = vadd.f32 %v1588, %v1526
  %v1590 = vadd.f32 %v1589, %v1527
  %v1591 = vadd.f32 %v1590, %v1528
  %v1592 = vadd.f32 %v1591, %v1529
  %v1593 = vadd.f32 %v1592, %v1530
  %v1594 = vadd.f32 %v1593, %v1531
  %v1595 = vadd.f32 %v1594, %v1532
  %v1596 = vadd.f32 %v1595, %v1533
  %v1597 = vadd.f32 %v1596, %v1534
  %v1598 = vadd.f32 %v1597, %v1535
  %v1599 = vadd.f32 %v1598, %v1536
  %v1600 = vadd.f32 %v1599, %v1537
  %v1601 = vadd.f32 %v1600, %v1538
  %v1602 = vadd.f32 %v1601, %v1539
  %v1603 = vadd.f32 %v1602, %v1540
  %v1604 = vadd.f32 %v1603, %v1541
  %v1605 = vadd.f32 %v1604, %v1542
  %v1606 = vadd.f32 %v1605, %v1543
  %v1607 = vadd.f32 %v1606, %v1544
  %v1608 = vadd.f32 %v1607, %v1545
  %v1609 = vadd.f32 %v1608, %v1546
  %v1610 = vadd.f32 %v1609, %v1547
  %v1611 = vadd.f32 %v1610, %v1548
  %v1612 = vadd.f32 %v1611, %v1549
  %v1613 = vadd.f32 %v1612, %v1550
  %v1614 = vadd.f32 %v1613, %v1551
  %v1615 = vadd.f32 %v1614, %v1552
  %v1616 = vadd.f32 %v1615, %v1553
  %v1617 = vadd.f32 %v1616, %v1554
  %v1618 = vadd.f32 %v1617, %v1555
  %v1619 = vadd.f32 %v1618, %v1556
  %v1620 = vadd.f32 %v1619, %v1557
  %v1621 = vadd.f32 %v1620, %v1558
  %v1622 = vadd.f32 %v1621, %v1559
  %v1623 = vadd.f32 %v1622, %v1560
  %v1624 = vadd.f32 %v1623, %v1561
  %v1625 = vadd.f32 %v1624, %v1562
  %v1626 = vadd.f32 %v1625, %v1563
  %v1627 = vadd.f32 %v1626, %v1564
  %v1628 = vadd.f32 %v1627, %v1565
  %v1629 = vadd.f32 %v1628, %v1566
  %v1630 = vadd.f32 %v1629, %v1567
  %v1631 = vadd.f32 %v1630, %v1568
  %v1632 = vadd.f32 %v1631, %v1569
  %v1633 = vadd.f32 %v1632, %v1570
  %v1634 = vadd.f32 %v1633, %v1571
  %v1635 = vadd.f32 %v1634, %v1572
  %v1636 = vadd.f32 %v1635, %v1573
  %v1637 = vadd.f32 %v1636, %v1574
  %v1638 = vadd.f32 %v1637, %v1575
  %v1639 = vadd.f32 %v1638, %v1576
  %v1640 = vadd.f32 %v1639, %v1577
  %v1641 = vadd.f32 %v1640, %v1578
  %v1642 = vadd.f32 %v1641, %v1579
  %v1643 = vadd.f32 %v1642, %v1580
  %v1644 = vrot.slane %v1643, 4
  %v1645 = vadd.f32 %v1643, %v1644
  %v1646 = vrot.slane %v1645, 2
  %v1647 = vadd.f32 %v1645, %v1646
  %v1648 = vrot.slane %v1647, 1
  %v1649 = vadd.f32 %v1647, %v1648
  %v1650 = vmul.f32 %v1649, 0.001953125
  %v1651 = vmul.f32 %v1516, %v1516
  %v1652 = vsub.f32 %v1650, %v1651
  %v1653 = vmax.f32 %v1652, 0.0
  %v1654 = vld [vmem:[%s3] sm:$0x1]
  %v1655 = vadd.f32 %v1653, 1e-05
  %v1656 = vrsqrt.pop %v1655
  %v1657 = vmul.f32 %v1654, %v1656
  %v1658 = vld [vmem:[%s4] sm:$0x1]
  %v1659 = vmul.f32 %v1516, %v1657
  %v1660 = vsub.f32 %v1658, %v1659
  %v1662 = vlaneseq
  %v1663 = vshrl.u32 %v1662, 7
  %v1664 = vsub.s32 0, %v1663
  %v1665 = vrot.slane %v1657, %v1664
  %v1667 = vmul.f32 %v1383, %v1665
  %v1668 = vmul.f32 %v1384, %v1665
  %v1669 = vmul.f32 %v1385, %v1665
  %v1670 = vmul.f32 %v1386, %v1665
  %v1671 = vmul.f32 %v1387, %v1665
  %v1672 = vmul.f32 %v1388, %v1665
  %v1673 = vmul.f32 %v1389, %v1665
  %v1674 = vmul.f32 %v1390, %v1665
  %v1675 = vmul.f32 %v1391, %v1665
  %v1676 = vmul.f32 %v1392, %v1665
  %v1677 = vmul.f32 %v1393, %v1665
  %v1678 = vmul.f32 %v1394, %v1665
  %v1679 = vmul.f32 %v1395, %v1665
  %v1680 = vmul.f32 %v1396, %v1665
  %v1681 = vmul.f32 %v1397, %v1665
  %v1682 = vmul.f32 %v1398, %v1665
  %v1683 = vmul.f32 %v1399, %v1665
  %v1684 = vmul.f32 %v1400, %v1665
  %v1685 = vmul.f32 %v1401, %v1665
  %v1686 = vmul.f32 %v1402, %v1665
  %v1687 = vmul.f32 %v1403, %v1665
  %v1688 = vmul.f32 %v1404, %v1665
  %v1689 = vmul.f32 %v1405, %v1665
  %v1690 = vmul.f32 %v1406, %v1665
  %v1691 = vmul.f32 %v1407, %v1665
  %v1692 = vmul.f32 %v1408, %v1665
  %v1693 = vmul.f32 %v1409, %v1665
  %v1694 = vmul.f32 %v1410, %v1665
  %v1695 = vmul.f32 %v1411, %v1665
  %v1696 = vmul.f32 %v1412, %v1665
  %v1697 = vmul.f32 %v1413, %v1665
  %v1698 = vmul.f32 %v1414, %v1665
  %v1699 = vmul.f32 %v1415, %v1665
  %v1700 = vmul.f32 %v1416, %v1665
  %v1701 = vmul.f32 %v1417, %v1665
  %v1702 = vmul.f32 %v1418, %v1665
  %v1703 = vmul.f32 %v1419, %v1665
  %v1704 = vmul.f32 %v1420, %v1665
  %v1705 = vmul.f32 %v1421, %v1665
  %v1706 = vmul.f32 %v1422, %v1665
  %v1707 = vmul.f32 %v1423, %v1665
  %v1708 = vmul.f32 %v1424, %v1665
  %v1709 = vmul.f32 %v1425, %v1665
  %v1710 = vmul.f32 %v1426, %v1665
  %v1711 = vmul.f32 %v1427, %v1665
  %v1712 = vmul.f32 %v1428, %v1665
  %v1713 = vmul.f32 %v1429, %v1665
  %v1714 = vmul.f32 %v1430, %v1665
  %v1715 = vmul.f32 %v1431, %v1665
  %v1716 = vmul.f32 %v1432, %v1665
  %v1717 = vmul.f32 %v1433, %v1665
  %v1718 = vmul.f32 %v1434, %v1665
  %v1719 = vmul.f32 %v1435, %v1665
  %v1720 = vmul.f32 %v1436, %v1665
  %v1721 = vmul.f32 %v1437, %v1665
  %v1722 = vmul.f32 %v1438, %v1665
  %v1723 = vmul.f32 %v1439, %v1665
  %v1724 = vmul.f32 %v1440, %v1665
  %v1725 = vmul.f32 %v1441, %v1665
  %v1726 = vmul.f32 %v1442, %v1665
  %v1727 = vmul.f32 %v1443, %v1665
  %v1728 = vmul.f32 %v1444, %v1665
  %v1729 = vmul.f32 %v1445, %v1665
  %v1730 = vmul.f32 %v1446, %v1665
  %v1732 = vlaneseq
  %v1733 = vshrl.u32 %v1732, 7
  %v1734 = vsub.s32 0, %v1733
  %v1735 = vrot.slane %v1660, %v1734
  %v1737 = vadd.f32 %v1667, %v1735
  %v1738 = vadd.f32 %v1668, %v1735
  %v1739 = vadd.f32 %v1669, %v1735
  %v1740 = vadd.f32 %v1670, %v1735
  %v1741 = vadd.f32 %v1671, %v1735
  %v1742 = vadd.f32 %v1672, %v1735
  %v1743 = vadd.f32 %v1673, %v1735
  %v1744 = vadd.f32 %v1674, %v1735
  %v1745 = vadd.f32 %v1675, %v1735
  %v1746 = vadd.f32 %v1676, %v1735
  %v1747 = vadd.f32 %v1677, %v1735
  %v1748 = vadd.f32 %v1678, %v1735
  %v1749 = vadd.f32 %v1679, %v1735
  %v1750 = vadd.f32 %v1680, %v1735
  %v1751 = vadd.f32 %v1681, %v1735
  %v1752 = vadd.f32 %v1682, %v1735
  %v1753 = vadd.f32 %v1683, %v1735
  %v1754 = vadd.f32 %v1684, %v1735
  %v1755 = vadd.f32 %v1685, %v1735
  %v1756 = vadd.f32 %v1686, %v1735
  %v1757 = vadd.f32 %v1687, %v1735
  %v1758 = vadd.f32 %v1688, %v1735
  %v1759 = vadd.f32 %v1689, %v1735
  %v1760 = vadd.f32 %v1690, %v1735
  %v1761 = vadd.f32 %v1691, %v1735
  %v1762 = vadd.f32 %v1692, %v1735
  %v1763 = vadd.f32 %v1693, %v1735
  %v1764 = vadd.f32 %v1694, %v1735
  %v1765 = vadd.f32 %v1695, %v1735
  %v1766 = vadd.f32 %v1696, %v1735
  %v1767 = vadd.f32 %v1697, %v1735
  %v1768 = vadd.f32 %v1698, %v1735
  %v1769 = vadd.f32 %v1699, %v1735
  %v1770 = vadd.f32 %v1700, %v1735
  %v1771 = vadd.f32 %v1701, %v1735
  %v1772 = vadd.f32 %v1702, %v1735
  %v1773 = vadd.f32 %v1703, %v1735
  %v1774 = vadd.f32 %v1704, %v1735
  %v1775 = vadd.f32 %v1705, %v1735
  %v1776 = vadd.f32 %v1706, %v1735
  %v1777 = vadd.f32 %v1707, %v1735
  %v1778 = vadd.f32 %v1708, %v1735
  %v1779 = vadd.f32 %v1709, %v1735
  %v1780 = vadd.f32 %v1710, %v1735
  %v1781 = vadd.f32 %v1711, %v1735
  %v1782 = vadd.f32 %v1712, %v1735
  %v1783 = vadd.f32 %v1713, %v1735
  %v1784 = vadd.f32 %v1714, %v1735
  %v1785 = vadd.f32 %v1715, %v1735
  %v1786 = vadd.f32 %v1716, %v1735
  %v1787 = vadd.f32 %v1717, %v1735
  %v1788 = vadd.f32 %v1718, %v1735
  %v1789 = vadd.f32 %v1719, %v1735
  %v1790 = vadd.f32 %v1720, %v1735
  %v1791 = vadd.f32 %v1721, %v1735
  %v1792 = vadd.f32 %v1722, %v1735
  %v1793 = vadd.f32 %v1723, %v1735
  %v1794 = vadd.f32 %v1724, %v1735
  %v1795 = vadd.f32 %v1725, %v1735
  %v1796 = vadd.f32 %v1726, %v1735
  %v1797 = vadd.f32 %v1727, %v1735
  %v1798 = vadd.f32 %v1728, %v1735
  %v1799 = vadd.f32 %v1729, %v1735
  %v1800 = vadd.f32 %v1730, %v1735
  %1801 = vst [vmem:[%s5] sm:$0xff] %v1737
  %1802 = vst [vmem:[%s5 + $0x8] sm:$0xff] %v1738
  %1803 = vst [vmem:[%s5 + $0x10] sm:$0xff] %v1739
  %1804 = vst [vmem:[%s5 + $0x18] sm:$0xff] %v1740
  %1805 = vst [vmem:[%s5 + $0x20] sm:$0xff] %v1741
  %1806 = vst [vmem:[%s5 + $0x28] sm:$0xff] %v1742
  %1807 = vst [vmem:[%s5 + $0x30] sm:$0xff] %v1743
  %1808 = vst [vmem:[%s5 + $0x38] sm:$0xff] %v1744
  %1809 = vst [vmem:[%s5 + $0x40] sm:$0xff] %v1745
  %1810 = vst [vmem:[%s5 + $0x48] sm:$0xff] %v1746
  %1811 = vst [vmem:[%s5 + $0x50] sm:$0xff] %v1747
  %1812 = vst [vmem:[%s5 + $0x58] sm:$0xff] %v1748
  %1813 = vst [vmem:[%s5 + $0x60] sm:$0xff] %v1749
  %1814 = vst [vmem:[%s5 + $0x68] sm:$0xff] %v1750
  %1815 = vst [vmem:[%s5 + $0x70] sm:$0xff] %v1751
  %1816 = vst [vmem:[%s5 + $0x78] sm:$0xff] %v1752
  %1817 = vst [vmem:[%s5 + $0x80] sm:$0xff] %v1753
  %1818 = vst [vmem:[%s5 + $0x88] sm:$0xff] %v1754
  %1819 = vst [vmem:[%s5 + $0x90] sm:$0xff] %v1755
  %1820 = vst [vmem:[%s5 + $0x98] sm:$0xff] %v1756
  %1821 = vst [vmem:[%s5 + $0xa0] sm:$0xff] %v1757
  %1822 = vst [vmem:[%s5 + $0xa8] sm:$0xff] %v1758
  %1823 = vst [vmem:[%s5 + $0xb0] sm:$0xff] %v1759
  %1824 = vst [vmem:[%s5 + $0xb8] sm:$0xff] %v1760
  %1825 = vst [vmem:[%s5 + $0xc0] sm:$0xff] %v1761
  %1826 = vst [vmem:[%s5 + $0xc8] sm:$0xff] %v1762
  %1827 = vst [vmem:[%s5 + $0xd0] sm:$0xff] %v1763
  %1828 = vst [vmem:[%s5 + $0xd8] sm:$0xff] %v1764
  %1829 = vst [vmem:[%s5 + $0xe0] sm:$0xff] %v1765
  %1830 = vst [vmem:[%s5 + $0xe8] sm:$0xff] %v1766
  %1831 = vst [vmem:[%s5 + $0xf0] sm:$0xff] %v1767
  %1832 = vst [vmem:[%s5 + $0xf8] sm:$0xff] %v1768
  %1833 = vst [vmem:[%s5 + $0x100] sm:$0xff] %v1769
  %1834 = vst [vmem:[%s5 + $0x108] sm:$0xff] %v1770
  %1835 = vst [vmem:[%s5 + $0x110] sm:$0xff] %v1771
  %1836 = vst [vmem:[%s5 + $0x118] sm:$0xff] %v1772
  %1837 = vst [vmem:[%s5 + $0x120] sm:$0xff] %v1773
  %1838 = vst [vmem:[%s5 + $0x128] sm:$0xff] %v1774
  %1839 = vst [vmem:[%s5 + $0x130] sm:$0xff] %v1775
  %1840 = vst [vmem:[%s5 + $0x138] sm:$0xff] %v1776
  %1841 = vst [vmem:[%s5 + $0x140] sm:$0xff] %v1777
  %1842 = vst [vmem:[%s5 + $0x148] sm:$0xff] %v1778
  %1843 = vst [vmem:[%s5 + $0x150] sm:$0xff] %v1779
  %1844 = vst [vmem:[%s5 + $0x158] sm:$0xff] %v1780
  %1845 = vst [vmem:[%s5 + $0x160] sm:$0xff] %v1781
  %1846 = vst [vmem:[%s5 + $0x168] sm:$0xff] %v1782
  %1847 = vst [vmem:[%s5 + $0x170] sm:$0xff] %v1783
  %1848 = vst [vmem:[%s5 + $0x178] sm:$0xff] %v1784
  %1849 = vst [vmem:[%s5 + $0x180] sm:$0xff] %v1785
  %1850 = vst [vmem:[%s5 + $0x188] sm:$0xff] %v1786
  %1851 = vst [vmem:[%s5 + $0x190] sm:$0xff] %v1787
  %1852 = vst [vmem:[%s5 + $0x198] sm:$0xff] %v1788
  %1853 = vst [vmem:[%s5 + $0x1a0] sm:$0xff] %v1789
  %1854 = vst [vmem:[%s5 + $0x1a8] sm:$0xff] %v1790
  %1855 = vst [vmem:[%s5 + $0x1b0] sm:$0xff] %v1791
  %1856 = vst [vmem:[%s5 + $0x1b8] sm:$0xff] %v1792
  %1857 = vst [vmem:[%s5 + $0x1c0] sm:$0xff] %v1793
  %1858 = vst [vmem:[%s5 + $0x1c8] sm:$0xff] %v1794
  %1859 = vst [vmem:[%s5 + $0x1d0] sm:$0xff] %v1795
  %1860 = vst [vmem:[%s5 + $0x1d8] sm:$0xff] %v1796
  %1861 = vst [vmem:[%s5 + $0x1e0] sm:$0xff] %v1797
  %1862 = vst [vmem:[%s5 + $0x1e8] sm:$0xff] %v1798
  %1863 = vst [vmem:[%s5 + $0x1f0] sm:$0xff] %v1799
  %1864 = vst [vmem:[%s5 + $0x1f8] sm:$0xff] %v1800
  // Predicated region
  $region22: #{mini_conv_forward.4} parent=0 // pred_check
    _
  $region23: #{mini_conv_forward.4} parent=0 // pred_check_branch
    %1866 = sbr.rel (0) target = $region25
  $region24: #{mini_conv_forward.4} parent=0 // pred_region
    _
  $region25: #{mini_conv_forward.4} parent=0 // pred_fallthru
    _
  // Predicated region
  $region26: #{mini_conv_forward.4} parent=0 // pred_check
    _
  $region27: #{mini_conv_forward.4} parent=0 // pred_check_branch
    %1868 = sbr.rel (0) target = $region29
  $region28: #{mini_conv_forward.4} parent=0 // pred_region
    _
  $region29: #{mini_conv_forward.4} parent=0 // pred_fallthru
    _

// kernel: mini_conv_forward.5
$region0: #{mini_conv_forward.5}
  #allocation0 [shape = 'u32[]', space=smem, size = 0x4, offset = 0x4, fixed_abs, tag = 'smem constant byte address 0x4 - core index']
  #allocation1 [shape = 'u32[144,128]{1,0:T(1,128)}', space=vmem, size = 0x12000, scoped, tag = 'internal scratch']
  %s0 = inlined_call_operand.vmem [shape: bf16[128,256], index: 0, kind: input, shape index: {}]
  %s1 = inlined_call_operand.vmem [shape: bf16[256,512], index: 1, kind: input, shape index: {}]
  %s2 = inlined_call_operand.vmem [shape: f32[1,128], index: 2, kind: input, shape index: {}]
  %s3 = inlined_call_operand.vmem [shape: f32[1,128], index: 3, kind: input, shape index: {}]
  %s4 = inlined_call_operand.vmem [shape: f32[1,128], index: 4, kind: input, shape index: {}]
  %s5 = inlined_call_operand.vmem [shape: f32[128,128], index: 5, kind: output, shape index: {}]
  %s6 = sld [smem:[#allocation0]]
  $region30: #{mini_conv_forward.5} parent=0
    _
  %s8 = ssub.s32 1, %s6
  %s9 = scalar_select 0, %s8, %s6
  // Predicated region
  $region2: #{mini_conv_forward.5} parent=0 // pred_check
    _
  $region3: #{mini_conv_forward.5} parent=0 // pred_check_branch
    %11 = sbr.rel (0) target = $region5
  $region4: #{mini_conv_forward.5} parent=0 // pred_region
    _
  $region5: #{mini_conv_forward.5} parent=0 // pred_fallthru
    _
  // Predicated region
  $region6: #{mini_conv_forward.5} parent=0 // pred_check
    _
  $region7: #{mini_conv_forward.5} parent=0 // pred_check_branch
    %13 = sbr.rel (0) target = $region9
  $region8: #{mini_conv_forward.5} parent=0 // pred_region
    _
  $region9: #{mini_conv_forward.5} parent=0 // pred_fallthru
    _
  // Predicated region
  $region10: #{mini_conv_forward.5} parent=0 // pred_check
    _
  $region11: #{mini_conv_forward.5} parent=0 // pred_check_branch
    %15 = sbr.rel (0) target = $region13
  $region12: #{mini_conv_forward.5} parent=0 // pred_region
    _
  $region13: #{mini_conv_forward.5} parent=0 // pred_fallthru
    _
  // Predicated region
  $region14: #{mini_conv_forward.5} parent=0 // pred_check
    _
  $region15: #{mini_conv_forward.5} parent=0 // pred_check_branch
    %17 = sbr.rel (0) target = $region17
  $region16: #{mini_conv_forward.5} parent=0 // pred_region
    _
  $region17: #{mini_conv_forward.5} parent=0 // pred_fallthru
    _
  // Predicated region
  $region18: #{mini_conv_forward.5} parent=0 // pred_check
    _
  $region19: #{mini_conv_forward.5} parent=0 // pred_check_branch
    %19 = sbr.rel (0) target = $region21
  $region20: #{mini_conv_forward.5} parent=0 // pred_region
    _
  $region21: #{mini_conv_forward.5} parent=0 // pred_fallthru
    _
  %v20 = vld [vmem:[%s0] sm:$0xff]
  %v21 = vld [vmem:[%s0 + $0x8] sm:$0xff]
  %v22 = vld [vmem:[%s0 + $0x10] sm:$0xff]
  %v23 = vld [vmem:[%s0 + $0x18] sm:$0xff]
  %v24 = vld [vmem:[%s0 + $0x20] sm:$0xff]
  %v25 = vld [vmem:[%s0 + $0x28] sm:$0xff]
  %v26 = vld [vmem:[%s0 + $0x30] sm:$0xff]
  %v27 = vld [vmem:[%s0 + $0x38] sm:$0xff]
  %v28 = vld [vmem:[%s0 + $0x40] sm:$0xff]
  %v29 = vld [vmem:[%s0 + $0x48] sm:$0xff]
  %v30 = vld [vmem:[%s0 + $0x50] sm:$0xff]
  %v31 = vld [vmem:[%s0 + $0x58] sm:$0xff]
  %v32 = vld [vmem:[%s0 + $0x60] sm:$0xff]
  %v33 = vld [vmem:[%s0 + $0x68] sm:$0xff]
  %v34 = vld [vmem:[%s0 + $0x70] sm:$0xff]
  %v35 = vld [vmem:[%s0 + $0x78] sm:$0xff]
  %v36 = vld [vmem:[%s1] sm:$0xff]
  %v37 = vld [vmem:[%s1 + $0x8] sm:$0xff]
  %v38 = vld [vmem:[%s1 + $0x10] sm:$0xff]
  %v39 = vld [vmem:[%s1 + $0x18] sm:$0xff]
  %v40 = vld [vmem:[%s1 + $0x20] sm:$0xff]
  %v41 = vld [vmem:[%s1 + $0x28] sm:$0xff]
  %v42 = vld [vmem:[%s1 + $0x30] sm:$0xff]
  %v43 = vld [vmem:[%s1 + $0x38] sm:$0xff]
  %v44 = vld [vmem:[%s1 + $0x40] sm:$0xff]
  %v45 = vld [vmem:[%s1 + $0x48] sm:$0xff]
  %v46 = vld [vmem:[%s1 + $0x50] sm:$0xff]
  %v47 = vld [vmem:[%s1 + $0x58] sm:$0xff]
  %v48 = vld [vmem:[%s1 + $0x60] sm:$0xff]
  %v49 = vld [vmem:[%s1 + $0x68] sm:$0xff]
  %v50 = vld [vmem:[%s1 + $0x70] sm:$0xff]
  %v51 = vld [vmem:[%s1 + $0x78] sm:$0xff]
  %v52 = vld [vmem:[%s1 + $0x80] sm:$0xff]
  %v53 = vld [vmem:[%s1 + $0x88] sm:$0xff]
  %v54 = vld [vmem:[%s1 + $0x90] sm:$0xff]
  %v55 = vld [vmem:[%s1 + $0x98] sm:$0xff]
  %v56 = vld [vmem:[%s1 + $0xa0] sm:$0xff]
  %v57 = vld [vmem:[%s1 + $0xa8] sm:$0xff]
  %v58 = vld [vmem:[%s1 + $0xb0] sm:$0xff]
  %v59 = vld [vmem:[%s1 + $0xb8] sm:$0xff]
  %v60 = vld [vmem:[%s1 + $0xc0] sm:$0xff]
  %v61 = vld [vmem:[%s1 + $0xc8] sm:$0xff]
  %v62 = vld [vmem:[%s1 + $0xd0] sm:$0xff]
  %v63 = vld [vmem:[%s1 + $0xd8] sm:$0xff]
  %v64 = vld [vmem:[%s1 + $0xe0] sm:$0xff]
  %v65 = vld [vmem:[%s1 + $0xe8] sm:$0xff]
  %v66 = vld [vmem:[%s1 + $0xf0] sm:$0xff]
  %v67 = vld [vmem:[%s1 + $0xf8] sm:$0xff]
  %v68 = vld [vmem:[%s1 + $0x100] sm:$0xff]
  %v69 = vld [vmem:[%s1 + $0x108] sm:$0xff]
  %v70 = vld [vmem:[%s1 + $0x110] sm:$0xff]
  %v71 = vld [vmem:[%s1 + $0x118] sm:$0xff]
  %v72 = vld [vmem:[%s1 + $0x120] sm:$0xff]
  %v73 = vld [vmem:[%s1 + $0x128] sm:$0xff]
  %v74 = vld [vmem:[%s1 + $0x130] sm:$0xff]
  %v75 = vld [vmem:[%s1 + $0x138] sm:$0xff]
  %v76 = vld [vmem:[%s1 + $0x140] sm:$0xff]
  %v77 = vld [vmem:[%s1 + $0x148] sm:$0xff]
  %v78 = vld [vmem:[%s1 + $0x150] sm:$0xff]
  %v79 = vld [vmem:[%s1 + $0x158] sm:$0xff]
  %v80 = vld [vmem:[%s1 + $0x160] sm:$0xff]
  %v81 = vld [vmem:[%s1 + $0x168] sm:$0xff]
  %v82 = vld [vmem:[%s1 + $0x170] sm:$0xff]
  %v83 = vld [vmem:[%s1 + $0x178] sm:$0xff]
  %v84 = vld [vmem:[%s1 + $0x180] sm:$0xff]
  %v85 = vld [vmem:[%s1 + $0x188] sm:$0xff]
  %v86 = vld [vmem:[%s1 + $0x190] sm:$0xff]
  %v87 = vld [vmem:[%s1 + $0x198] sm:$0xff]
  %v88 = vld [vmem:[%s1 + $0x1a0] sm:$0xff]
  %v89 = vld [vmem:[%s1 + $0x1a8] sm:$0xff]
  %v90 = vld [vmem:[%s1 + $0x1b0] sm:$0xff]
  %v91 = vld [vmem:[%s1 + $0x1b8] sm:$0xff]
  %v92 = vld [vmem:[%s1 + $0x1c0] sm:$0xff]
  %v93 = vld [vmem:[%s1 + $0x1c8] sm:$0xff]
  %v94 = vld [vmem:[%s1 + $0x1d0] sm:$0xff]
  %v95 = vld [vmem:[%s1 + $0x1d8] sm:$0xff]
  %v96 = vld [vmem:[%s1 + $0x1e0] sm:$0xff]
  %v97 = vld [vmem:[%s1 + $0x1e8] sm:$0xff]
  %v98 = vld [vmem:[%s1 + $0x1f0] sm:$0xff]
  %v99 = vld [vmem:[%s1 + $0x1f8] sm:$0xff]
  %v116 = vunpack.c.l.b16 %v20
  %v117 = vunpack.c.h.b16 %v20
  %v118 = vunpack.c.l.b16 %v21
  %v119 = vunpack.c.h.b16 %v21
  %v120 = vunpack.c.l.b16 %v22
  %v121 = vunpack.c.h.b16 %v22
  %v122 = vunpack.c.l.b16 %v23
  %v123 = vunpack.c.h.b16 %v23
  %v124 = vunpack.c.l.b16 %v24
  %v125 = vunpack.c.h.b16 %v24
  %v126 = vunpack.c.l.b16 %v25
  %v127 = vunpack.c.h.b16 %v25
  %v128 = vunpack.c.l.b16 %v26
  %v129 = vunpack.c.h.b16 %v26
  %v130 = vunpack.c.l.b16 %v27
  %v131 = vunpack.c.h.b16 %v27
  %v132 = vunpack.c.l.b16 %v28
  %v133 = vunpack.c.h.b16 %v28
  %v134 = vunpack.c.l.b16 %v29
  %v135 = vunpack.c.h.b16 %v29
  %v136 = vunpack.c.l.b16 %v30
  %v137 = vunpack.c.h.b16 %v30
  %v138 = vunpack.c.l.b16 %v31
  %v139 = vunpack.c.h.b16 %v31
  %v140 = vunpack.c.l.b16 %v32
  %v141 = vunpack.c.h.b16 %v32
  %v142 = vunpack.c.l.b16 %v33
  %v143 = vunpack.c.h.b16 %v33
  %v144 = vunpack.c.l.b16 %v34
  %v145 = vunpack.c.h.b16 %v34
  %v146 = vunpack.c.l.b16 %v35
  %v147 = vunpack.c.h.b16 %v35
  %v148 = vpack.c.b16 %v118, %v116
  %v149 = vpack.c.b16 %v119, %v117
  %v150 = vpack.c.b16 %v122, %v120
  %v151 = vpack.c.b16 %v123, %v121
  %v152 = vpack.c.b16 %v126, %v124
  %v153 = vpack.c.b16 %v127, %v125
  %v154 = vpack.c.b16 %v130, %v128
  %v155 = vpack.c.b16 %v131, %v129
  %v156 = vpack.c.b16 %v134, %v132
  %v157 = vpack.c.b16 %v135, %v133
  %v158 = vpack.c.b16 %v138, %v136
  %v159 = vpack.c.b16 %v139, %v137
  %v160 = vpack.c.b16 %v142, %v140
  %v161 = vpack.c.b16 %v143, %v141
  %v162 = vpack.c.b16 %v146, %v144
  %v163 = vpack.c.b16 %v147, %v145
  %v244 = vunpack.c.l.b16 %v36
  %v245 = vunpack.c.h.b16 %v36
  %v246 = vunpack.c.l.b16 %v37
  %v247 = vunpack.c.h.b16 %v37
  %v248 = vunpack.c.l.b16 %v38
  %v249 = vunpack.c.h.b16 %v38
  %v250 = vunpack.c.l.b16 %v39
  %v251 = vunpack.c.h.b16 %v39
  %v252 = vunpack.c.l.b16 %v40
  %v253 = vunpack.c.h.b16 %v40
  %v254 = vunpack.c.l.b16 %v41
  %v255 = vunpack.c.h.b16 %v41
  %v256 = vunpack.c.l.b16 %v42
  %v257 = vunpack.c.h.b16 %v42
  %v258 = vunpack.c.l.b16 %v43
  %v259 = vunpack.c.h.b16 %v43
  %v260 = vunpack.c.l.b16 %v44
  %v261 = vunpack.c.h.b16 %v44
  %v262 = vunpack.c.l.b16 %v45
  %v263 = vunpack.c.h.b16 %v45
  %v264 = vunpack.c.l.b16 %v46
  %v265 = vunpack.c.h.b16 %v46
  %v266 = vunpack.c.l.b16 %v47
  %v267 = vunpack.c.h.b16 %v47
  %v268 = vunpack.c.l.b16 %v48
  %v269 = vunpack.c.h.b16 %v48
  %v270 = vunpack.c.l.b16 %v49
  %v271 = vunpack.c.h.b16 %v49
  %v272 = vunpack.c.l.b16 %v50
  %v273 = vunpack.c.h.b16 %v50
  %v274 = vunpack.c.l.b16 %v51
  %v275 = vunpack.c.h.b16 %v51
  %v276 = vunpack.c.l.b16 %v52
  %v277 = vunpack.c.h.b16 %v52
  %v278 = vunpack.c.l.b16 %v53
  %v279 = vunpack.c.h.b16 %v53
  %v280 = vunpack.c.l.b16 %v54
  %v281 = vunpack.c.h.b16 %v54
  %v282 = vunpack.c.l.b16 %v55
  %v283 = vunpack.c.h.b16 %v55
  %v284 = vunpack.c.l.b16 %v56
  %v285 = vunpack.c.h.b16 %v56
  %v286 = vunpack.c.l.b16 %v57
  %v287 = vunpack.c.h.b16 %v57
  %v288 = vunpack.c.l.b16 %v58
  %v289 = vunpack.c.h.b16 %v58
  %v290 = vunpack.c.l.b16 %v59
  %v291 = vunpack.c.h.b16 %v59
  %v292 = vunpack.c.l.b16 %v60
  %v293 = vunpack.c.h.b16 %v60
  %v294 = vunpack.c.l.b16 %v61
  %v295 = vunpack.c.h.b16 %v61
  %v296 = vunpack.c.l.b16 %v62
  %v297 = vunpack.c.h.b16 %v62
  %v298 = vunpack.c.l.b16 %v63
  %v299 = vunpack.c.h.b16 %v63
  %v300 = vunpack.c.l.b16 %v64
  %v301 = vunpack.c.h.b16 %v64
  %v302 = vunpack.c.l.b16 %v65
  %v303 = vunpack.c.h.b16 %v65
  %v304 = vunpack.c.l.b16 %v66
  %v305 = vunpack.c.h.b16 %v66
  %v306 = vunpack.c.l.b16 %v67
  %v307 = vunpack.c.h.b16 %v67
  %v308 = vunpack.c.l.b16 %v68
  %v309 = vunpack.c.h.b16 %v68
  %v310 = vunpack.c.l.b16 %v69
  %v311 = vunpack.c.h.b16 %v69
  %v312 = vunpack.c.l.b16 %v70
  %v313 = vunpack.c.h.b16 %v70
  %v314 = vunpack.c.l.b16 %v71
  %v315 = vunpack.c.h.b16 %v71
  %v316 = vunpack.c.l.b16 %v72
  %v317 = vunpack.c.h.b16 %v72
  %v318 = vunpack.c.l.b16 %v73
  %v319 = vunpack.c.h.b16 %v73
  %v320 = vunpack.c.l.b16 %v74
  %v321 = vunpack.c.h.b16 %v74
  %v322 = vunpack.c.l.b16 %v75
  %v323 = vunpack.c.h.b16 %v75
  %v324 = vunpack.c.l.b16 %v76
  %v325 = vunpack.c.h.b16 %v76
  %v326 = vunpack.c.l.b16 %v77
  %v327 = vunpack.c.h.b16 %v77
  %v328 = vunpack.c.l.b16 %v78
  %v329 = vunpack.c.h.b16 %v78
  %v330 = vunpack.c.l.b16 %v79
  %v331 = vunpack.c.h.b16 %v79
  %v332 = vunpack.c.l.b16 %v80
  %v333 = vunpack.c.h.b16 %v80
  %v334 = vunpack.c.l.b16 %v81
  %v335 = vunpack.c.h.b16 %v81
  %v336 = vunpack.c.l.b16 %v82
  %v337 = vunpack.c.h.b16 %v82
  %v338 = vunpack.c.l.b16 %v83
  %v339 = vunpack.c.h.b16 %v83
  %v340 = vunpack.c.l.b16 %v84
  %v341 = vunpack.c.h.b16 %v84
  %v342 = vunpack.c.l.b16 %v85
  %v343 = vunpack.c.h.b16 %v85
  %v344 = vunpack.c.l.b16 %v86
  %v345 = vunpack.c.h.b16 %v86
  %v346 = vunpack.c.l.b16 %v87
  %v347 = vunpack.c.h.b16 %v87
  %v348 = vunpack.c.l.b16 %v88
  %v349 = vunpack.c.h.b16 %v88
  %v350 = vunpack.c.l.b16 %v89
  %v351 = vunpack.c.h.b16 %v89
  %v352 = vunpack.c.l.b16 %v90
  %v353 = vunpack.c.h.b16 %v90
  %v354 = vunpack.c.l.b16 %v91
  %v355 = vunpack.c.h.b16 %v91
  %v356 = vunpack.c.l.b16 %v92
  %v357 = vunpack.c.h.b16 %v92
  %v358 = vunpack.c.l.b16 %v93
  %v359 = vunpack.c.h.b16 %v93
  %v360 = vunpack.c.l.b16 %v94
  %v361 = vunpack.c.h.b16 %v94
  %v362 = vunpack.c.l.b16 %v95
  %v363 = vunpack.c.h.b16 %v95
  %v364 = vunpack.c.l.b16 %v96
  %v365 = vunpack.c.h.b16 %v96
  %v366 = vunpack.c.l.b16 %v97
  %v367 = vunpack.c.h.b16 %v97
  %v368 = vunpack.c.l.b16 %v98
  %v369 = vunpack.c.h.b16 %v98
  %v370 = vunpack.c.l.b16 %v99
  %v371 = vunpack.c.h.b16 %v99
  %v372 = vpack.c.b16 %v248, %v244
  %v373 = vpack.c.b16 %v249, %v245
  %v374 = vpack.c.b16 %v250, %v246
  %v375 = vpack.c.b16 %v251, %v247
  %v376 = vpack.c.b16 %v256, %v252
  %v377 = vpack.c.b16 %v257, %v253
  %v378 = vpack.c.b16 %v258, %v254
  %v379 = vpack.c.b16 %v259, %v255
  %v380 = vpack.c.b16 %v264, %v260
  %v381 = vpack.c.b16 %v265, %v261
  %v382 = vpack.c.b16 %v266, %v262
  %v383 = vpack.c.b16 %v267, %v263
  %v384 = vpack.c.b16 %v272, %v268
  %v385 = vpack.c.b16 %v273, %v269
  %v386 = vpack.c.b16 %v274, %v270
  %v387 = vpack.c.b16 %v275, %v271
  %v388 = vpack.c.b16 %v280, %v276
  %v389 = vpack.c.b16 %v281, %v277
  %v390 = vpack.c.b16 %v282, %v278
  %v391 = vpack.c.b16 %v283, %v279
  %v392 = vpack.c.b16 %v288, %v284
  %v393 = vpack.c.b16 %v289, %v285
  %v394 = vpack.c.b16 %v290, %v286
  %v395 = vpack.c.b16 %v291, %v287
  %v396 = vpack.c.b16 %v296, %v292
  %v397 = vpack.c.b16 %v297, %v293
  %v398 = vpack.c.b16 %v298, %v294
  %v399 = vpack.c.b16 %v299, %v295
  %v400 = vpack.c.b16 %v304, %v300
  %v401 = vpack.c.b16 %v305, %v301
  %v402 = vpack.c.b16 %v306, %v302
  %v403 = vpack.c.b16 %v307, %v303
  %v404 = vpack.c.b16 %v312, %v308
  %v405 = vpack.c.b16 %v313, %v309
  %v406 = vpack.c.b16 %v314, %v310
  %v407 = vpack.c.b16 %v315, %v311
  %v408 = vpack.c.b16 %v320, %v316
  %v409 = vpack.c.b16 %v321, %v317
  %v410 = vpack.c.b16 %v322, %v318
  %v411 = vpack.c.b16 %v323, %v319
  %v412 = vpack.c.b16 %v328, %v324
  %v413 = vpack.c.b16 %v329, %v325
  %v414 = vpack.c.b16 %v330, %v326
  %v415 = vpack.c.b16 %v331, %v327
  %v416 = vpack.c.b16 %v336, %v332
  %v417 = vpack.c.b16 %v337, %v333
  %v418 = vpack.c.b16 %v338, %v334
  %v419 = vpack.c.b16 %v339, %v335
  %v420 = vpack.c.b16 %v344, %v340
  %v421 = vpack.c.b16 %v345, %v341
  %v422 = vpack.c.b16 %v346, %v342
  %v423 = vpack.c.b16 %v347, %v343
  %v424 = vpack.c.b16 %v352, %v348
  %v425 = vpack.c.b16 %v353, %v349
  %v426 = vpack.c.b16 %v354, %v350
  %v427 = vpack.c.b16 %v355, %v351
  %v428 = vpack.c.b16 %v360, %v356
  %v429 = vpack.c.b16 %v361, %v357
  %v430 = vpack.c.b16 %v362, %v358
  %v431 = vpack.c.b16 %v363, %v359
  %v432 = vpack.c.b16 %v368, %v364
  %v433 = vpack.c.b16 %v369, %v365
  %v434 = vpack.c.b16 %v370, %v366
  %v435 = vpack.c.b16 %v371, %v367
  %500 = vmatprep.subr.bf16.mxu0 %v373
  %501 = vmatpush1.bf16.msra.mxu0 %v372
  %502 = vmatprep.subr.bf16.mxu0 %v377
  %503 = vmatpush1.bf16.msra.mxu0 %v376
  %504 = vmatprep.subr.bf16.mxu0 %v381
  %505 = vmatpush1.bf16.msra.mxu0 %v380
  %506 = vmatprep.subr.bf16.mxu0 %v385
  %507 = vmatpush1.bf16.msra.mxu0 %v384
  %508 = vmatprep.subr.bf16.mxu0 %v389
  %509 = vmatpush1.bf16.msra.mxu0 %v388
  %510 = vmatprep.subr.bf16.mxu0 %v393
  %511 = vmatpush1.bf16.msra.mxu0 %v392
  %512 = vmatprep.subr.bf16.mxu0 %v397
  %513 = vmatpush1.bf16.msra.mxu0 %v396
  %514 = vmatprep.subr.bf16.mxu0 %v401
  %515 = vmatpush1.bf16.msra.mxu0 %v400
  %516 = vmatprep.subr.bf16.mxu0 %v405
  %517 = vmatpush1.bf16.msra.mxu0 %v404
  %518 = vmatprep.subr.bf16.mxu0 %v409
  %519 = vmatpush1.bf16.msra.mxu0 %v408
  %520 = vmatprep.subr.bf16.mxu0 %v413
  %521 = vmatpush1.bf16.msra.mxu0 %v412
  %522 = vmatprep.subr.bf16.mxu0 %v417
  %523 = vmatpush1.bf16.msra.mxu0 %v416
  %524 = vmatprep.subr.bf16.mxu0 %v421
  %525 = vmatpush1.bf16.msra.mxu0 %v420
  %526 = vmatprep.subr.bf16.mxu0 %v425
  %527 = vmatpush1.bf16.msra.mxu0 %v424
  %528 = vmatprep.subr.bf16.mxu0 %v429
  %529 = vmatpush1.bf16.msra.mxu0 %v428
  %530 = vmatprep.subr.bf16.mxu0 %v433
  %531 = vmatpush1.bf16.msra.mxu0 %v432
  %532 = vmatprep.mubr.bf16.mxu0 %v149
  %533 = vmatmul.mubr.bf16.gmra.mrb[0].mxu0 %v148
  %v534 = vpop.f32.mrb[0].mxu0
  %v535 = vadd.f32 0.0, %v534
  %v536 = vpop.f32.mrb[0].mxu0
  %v537 = vadd.f32 0.0, %v536
  %v538 = vpop.f32.mrb[0].mxu0
  %v539 = vadd.f32 0.0, %v538
  %v540 = vpop.f32.mrb[0].mxu0
  %v541 = vadd.f32 0.0, %v540
  %542 = vmatprep.mubr.bf16.mxu0 %v151
  %543 = vmatmul.mubr.bf16.gmra.mrb[0].mxu0 %v150
  %v544 = vpop.f32.mrb[0].mxu0
  %v545 = vadd.f32 0.0, %v544
  %v546 = vpop.f32.mrb[0].mxu0
  %v547 = vadd.f32 0.0, %v546
  %v548 = vpop.f32.mrb[0].mxu0
  %v549 = vadd.f32 0.0, %v548
  %v550 = vpop.f32.mrb[0].mxu0
  %v551 = vadd.f32 0.0, %v550
  %552 = vmatprep.mubr.bf16.mxu0 %v153
  %553 = vmatmul.mubr.bf16.gmra.mrb[0].mxu0 %v152
  %v554 = vpop.f32.mrb[0].mxu0
  %v555 = vadd.f32 0.0, %v554
  %v556 = vpop.f32.mrb[0].mxu0
  %v557 = vadd.f32 0.0, %v556
  %v558 = vpop.f32.mrb[0].mxu0
  %v559 = vadd.f32 0.0, %v558
  %v560 = vpop.f32.mrb[0].mxu0
  %v561 = vadd.f32 0.0, %v560
  %562 = vmatprep.mubr.bf16.mxu0 %v155
  %563 = vmatmul.mubr.bf16.gmra.mrb[0].mxu0 %v154
  %v564 = vpop.f32.mrb[0].mxu0
  %v565 = vadd.f32 0.0, %v564
  %v566 = vpop.f32.mrb[0].mxu0
  %v567 = vadd.f32 0.0, %v566
  %v568 = vpop.f32.mrb[0].mxu0
  %v569 = vadd.f32 0.0, %v568
  %v570 = vpop.f32.mrb[0].mxu0
  %v571 = vadd.f32 0.0, %v570
  %572 = vmatprep.mubr.bf16.mxu0 %v157
  %573 = vmatmul.mubr.bf16.gmra.mrb[0].mxu0 %v156
  %v574 = vpop.f32.mrb[0].mxu0
  %v575 = vadd.f32 0.0, %v574
  %v576 = vpop.f32.mrb[0].mxu0
  %v577 = vadd.f32 0.0, %v576
  %v578 = vpop.f32.mrb[0].mxu0
  %v579 = vadd.f32 0.0, %v578
  %v580 = vpop.f32.mrb[0].mxu0
  %v581 = vadd.f32 0.0, %v580
  %582 = vmatprep.mubr.bf16.mxu0 %v159
  %583 = vmatmul.mubr.bf16.gmra.mrb[0].mxu0 %v158
  %v584 = vpop.f32.mrb[0].mxu0
  %v585 = vadd.f32 0.0, %v584
  %v586 = vpop.f32.mrb[0].mxu0
  %v587 = vadd.f32 0.0, %v586
  %v588 = vpop.f32.mrb[0].mxu0
  %v589 = vadd.f32 0.0, %v588
  %v590 = vpop.f32.mrb[0].mxu0
  %v591 = vadd.f32 0.0, %v590
  %592 = vmatprep.mubr.bf16.mxu0 %v161
  %593 = vmatmul.mubr.bf16.gmra.mrb[0].mxu0 %v160
  %v594 = vpop.f32.mrb[0].mxu0
  %v595 = vadd.f32 0.0, %v594
  %v596 = vpop.f32.mrb[0].mxu0
  %v597 = vadd.f32 0.0, %v596
  %v598 = vpop.f32.mrb[0].mxu0
  %v599 = vadd.f32 0.0, %v598
  %v600 = vpop.f32.mrb[0].mxu0
  %v601 = vadd.f32 0.0, %v600
  %602 = vmatprep.mubr.bf16.mxu0 %v163
  %603 = vmatmul.mubr.bf16.gmra.mrb[0].mxu0 %v162
  %v604 = vpop.f32.mrb[0].mxu0
  %v605 = vadd.f32 0.0, %v604
  %v606 = vpop.f32.mrb[0].mxu0
  %v607 = vadd.f32 0.0, %v606
  %v608 = vpop.f32.mrb[0].mxu0
  %v609 = vadd.f32 0.0, %v608
  %v610 = vpop.f32.mrb[0].mxu0
  %v611 = vadd.f32 0.0, %v610
  %612 = vdwg.mxu0
  %613 = vmatprep.subr.bf16.mxu0 %v375
  %614 = vmatpush1.bf16.msra.mxu0 %v374
  %615 = vmatprep.subr.bf16.mxu0 %v379
  %616 = vmatpush1.bf16.msra.mxu0 %v378
  %617 = vmatprep.subr.bf16.mxu0 %v383
  %618 = vmatpush1.bf16.msra.mxu0 %v382
  %619 = vmatprep.subr.bf16.mxu0 %v387
  %620 = vmatpush1.bf16.msra.mxu0 %v386
  %621 = vmatprep.subr.bf16.mxu0 %v391
  %622 = vmatpush1.bf16.msra.mxu0 %v390
  %623 = vmatprep.subr.bf16.mxu0 %v395
  %624 = vmatpush1.bf16.msra.mxu0 %v394
  %625 = vmatprep.subr.bf16.mxu0 %v399
  %626 = vmatpush1.bf16.msra.mxu0 %v398
  %627 = vmatprep.subr.bf16.mxu0 %v403
  %628 = vmatpush1.bf16.msra.mxu0 %v402
  %629 = vmatprep.subr.bf16.mxu0 %v407
  %630 = vmatpush1.bf16.msra.mxu0 %v406
  %631 = vmatprep.subr.bf16.mxu0 %v411
  %632 = vmatpush1.bf16.msra.mxu0 %v410
  %633 = vmatprep.subr.bf16.mxu0 %v415
  %634 = vmatpush1.bf16.msra.mxu0 %v414
  %635 = vmatprep.subr.bf16.mxu0 %v419
  %636 = vmatpush1.bf16.msra.mxu0 %v418
  %637 = vmatprep.subr.bf16.mxu0 %v423
  %638 = vmatpush1.bf16.msra.mxu0 %v422
  %639 = vmatprep.subr.bf16.mxu0 %v427
  %640 = vmatpush1.bf16.msra.mxu0 %v426
  %641 = vmatprep.subr.bf16.mxu0 %v431
  %642 = vmatpush1.bf16.msra.mxu0 %v430
  %643 = vmatprep.subr.bf16.mxu0 %v435
  %644 = vmatpush1.bf16.msra.mxu0 %v434
  %645 = vmatprep.mubr.bf16.mxu0 %v149
  %646 = vmatmul.mubr.bf16.gmra.mrb[0].mxu0 %v148
  %v647 = vpop.f32.mrb[0].mxu0
  %v648 = vadd.f32 0.0, %v647
  %v649 = vpop.f32.mrb[0].mxu0
  %v650 = vadd.f32 0.0, %v649
  %v651 = vpop.f32.mrb[0].mxu0
  %v652 = vadd.f32 0.0, %v651
  %v653 = vpop.f32.mrb[0].mxu0
  %v654 = vadd.f32 0.0, %v653
  %655 = vmatprep.mubr.bf16.mxu0 %v151
  %656 = vmatmul.mubr.bf16.gmra.mrb[0].mxu0 %v150
  %v657 = vpop.f32.mrb[0].mxu0
  %v658 = vadd.f32 0.0, %v657
  %v659 = vpop.f32.mrb[0].mxu0
  %v660 = vadd.f32 0.0, %v659
  %v661 = vpop.f32.mrb[0].mxu0
  %v662 = vadd.f32 0.0, %v661
  %v663 = vpop.f32.mrb[0].mxu0
  %v664 = vadd.f32 0.0, %v663
  %665 = vmatprep.mubr.bf16.mxu0 %v153
  %666 = vmatmul.mubr.bf16.gmra.mrb[0].mxu0 %v152
  %v667 = vpop.f32.mrb[0].mxu0
  %v668 = vadd.f32 0.0, %v667
  %v669 = vpop.f32.mrb[0].mxu0
  %v670 = vadd.f32 0.0, %v669
  %v671 = vpop.f32.mrb[0].mxu0
  %v672 = vadd.f32 0.0, %v671
  %v673 = vpop.f32.mrb[0].mxu0
  %v674 = vadd.f32 0.0, %v673
  %675 = vmatprep.mubr.bf16.mxu0 %v155
  %676 = vmatmul.mubr.bf16.gmra.mrb[0].mxu0 %v154
  %v677 = vpop.f32.mrb[0].mxu0
  %v678 = vadd.f32 0.0, %v677
  %v679 = vpop.f32.mrb[0].mxu0
  %v680 = vadd.f32 0.0, %v679
  %v681 = vpop.f32.mrb[0].mxu0
  %v682 = vadd.f32 0.0, %v681
  %v683 = vpop.f32.mrb[0].mxu0
  %v684 = vadd.f32 0.0, %v683
  %685 = vmatprep.mubr.bf16.mxu0 %v157
  %686 = vmatmul.mubr.bf16.gmra.mrb[0].mxu0 %v156
  %v687 = vpop.f32.mrb[0].mxu0
  %v688 = vadd.f32 0.0, %v687
  %v689 = vpop.f32.mrb[0].mxu0
  %v690 = vadd.f32 0.0, %v689
  %v691 = vpop.f32.mrb[0].mxu0
  %v692 = vadd.f32 0.0, %v691
  %v693 = vpop.f32.mrb[0].mxu0
  %v694 = vadd.f32 0.0, %v693
  %695 = vmatprep.mubr.bf16.mxu0 %v159
  %696 = vmatmul.mubr.bf16.gmra.mrb[0].mxu0 %v158
  %v697 = vpop.f32.mrb[0].mxu0
  %v698 = vadd.f32 0.0, %v697
  %v699 = vpop.f32.mrb[0].mxu0
  %v700 = vadd.f32 0.0, %v699
  %v701 = vpop.f32.mrb[0].mxu0
  %v702 = vadd.f32 0.0, %v701
  %v703 = vpop.f32.mrb[0].mxu0
  %v704 = vadd.f32 0.0, %v703
  %705 = vmatprep.mubr.bf16.mxu0 %v161
  %706 = vmatmul.mubr.bf16.gmra.mrb[0].mxu0 %v160
  %v707 = vpop.f32.mrb[0].mxu0
  %v708 = vadd.f32 0.0, %v707
  %v709 = vpop.f32.mrb[0].mxu0
  %v710 = vadd.f32 0.0, %v709
  %v711 = vpop.f32.mrb[0].mxu0
  %v712 = vadd.f32 0.0, %v711
  %v713 = vpop.f32.mrb[0].mxu0
  %v714 = vadd.f32 0.0, %v713
  %715 = vmatprep.mubr.bf16.mxu0 %v163
  %716 = vmatmul.mubr.bf16.gmra.mrb[0].mxu0 %v162
  %v717 = vpop.f32.mrb[0].mxu0
  %v718 = vadd.f32 0.0, %v717
  %v719 = vpop.f32.mrb[0].mxu0
  %v720 = vadd.f32 0.0, %v719
  %v721 = vpop.f32.mrb[0].mxu0
  %v722 = vadd.f32 0.0, %v721
  %v723 = vpop.f32.mrb[0].mxu0
  %v724 = vadd.f32 0.0, %v723
  %725 = vdwg.mxu0
  %v726 = vmax.f32 %v535, %v537
  %v727 = vmax.f32 %v539, %v541
  %v728 = vmax.f32 %v545, %v547
  %v729 = vmax.f32 %v549, %v551
  %v730 = vmax.f32 %v555, %v557
  %v731 = vmax.f32 %v559, %v561
  %v732 = vmax.f32 %v565, %v567
  %v733 = vmax.f32 %v569, %v571
  %v734 = vmax.f32 %v575, %v577
  %v735 = vmax.f32 %v579, %v581
  %v736 = vmax.f32 %v585, %v587
  %v737 = vmax.f32 %v589, %v591
  %v738 = vmax.f32 %v595, %v597
  %v739 = vmax.f32 %v599, %v601
  %v740 = vmax.f32 %v605, %v607
  %v741 = vmax.f32 %v609, %v611
  %v742 = vmax.f32 %v648, %v650
  %v743 = vmax.f32 %v652, %v654
  %v744 = vmax.f32 %v658, %v660
  %v745 = vmax.f32 %v662, %v664
  %v746 = vmax.f32 %v668, %v670
  %v747 = vmax.f32 %v672, %v674
  %v748 = vmax.f32 %v678, %v680
  %v749 = vmax.f32 %v682, %v684
  %v750 = vmax.f32 %v688, %v690
  %v751 = vmax.f32 %v692, %v694
  %v752 = vmax.f32 %v698, %v700
  %v753 = vmax.f32 %v702, %v704
  %v754 = vmax.f32 %v708, %v710
  %v755 = vmax.f32 %v712, %v714
  %v756 = vmax.f32 %v718, %v720
  %v757 = vmax.f32 %v722, %v724
  %v758 = vmax.f32 %v726, %v742
  %v759 = vmax.f32 %v727, %v743
  %v760 = vmax.f32 %v728, %v744
  %v761 = vmax.f32 %v729, %v745
  %v762 = vmax.f32 %v730, %v746
  %v763 = vmax.f32 %v731, %v747
  %v764 = vmax.f32 %v732, %v748
  %v765 = vmax.f32 %v733, %v749
  %v766 = vmax.f32 %v734, %v750
  %v767 = vmax.f32 %v735, %v751
  %v768 = vmax.f32 %v736, %v752
  %v769 = vmax.f32 %v737, %v753
  %v770 = vmax.f32 %v738, %v754
  %v771 = vmax.f32 %v739, %v755
  %v772 = vmax.f32 %v740, %v756
  %v773 = vmax.f32 %v741, %v757
  %v774 = vld [vmem:[%s2] sm:$0x1]
  %v776 = vlaneseq
  %v777 = vshrl.u32 %v776, 7
  %v778 = vsub.s32 0, %v777
  %v779 = vrot.slane %v774, %v778
  %v781 = vadd.f32 %v758, %v779
  %v782 = vadd.f32 %v759, %v779
  %v783 = vadd.f32 %v760, %v779
  %v784 = vadd.f32 %v761, %v779
  %v785 = vadd.f32 %v762, %v779
  %v786 = vadd.f32 %v763, %v779
  %v787 = vadd.f32 %v764, %v779
  %v788 = vadd.f32 %v765, %v779
  %v789 = vadd.f32 %v766, %v779
  %v790 = vadd.f32 %v767, %v779
  %v791 = vadd.f32 %v768, %v779
  %v792 = vadd.f32 %v769, %v779
  %v793 = vadd.f32 %v770, %v779
  %v794 = vadd.f32 %v771, %v779
  %v795 = vadd.f32 %v772, %v779
  %v796 = vadd.f32 %v773, %v779
  %v797 = vmax.f32 %v781, 0.0
  %v798 = vmax.f32 %v782, 0.0
  %v799 = vmax.f32 %v783, 0.0
  %v800 = vmax.f32 %v784, 0.0
  %v801 = vmax.f32 %v785, 0.0
  %v802 = vmax.f32 %v786, 0.0
  %v803 = vmax.f32 %v787, 0.0
  %v804 = vmax.f32 %v788, 0.0
  %v805 = vmax.f32 %v789, 0.0
  %v806 = vmax.f32 %v790, 0.0
  %v807 = vmax.f32 %v791, 0.0
  %v808 = vmax.f32 %v792, 0.0
  %v809 = vmax.f32 %v793, 0.0
  %v810 = vmax.f32 %v794, 0.0
  %v811 = vmax.f32 %v795, 0.0
  %v812 = vmax.f32 %v796, 0.0
  %v813 = vadd.f32 %v797, %v798
  %v814 = vadd.f32 %v813, %v799
  %v815 = vadd.f32 %v814, %v800
  %v816 = vadd.f32 %v815, %v801
  %v817 = vadd.f32 %v816, %v802
  %v818 = vadd.f32 %v817, %v803
  %v819 = vadd.f32 %v818, %v804
  %v820 = vadd.f32 %v819, %v805
  %v821 = vadd.f32 %v820, %v806
  %v822 = vadd.f32 %v821, %v807
  %v823 = vadd.f32 %v822, %v808
  %v824 = vadd.f32 %v823, %v809
  %v825 = vadd.f32 %v824, %v810
  %v826 = vadd.f32 %v825, %v811
  %v827 = vadd.f32 %v826, %v812
  %v828 = vrot.slane %v827, 4
  %v829 = vadd.f32 %v827, %v828
  %v830 = vrot.slane %v829, 2
  %v831 = vadd.f32 %v829, %v830
  %v832 = vrot.slane %v831, 1
  %v833 = vadd.f32 %v831, %v832
  %v834 = vmul.f32 %v833, 0.0078125
  %v835 = vmul.f32 %v797, %v797
  %v836 = vmul.f32 %v798, %v798
  %v837 = vmul.f32 %v799, %v799
  %v838 = vmul.f32 %v800, %v800
  %v839 = vmul.f32 %v801, %v801
  %v840 = vmul.f32 %v802, %v802
  %v841 = vmul.f32 %v803, %v803
  %v842 = vmul.f32 %v804, %v804
  %v843 = vmul.f32 %v805, %v805
  %v844 = vmul.f32 %v806, %v806
  %v845 = vmul.f32 %v807, %v807
  %v846 = vmul.f32 %v808, %v808
  %v847 = vmul.f32 %v809, %v809
  %v848 = vmul.f32 %v810, %v810
  %v849 = vmul.f32 %v811, %v811
  %v850 = vmul.f32 %v812, %v812
  %v851 = vadd.f32 %v835, %v836
  %v852 = vadd.f32 %v851, %v837
  %v853 = vadd.f32 %v852, %v838
  %v854 = vadd.f32 %v853, %v839
  %v855 = vadd.f32 %v854, %v840
  %v856 = vadd.f32 %v855, %v841
  %v857 = vadd.f32 %v856, %v842
  %v858 = vadd.f32 %v857, %v843
  %v859 = vadd.f32 %v858, %v844
  %v860 = vadd.f32 %v859, %v845
  %v861 = vadd.f32 %v860, %v846
  %v862 = vadd.f32 %v861, %v847
  %v863 = vadd.f32 %v862, %v848
  %v864 = vadd.f32 %v863, %v849
  %v865 = vadd.f32 %v864, %v850
  %v866 = vrot.slane %v865, 4
  %v867 = vadd.f32 %v865, %v866
  %v868 = vrot.slane %v867, 2
  %v869 = vadd.f32 %v867, %v868
  %v870 = vrot.slane %v869, 1
  %v871 = vadd.f32 %v869, %v870
  %v872 = vmul.f32 %v871, 0.0078125
  %v873 = vmul.f32 %v834, %v834
  %v874 = vsub.f32 %v872, %v873
  %v875 = vmax.f32 %v874, 0.0
  %v876 = vld [vmem:[%s3] sm:$0x1]
  %v877 = vadd.f32 %v875, 1e-05
  %v878 = vrsqrt.pop %v877
  %v879 = vmul.f32 %v876, %v878
  %v880 = vld [vmem:[%s4] sm:$0x1]
  %v881 = vmul.f32 %v834, %v879
  %v882 = vsub.f32 %v880, %v881
  %v884 = vlaneseq
  %v885 = vshrl.u32 %v884, 7
  %v886 = vsub.s32 0, %v885
  %v887 = vrot.slane %v879, %v886
  %v889 = vmul.f32 %v797, %v887
  %v890 = vmul.f32 %v798, %v887
  %v891 = vmul.f32 %v799, %v887
  %v892 = vmul.f32 %v800, %v887
  %v893 = vmul.f32 %v801, %v887
  %v894 = vmul.f32 %v802, %v887
  %v895 = vmul.f32 %v803, %v887
  %v896 = vmul.f32 %v804, %v887
  %v897 = vmul.f32 %v805, %v887
  %v898 = vmul.f32 %v806, %v887
  %v899 = vmul.f32 %v807, %v887
  %v900 = vmul.f32 %v808, %v887
  %v901 = vmul.f32 %v809, %v887
  %v902 = vmul.f32 %v810, %v887
  %v903 = vmul.f32 %v811, %v887
  %v904 = vmul.f32 %v812, %v887
  %v906 = vlaneseq
  %v907 = vshrl.u32 %v906, 7
  %v908 = vsub.s32 0, %v907
  %v909 = vrot.slane %v882, %v908
  %v911 = vadd.f32 %v889, %v909
  %v912 = vadd.f32 %v890, %v909
  %v913 = vadd.f32 %v891, %v909
  %v914 = vadd.f32 %v892, %v909
  %v915 = vadd.f32 %v893, %v909
  %v916 = vadd.f32 %v894, %v909
  %v917 = vadd.f32 %v895, %v909
  %v918 = vadd.f32 %v896, %v909
  %v919 = vadd.f32 %v897, %v909
  %v920 = vadd.f32 %v898, %v909
  %v921 = vadd.f32 %v899, %v909
  %v922 = vadd.f32 %v900, %v909
  %v923 = vadd.f32 %v901, %v909
  %v924 = vadd.f32 %v902, %v909
  %v925 = vadd.f32 %v903, %v909
  %v926 = vadd.f32 %v904, %v909
  %927 = vst [vmem:[%s5] sm:$0xff] %v911
  %928 = vst [vmem:[%s5 + $0x8] sm:$0xff] %v912
  %929 = vst [vmem:[%s5 + $0x10] sm:$0xff] %v913
  %930 = vst [vmem:[%s5 + $0x18] sm:$0xff] %v914
  %931 = vst [vmem:[%s5 + $0x20] sm:$0xff] %v915
  %932 = vst [vmem:[%s5 + $0x28] sm:$0xff] %v916
  %933 = vst [vmem:[%s5 + $0x30] sm:$0xff] %v917
  %934 = vst [vmem:[%s5 + $0x38] sm:$0xff] %v918
  %935 = vst [vmem:[%s5 + $0x40] sm:$0xff] %v919
  %936 = vst [vmem:[%s5 + $0x48] sm:$0xff] %v920
  %937 = vst [vmem:[%s5 + $0x50] sm:$0xff] %v921
  %938 = vst [vmem:[%s5 + $0x58] sm:$0xff] %v922
  %939 = vst [vmem:[%s5 + $0x60] sm:$0xff] %v923
  %940 = vst [vmem:[%s5 + $0x68] sm:$0xff] %v924
  %941 = vst [vmem:[%s5 + $0x70] sm:$0xff] %v925
  %942 = vst [vmem:[%s5 + $0x78] sm:$0xff] %v926
  // Predicated region
  $region22: #{mini_conv_forward.5} parent=0 // pred_check
    _
  $region23: #{mini_conv_forward.5} parent=0 // pred_check_branch
    %944 = sbr.rel (0) target = $region25
  $region24: #{mini_conv_forward.5} parent=0 // pred_region
    _
  $region25: #{mini_conv_forward.5} parent=0 // pred_fallthru
    _
  // Predicated region
  $region26: #{mini_conv_forward.5} parent=0 // pred_check
    _
  $region27: #{mini_conv_forward.5} parent=0 // pred_check_branch
    %946 = sbr.rel (0) target = $region29
  $region28: #{mini_conv_forward.5} parent=0 // pred_region
    _
  $region29: #{mini_conv_forward.5} parent=0 // pred_fallthru
    _

// kernel: mini_conv_forward.7
$region0: #{mini_conv_forward.7}
  #allocation0 [shape = 'u32[]', space=smem, size = 0x4, offset = 0x4, fixed_abs, tag = 'smem constant byte address 0x4 - core index']
  #allocation1 [shape = 'u32[144,128]{1,0:T(1,128)}', space=vmem, size = 0x12000, scoped, tag = 'internal scratch']
  %s0 = inlined_call_operand.vmem [shape: f32[2,1024], index: 0, kind: input, shape index: {}]
  %s1 = inlined_call_operand.vmem [shape: f32[1024,128], index: 1, kind: input, shape index: {}]
  %s2 = inlined_call_operand.vmem [shape: f32[1,128], index: 2, kind: input, shape index: {}]
  %s3 = inlined_call_operand.vmem [shape: f32[1,128], index: 3, kind: input, shape index: {}]
  %s4 = inlined_call_operand.hbm [shape: f32[2,128], index: 4, kind: output, shape index: {0}]
  %s5 = inlined_call_operand.vmem [shape: f32[2,1], index: 5, kind: output, shape index: {1}]
  %6 = xla_tuple %s4, %s5
  %s7 = sld [smem:[#allocation0]]
  $region34: #{mini_conv_forward.7} parent=0
    _
  %s9 = ssub.s32 1, %s7
  %s10 = scalar_select 0, %s9, %s7
  $region1: #{mini_conv_forward.7} parent=0
    #allocation2 [shape = 'u8[1024]{0}', space=vmem, size = 0x400, scoped, tag = 'output window, operand 0, single buffered']
    #allocation3 [shape = 's32[1]{0}', space=sflag, size = 0x4, scoped, tag = 'scoped memory for mini_conv_forward.7']
    %11 = vsyncpa [#allocation3], 0
    // Predicated region
    $region2: #{mini_conv_forward.7} parent=1 // pred_check
      _
    $region3: #{mini_conv_forward.7} parent=1 // pred_check_branch
      %13 = sbr.rel (0) target = $region5
    $region4: #{mini_conv_forward.7} parent=1 // pred_region
      _
    $region5: #{mini_conv_forward.7} parent=1 // pred_fallthru
      _
    // Predicated region
    $region6: #{mini_conv_forward.7} parent=1 // pred_check
      _
    $region7: #{mini_conv_forward.7} parent=1 // pred_check_branch
      %15 = sbr.rel (0) target = $region9
    $region8: #{mini_conv_forward.7} parent=1 // pred_region
      _
    $region9: #{mini_conv_forward.7} parent=1 // pred_fallthru
      _
    // Predicated region
    $region10: #{mini_conv_forward.7} parent=1 // pred_check
      _
    $region11: #{mini_conv_forward.7} parent=1 // pred_check_branch
      %17 = sbr.rel (0) target = $region13
    $region12: #{mini_conv_forward.7} parent=1 // pred_region
      _
    $region13: #{mini_conv_forward.7} parent=1 // pred_fallthru
      _
    // Predicated region
    $region14: #{mini_conv_forward.7} parent=1 // pred_check
      _
    $region15: #{mini_conv_forward.7} parent=1 // pred_check_branch
      %19 = sbr.rel (0) target = $region17
    $region16: #{mini_conv_forward.7} parent=1 // pred_region
      _
    $region17: #{mini_conv_forward.7} parent=1 // pred_fallthru
      _
    %v20 = vld [vmem:[%s0] sm:$0xff]
    %v21 = vld [vmem:[%s0 + $0x8] sm:$0xff]
    %v22 = vld [vmem:[%s1] sm:$0xff]
    %v23 = vld [vmem:[%s1 + $0x8] sm:$0xff]
    %v24 = vld [vmem:[%s1 + $0x10] sm:$0xff]
    %v25 = vld [vmem:[%s1 + $0x18] sm:$0xff]
    %v26 = vld [vmem:[%s1 + $0x20] sm:$0xff]
    %v27 = vld [vmem:[%s1 + $0x28] sm:$0xff]
    %v28 = vld [vmem:[%s1 + $0x30] sm:$0xff]
    %v29 = vld [vmem:[%s1 + $0x38] sm:$0xff]
    %v30 = vld [vmem:[%s1 + $0x40] sm:$0xff]
    %v31 = vld [vmem:[%s1 + $0x48] sm:$0xff]
    %v32 = vld [vmem:[%s1 + $0x50] sm:$0xff]
    %v33 = vld [vmem:[%s1 + $0x58] sm:$0xff]
    %v34 = vld [vmem:[%s1 + $0x60] sm:$0xff]
    %v35 = vld [vmem:[%s1 + $0x68] sm:$0xff]
    %v36 = vld [vmem:[%s1 + $0x70] sm:$0xff]
    %v37 = vld [vmem:[%s1 + $0x78] sm:$0xff]
    %v38 = vld [vmem:[%s1 + $0x80] sm:$0xff]
    %v39 = vld [vmem:[%s1 + $0x88] sm:$0xff]
    %v40 = vld [vmem:[%s1 + $0x90] sm:$0xff]
    %v41 = vld [vmem:[%s1 + $0x98] sm:$0xff]
    %v42 = vld [vmem:[%s1 + $0xa0] sm:$0xff]
    %v43 = vld [vmem:[%s1 + $0xa8] sm:$0xff]
    %v44 = vld [vmem:[%s1 + $0xb0] sm:$0xff]
    %v45 = vld [vmem:[%s1 + $0xb8] sm:$0xff]
    %v46 = vld [vmem:[%s1 + $0xc0] sm:$0xff]
    %v47 = vld [vmem:[%s1 + $0xc8] sm:$0xff]
    %v48 = vld [vmem:[%s1 + $0xd0] sm:$0xff]
    %v49 = vld [vmem:[%s1 + $0xd8] sm:$0xff]
    %v50 = vld [vmem:[%s1 + $0xe0] sm:$0xff]
    %v51 = vld [vmem:[%s1 + $0xe8] sm:$0xff]
    %v52 = vld [vmem:[%s1 + $0xf0] sm:$0xff]
    %v53 = vld [vmem:[%s1 + $0xf8] sm:$0xff]
    %v54 = vld [vmem:[%s1 + $0x100] sm:$0xff]
    %v55 = vld [vmem:[%s1 + $0x108] sm:$0xff]
    %v56 = vld [vmem:[%s1 + $0x110] sm:$0xff]
    %v57 = vld [vmem:[%s1 + $0x118] sm:$0xff]
    %v58 = vld [vmem:[%s1 + $0x120] sm:$0xff]
    %v59 = vld [vmem:[%s1 + $0x128] sm:$0xff]
    %v60 = vld [vmem:[%s1 + $0x130] sm:$0xff]
    %v61 = vld [vmem:[%s1 + $0x138] sm:$0xff]
    %v62 = vld [vmem:[%s1 + $0x140] sm:$0xff]
    %v63 = vld [vmem:[%s1 + $0x148] sm:$0xff]
    %v64 = vld [vmem:[%s1 + $0x150] sm:$0xff]
    %v65 = vld [vmem:[%s1 + $0x158] sm:$0xff]
    %v66 = vld [vmem:[%s1 + $0x160] sm:$0xff]
    %v67 = vld [vmem:[%s1 + $0x168] sm:$0xff]
    %v68 = vld [vmem:[%s1 + $0x170] sm:$0xff]
    %v69 = vld [vmem:[%s1 + $0x178] sm:$0xff]
    %v70 = vld [vmem:[%s1 + $0x180] sm:$0xff]
    %v71 = vld [vmem:[%s1 + $0x188] sm:$0xff]
    %v72 = vld [vmem:[%s1 + $0x190] sm:$0xff]
    %v73 = vld [vmem:[%s1 + $0x198] sm:$0xff]
    %v74 = vld [vmem:[%s1 + $0x1a0] sm:$0xff]
    %v75 = vld [vmem:[%s1 + $0x1a8] sm:$0xff]
    %v76 = vld [vmem:[%s1 + $0x1b0] sm:$0xff]
    %v77 = vld [vmem:[%s1 + $0x1b8] sm:$0xff]
    %v78 = vld [vmem:[%s1 + $0x1c0] sm:$0xff]
    %v79 = vld [vmem:[%s1 + $0x1c8] sm:$0xff]
    %v80 = vld [vmem:[%s1 + $0x1d0] sm:$0xff]
    %v81 = vld [vmem:[%s1 + $0x1d8] sm:$0xff]
    %v82 = vld [vmem:[%s1 + $0x1e0] sm:$0xff]
    %v83 = vld [vmem:[%s1 + $0x1e8] sm:$0xff]
    %v84 = vld [vmem:[%s1 + $0x1f0] sm:$0xff]
    %v85 = vld [vmem:[%s1 + $0x1f8] sm:$0xff]
    %v86 = vld [vmem:[%s1 + $0x200] sm:$0xff]
    %v87 = vld [vmem:[%s1 + $0x208] sm:$0xff]
    %v88 = vld [vmem:[%s1 + $0x210] sm:$0xff]
    %v89 = vld [vmem:[%s1 + $0x218] sm:$0xff]
    %v90 = vld [vmem:[%s1 + $0x220] sm:$0xff]
    %v91 = vld [vmem:[%s1 + $0x228] sm:$0xff]
    %v92 = vld [vmem:[%s1 + $0x230] sm:$0xff]
    %v93 = vld [vmem:[%s1 + $0x238] sm:$0xff]
    %v94 = vld [vmem:[%s1 + $0x240] sm:$0xff]
    %v95 = vld [vmem:[%s1 + $0x248] sm:$0xff]
    %v96 = vld [vmem:[%s1 + $0x250] sm:$0xff]
    %v97 = vld [vmem:[%s1 + $0x258] sm:$0xff]
    %v98 = vld [vmem:[%s1 + $0x260] sm:$0xff]
    %v99 = vld [vmem:[%s1 + $0x268] sm:$0xff]
    %v100 = vld [vmem:[%s1 + $0x270] sm:$0xff]
    %v101 = vld [vmem:[%s1 + $0x278] sm:$0xff]
    %v102 = vld [vmem:[%s1 + $0x280] sm:$0xff]
    %v103 = vld [vmem:[%s1 + $0x288] sm:$0xff]
    %v104 = vld [vmem:[%s1 + $0x290] sm:$0xff]
    %v105 = vld [vmem:[%s1 + $0x298] sm:$0xff]
    %v106 = vld [vmem:[%s1 + $0x2a0] sm:$0xff]
    %v107 = vld [vmem:[%s1 + $0x2a8] sm:$0xff]
    %v108 = vld [vmem:[%s1 + $0x2b0] sm:$0xff]
    %v109 = vld [vmem:[%s1 + $0x2b8] sm:$0xff]
    %v110 = vld [vmem:[%s1 + $0x2c0] sm:$0xff]
    %v111 = vld [vmem:[%s1 + $0x2c8] sm:$0xff]
    %v112 = vld [vmem:[%s1 + $0x2d0] sm:$0xff]
    %v113 = vld [vmem:[%s1 + $0x2d8] sm:$0xff]
    %v114 = vld [vmem:[%s1 + $0x2e0] sm:$0xff]
    %v115 = vld [vmem:[%s1 + $0x2e8] sm:$0xff]
    %v116 = vld [vmem:[%s1 + $0x2f0] sm:$0xff]
    %v117 = vld [vmem:[%s1 + $0x2f8] sm:$0xff]
    %v118 = vld [vmem:[%s1 + $0x300] sm:$0xff]
    %v119 = vld [vmem:[%s1 + $0x308] sm:$0xff]
    %v120 = vld [vmem:[%s1 + $0x310] sm:$0xff]
    %v121 = vld [vmem:[%s1 + $0x318] sm:$0xff]
    %v122 = vld [vmem:[%s1 + $0x320] sm:$0xff]
    %v123 = vld [vmem:[%s1 + $0x328] sm:$0xff]
    %v124 = vld [vmem:[%s1 + $0x330] sm:$0xff]
    %v125 = vld [vmem:[%s1 + $0x338] sm:$0xff]
    %v126 = vld [vmem:[%s1 + $0x340] sm:$0xff]
    %v127 = vld [vmem:[%s1 + $0x348] sm:$0xff]
    %v128 = vld [vmem:[%s1 + $0x350] sm:$0xff]
    %v129 = vld [vmem:[%s1 + $0x358] sm:$0xff]
    %v130 = vld [vmem:[%s1 + $0x360] sm:$0xff]
    %v131 = vld [vmem:[%s1 + $0x368] sm:$0xff]
    %v132 = vld [vmem:[%s1 + $0x370] sm:$0xff]
    %v133 = vld [vmem:[%s1 + $0x378] sm:$0xff]
    %v134 = vld [vmem:[%s1 + $0x380] sm:$0xff]
    %v135 = vld [vmem:[%s1 + $0x388] sm:$0xff]
    %v136 = vld [vmem:[%s1 + $0x390] sm:$0xff]
    %v137 = vld [vmem:[%s1 + $0x398] sm:$0xff]
    %v138 = vld [vmem:[%s1 + $0x3a0] sm:$0xff]
    %v139 = vld [vmem:[%s1 + $0x3a8] sm:$0xff]
    %v140 = vld [vmem:[%s1 + $0x3b0] sm:$0xff]
    %v141 = vld [vmem:[%s1 + $0x3b8] sm:$0xff]
    %v142 = vld [vmem:[%s1 + $0x3c0] sm:$0xff]
    %v143 = vld [vmem:[%s1 + $0x3c8] sm:$0xff]
    %v144 = vld [vmem:[%s1 + $0x3d0] sm:$0xff]
    %v145 = vld [vmem:[%s1 + $0x3d8] sm:$0xff]
    %v146 = vld [vmem:[%s1 + $0x3e0] sm:$0xff]
    %v147 = vld [vmem:[%s1 + $0x3e8] sm:$0xff]
    %v148 = vld [vmem:[%s1 + $0x3f0] sm:$0xff]
    %v149 = vld [vmem:[%s1 + $0x3f8] sm:$0xff]
    %v150 = vld [vmem:[%s2] sm:$0x1]
    %v152 = vlaneseq
    %v153 = vshrl.u32 %v152, 7
    %v154 = vsub.s32 0, %v153
    %v155 = vrot.slane %v150, %v154
    %v159 = vcombine.high %v20, %v20
    %v161 = vunpack.c.l.s4 1983009808
    %v162 = vunpack.c.0.s8 %v161
    %v163 = vlaneseq
    %v164 = vshrl.u32 %v163, 7
    %v165 = vsub.s32 %v162, %v164
    %v166 = vrot.slane %v20, %v165
    %v168 = vunpack.c.l.s4 1983009808
    %v169 = vunpack.c.0.s8 %v168
    %v170 = vlaneseq
    %v171 = vshrl.u32 %v170, 7
    %v172 = vsub.s32 %v169, %v171
    %v173 = vrot.slane %v159, %v172
    %v174 = vcombine.high %v166, %v166
    %v175 = vcombine.high %v173, %v173
    %v176 = vcombine.high %v21, %v21
    %v178 = vunpack.c.l.s4 1983009808
    %v179 = vunpack.c.0.s8 %v178
    %v180 = vlaneseq
    %v181 = vshrl.u32 %v180, 7
    %v182 = vsub.s32 %v179, %v181
    %v183 = vrot.slane %v21, %v182
    %v185 = vunpack.c.l.s4 1983009808
    %v186 = vunpack.c.0.s8 %v185
    %v187 = vlaneseq
    %v188 = vshrl.u32 %v187, 7
    %v189 = vsub.s32 %v186, %v188
    %v190 = vrot.slane %v176, %v189
    %v191 = vcombine.high %v183, %v183
    %v192 = vcombine.high %v190, %v190
    %201 = vmatprep.subr.mxu0 0.0
    %202 = vmatpush1.msra.mxu0 %v22
    %203 = vmatprep.subr.mxu0 0.0
    %204 = vmatpush1.msra.mxu0 %v23
    %205 = vmatprep.subr.mxu0 0.0
    %206 = vmatpush1.msra.mxu0 %v24
    %207 = vmatprep.subr.mxu0 0.0
    %208 = vmatpush1.msra.mxu0 %v25
    %209 = vmatprep.subr.mxu0 0.0
    %210 = vmatpush1.msra.mxu0 %v26
    %211 = vmatprep.subr.mxu0 0.0
    %212 = vmatpush1.msra.mxu0 %v27
    %213 = vmatprep.subr.mxu0 0.0
    %214 = vmatpush1.msra.mxu0 %v28
    %215 = vmatprep.subr.mxu0 0.0
    %216 = vmatpush1.msra.mxu0 %v29
    %217 = vmatprep.subr.mxu0 0.0
    %218 = vmatpush1.msra.mxu0 %v30
    %219 = vmatprep.subr.mxu0 0.0
    %220 = vmatpush1.msra.mxu0 %v31
    %221 = vmatprep.subr.mxu0 0.0
    %222 = vmatpush1.msra.mxu0 %v32
    %223 = vmatprep.subr.mxu0 0.0
    %224 = vmatpush1.msra.mxu0 %v33
    %225 = vmatprep.subr.mxu0 0.0
    %226 = vmatpush1.msra.mxu0 %v34
    %227 = vmatprep.subr.mxu0 0.0
    %228 = vmatpush1.msra.mxu0 %v35
    %229 = vmatprep.subr.mxu0 0.0
    %230 = vmatpush1.msra.mxu0 %v36
    %231 = vmatprep.subr.mxu0 0.0
    %232 = vmatpush1.msra.mxu0 %v37
    %233 = vmatprep.subr.mxu0 0.0
    %234 = vmatpush1.msra.mxu0 %v38
    %235 = vmatprep.subr.mxu0 0.0
    %236 = vmatpush1.msra.mxu0 %v39
    %237 = vmatprep.subr.mxu0 0.0
    %238 = vmatpush1.msra.mxu0 %v40
    %239 = vmatprep.subr.mxu0 0.0
    %240 = vmatpush1.msra.mxu0 %v41
    %241 = vmatprep.subr.mxu0 0.0
    %242 = vmatpush1.msra.mxu0 %v42
    %243 = vmatprep.subr.mxu0 0.0
    %244 = vmatpush1.msra.mxu0 %v43
    %245 = vmatprep.subr.mxu0 0.0
    %246 = vmatpush1.msra.mxu0 %v44
    %247 = vmatprep.subr.mxu0 0.0
    %248 = vmatpush1.msra.mxu0 %v45
    %249 = vmatprep.subr.mxu0 0.0
    %250 = vmatpush1.msra.mxu0 %v46
    %251 = vmatprep.subr.mxu0 0.0
    %252 = vmatpush1.msra.mxu0 %v47
    %253 = vmatprep.subr.mxu0 0.0
    %254 = vmatpush1.msra.mxu0 %v48
    %255 = vmatprep.subr.mxu0 0.0
    %256 = vmatpush1.msra.mxu0 %v49
    %257 = vmatprep.subr.mxu0 0.0
    %258 = vmatpush1.msra.mxu0 %v50
    %259 = vmatprep.subr.mxu0 0.0
    %260 = vmatpush1.msra.mxu0 %v51
    %261 = vmatprep.subr.mxu0 0.0
    %262 = vmatpush1.msra.mxu0 %v52
    %263 = vmatprep.subr.mxu0 0.0
    %264 = vmatpush1.msra.mxu0 %v53
    %265 = vmatprep.mubr.f32.mxu0 %v174
    %266 = vmatmul.mubr.f32.gmra.mrb[0].mxu0 %v166
    %v267 = vpop.f32.mrb[0].mxu0
    %v268 = vadd.f32 %v155, %v267
    %v269 = vpop.f32.mrb[0].mxu0
    %270 = vdwg.mxu0
    %271 = vmatprep.subr.mxu0 0.0
    %272 = vmatpush1.msra.mxu0 %v54
    %273 = vmatprep.subr.mxu0 0.0
    %274 = vmatpush1.msra.mxu0 %v55
    %275 = vmatprep.subr.mxu0 0.0
    %276 = vmatpush1.msra.mxu0 %v56
    %277 = vmatprep.subr.mxu0 0.0
    %278 = vmatpush1.msra.mxu0 %v57
    %279 = vmatprep.subr.mxu0 0.0
    %280 = vmatpush1.msra.mxu0 %v58
    %281 = vmatprep.subr.mxu0 0.0
    %282 = vmatpush1.msra.mxu0 %v59
    %283 = vmatprep.subr.mxu0 0.0
    %284 = vmatpush1.msra.mxu0 %v60
    %285 = vmatprep.subr.mxu0 0.0
    %286 = vmatpush1.msra.mxu0 %v61
    %287 = vmatprep.subr.mxu0 0.0
    %288 = vmatpush1.msra.mxu0 %v62
    %289 = vmatprep.subr.mxu0 0.0
    %290 = vmatpush1.msra.mxu0 %v63
    %291 = vmatprep.subr.mxu0 0.0
    %292 = vmatpush1.msra.mxu0 %v64
    %293 = vmatprep.subr.mxu0 0.0
    %294 = vmatpush1.msra.mxu0 %v65
    %295 = vmatprep.subr.mxu0 0.0
    %296 = vmatpush1.msra.mxu0 %v66
    %297 = vmatprep.subr.mxu0 0.0
    %298 = vmatpush1.msra.mxu0 %v67
    %299 = vmatprep.subr.mxu0 0.0
    %300 = vmatpush1.msra.mxu0 %v68
    %301 = vmatprep.subr.mxu0 0.0
    %302 = vmatpush1.msra.mxu0 %v69
    %303 = vmatprep.subr.mxu0 0.0
    %304 = vmatpush1.msra.mxu0 %v70
    %305 = vmatprep.subr.mxu0 0.0
    %306 = vmatpush1.msra.mxu0 %v71
    %307 = vmatprep.subr.mxu0 0.0
    %308 = vmatpush1.msra.mxu0 %v72
    %309 = vmatprep.subr.mxu0 0.0
    %310 = vmatpush1.msra.mxu0 %v73
    %311 = vmatprep.subr.mxu0 0.0
    %312 = vmatpush1.msra.mxu0 %v74
    %313 = vmatprep.subr.mxu0 0.0
    %314 = vmatpush1.msra.mxu0 %v75
    %315 = vmatprep.subr.mxu0 0.0
    %316 = vmatpush1.msra.mxu0 %v76
    %317 = vmatprep.subr.mxu0 0.0
    %318 = vmatpush1.msra.mxu0 %v77
    %319 = vmatprep.subr.mxu0 0.0
    %320 = vmatpush1.msra.mxu0 %v78
    %321 = vmatprep.subr.mxu0 0.0
    %322 = vmatpush1.msra.mxu0 %v79
    %323 = vmatprep.subr.mxu0 0.0
    %324 = vmatpush1.msra.mxu0 %v80
    %325 = vmatprep.subr.mxu0 0.0
    %326 = vmatpush1.msra.mxu0 %v81
    %327 = vmatprep.subr.mxu0 0.0
    %328 = vmatpush1.msra.mxu0 %v82
    %329 = vmatprep.subr.mxu0 0.0
    %330 = vmatpush1.msra.mxu0 %v83
    %331 = vmatprep.subr.mxu0 0.0
    %332 = vmatpush1.msra.mxu0 %v84
    %333 = vmatprep.subr.mxu0 0.0
    %334 = vmatpush1.msra.mxu0 %v85
    %335 = vmatprep.mubr.f32.mxu0 %v175
    %336 = vmatmul.mubr.f32.gmra.mrb[0].mxu0 %v173
    %v337 = vpop.f32.mrb[0].mxu0
    %v338 = vadd.f32 %v268, %v337
    %v339 = vpop.f32.mrb[0].mxu0
    %340 = vdwg.mxu0
    %341 = vmatprep.subr.mxu0 0.0
    %342 = vmatpush1.msra.mxu0 %v86
    %343 = vmatprep.subr.mxu0 0.0
    %344 = vmatpush1.msra.mxu0 %v87
    %345 = vmatprep.subr.mxu0 0.0
    %346 = vmatpush1.msra.mxu0 %v88
    %347 = vmatprep.subr.mxu0 0.0
    %348 = vmatpush1.msra.mxu0 %v89
    %349 = vmatprep.subr.mxu0 0.0
    %350 = vmatpush1.msra.mxu0 %v90
    %351 = vmatprep.subr.mxu0 0.0
    %352 = vmatpush1.msra.mxu0 %v91
    %353 = vmatprep.subr.mxu0 0.0
    %354 = vmatpush1.msra.mxu0 %v92
    %355 = vmatprep.subr.mxu0 0.0
    %356 = vmatpush1.msra.mxu0 %v93
    %357 = vmatprep.subr.mxu0 0.0
    %358 = vmatpush1.msra.mxu0 %v94
    %359 = vmatprep.subr.mxu0 0.0
    %360 = vmatpush1.msra.mxu0 %v95
    %361 = vmatprep.subr.mxu0 0.0
    %362 = vmatpush1.msra.mxu0 %v96
    %363 = vmatprep.subr.mxu0 0.0
    %364 = vmatpush1.msra.mxu0 %v97
    %365 = vmatprep.subr.mxu0 0.0
    %366 = vmatpush1.msra.mxu0 %v98
    %367 = vmatprep.subr.mxu0 0.0
    %368 = vmatpush1.msra.mxu0 %v99
    %369 = vmatprep.subr.mxu0 0.0
    %370 = vmatpush1.msra.mxu0 %v100
    %371 = vmatprep.subr.mxu0 0.0
    %372 = vmatpush1.msra.mxu0 %v101
    %373 = vmatprep.subr.mxu0 0.0
    %374 = vmatpush1.msra.mxu0 %v102
    %375 = vmatprep.subr.mxu0 0.0
    %376 = vmatpush1.msra.mxu0 %v103
    %377 = vmatprep.subr.mxu0 0.0
    %378 = vmatpush1.msra.mxu0 %v104
    %379 = vmatprep.subr.mxu0 0.0
    %380 = vmatpush1.msra.mxu0 %v105
    %381 = vmatprep.subr.mxu0 0.0
    %382 = vmatpush1.msra.mxu0 %v106
    %383 = vmatprep.subr.mxu0 0.0
    %384 = vmatpush1.msra.mxu0 %v107
    %385 = vmatprep.subr.mxu0 0.0
    %386 = vmatpush1.msra.mxu0 %v108
    %387 = vmatprep.subr.mxu0 0.0
    %388 = vmatpush1.msra.mxu0 %v109
    %389 = vmatprep.subr.mxu0 0.0
    %390 = vmatpush1.msra.mxu0 %v110
    %391 = vmatprep.subr.mxu0 0.0
    %392 = vmatpush1.msra.mxu0 %v111
    %393 = vmatprep.subr.mxu0 0.0
    %394 = vmatpush1.msra.mxu0 %v112
    %395 = vmatprep.subr.mxu0 0.0
    %396 = vmatpush1.msra.mxu0 %v113
    %397 = vmatprep.subr.mxu0 0.0
    %398 = vmatpush1.msra.mxu0 %v114
    %399 = vmatprep.subr.mxu0 0.0
    %400 = vmatpush1.msra.mxu0 %v115
    %401 = vmatprep.subr.mxu0 0.0
    %402 = vmatpush1.msra.mxu0 %v116
    %403 = vmatprep.subr.mxu0 0.0
    %404 = vmatpush1.msra.mxu0 %v117
    %405 = vmatprep.mubr.f32.mxu0 %v191
    %406 = vmatmul.mubr.f32.gmra.mrb[0].mxu0 %v183
    %v407 = vpop.f32.mrb[0].mxu0
    %v408 = vadd.f32 %v338, %v407
    %v409 = vpop.f32.mrb[0].mxu0
    %410 = vdwg.mxu0
    %411 = vmatprep.subr.mxu0 0.0
    %412 = vmatpush1.msra.mxu0 %v118
    %413 = vmatprep.subr.mxu0 0.0
    %414 = vmatpush1.msra.mxu0 %v119
    %415 = vmatprep.subr.mxu0 0.0
    %416 = vmatpush1.msra.mxu0 %v120
    %417 = vmatprep.subr.mxu0 0.0
    %418 = vmatpush1.msra.mxu0 %v121
    %419 = vmatprep.subr.mxu0 0.0
    %420 = vmatpush1.msra.mxu0 %v122
    %421 = vmatprep.subr.mxu0 0.0
    %422 = vmatpush1.msra.mxu0 %v123
    %423 = vmatprep.subr.mxu0 0.0
    %424 = vmatpush1.msra.mxu0 %v124
    %425 = vmatprep.subr.mxu0 0.0
    %426 = vmatpush1.msra.mxu0 %v125
    %427 = vmatprep.subr.mxu0 0.0
    %428 = vmatpush1.msra.mxu0 %v126
    %429 = vmatprep.subr.mxu0 0.0
    %430 = vmatpush1.msra.mxu0 %v127
    %431 = vmatprep.subr.mxu0 0.0
    %432 = vmatpush1.msra.mxu0 %v128
    %433 = vmatprep.subr.mxu0 0.0
    %434 = vmatpush1.msra.mxu0 %v129
    %435 = vmatprep.subr.mxu0 0.0
    %436 = vmatpush1.msra.mxu0 %v130
    %437 = vmatprep.subr.mxu0 0.0
    %438 = vmatpush1.msra.mxu0 %v131
    %439 = vmatprep.subr.mxu0 0.0
    %440 = vmatpush1.msra.mxu0 %v132
    %441 = vmatprep.subr.mxu0 0.0
    %442 = vmatpush1.msra.mxu0 %v133
    %443 = vmatprep.subr.mxu0 0.0
    %444 = vmatpush1.msra.mxu0 %v134
    %445 = vmatprep.subr.mxu0 0.0
    %446 = vmatpush1.msra.mxu0 %v135
    %447 = vmatprep.subr.mxu0 0.0
    %448 = vmatpush1.msra.mxu0 %v136
    %449 = vmatprep.subr.mxu0 0.0
    %450 = vmatpush1.msra.mxu0 %v137
    %451 = vmatprep.subr.mxu0 0.0
    %452 = vmatpush1.msra.mxu0 %v138
    %453 = vmatprep.subr.mxu0 0.0
    %454 = vmatpush1.msra.mxu0 %v139
    %455 = vmatprep.subr.mxu0 0.0
    %456 = vmatpush1.msra.mxu0 %v140
    %457 = vmatprep.subr.mxu0 0.0
    %458 = vmatpush1.msra.mxu0 %v141
    %459 = vmatprep.subr.mxu0 0.0
    %460 = vmatpush1.msra.mxu0 %v142
    %461 = vmatprep.subr.mxu0 0.0
    %462 = vmatpush1.msra.mxu0 %v143
    %463 = vmatprep.subr.mxu0 0.0
    %464 = vmatpush1.msra.mxu0 %v144
    %465 = vmatprep.subr.mxu0 0.0
    %466 = vmatpush1.msra.mxu0 %v145
    %467 = vmatprep.subr.mxu0 0.0
    %468 = vmatpush1.msra.mxu0 %v146
    %469 = vmatprep.subr.mxu0 0.0
    %470 = vmatpush1.msra.mxu0 %v147
    %471 = vmatprep.subr.mxu0 0.0
    %472 = vmatpush1.msra.mxu0 %v148
    %473 = vmatprep.subr.mxu0 0.0
    %474 = vmatpush1.msra.mxu0 %v149
    %475 = vmatprep.mubr.f32.mxu0 %v192
    %476 = vmatmul.mubr.f32.gmra.mrb[0].mxu0 %v190
    %v477 = vpop.f32.mrb[0].mxu0
    %v478 = vadd.f32 %v408, %v477
    %v479 = vpop.f32.mrb[0].mxu0
    %480 = vdwg.mxu0
    %v481 = vmax.f32 %v478, 0.0
    %482 = vst [vmem:[#allocation2] sm:$0x3] %v481
    %v483 = vld [vmem:[%s3] sm:$0x1]
    %v485 = vlaneseq
    %v486 = vshrl.u32 %v485, 7
    %v487 = vsub.s32 0, %v486
    %v488 = vrot.slane %v483, %v487
    %v490 = vmul.f32 %v481, %v488
    %vm491 = vcmask 1041408
    %v492 = vsel %vm491, %v490, 0.0
    %493 = vadd.xlane.f32.xlu0 %v492
    %v494 = vpop.xlane.xlu0 %493
    %vm495 = vcmask 1024
    %496 = vst.msk [vmem:[%s5] sm:$0x3] %vm495, %v494
    // Predicated region
    $region18: #{mini_conv_forward.7} parent=1 // pred_check
      _
    $region19: #{mini_conv_forward.7} parent=1 // pred_check_branch
      %498 = sbr.rel (0) target = $region21
    $region20: #{mini_conv_forward.7} parent=1 // pred_region
      %s500 = ssub.s32 32, 32
      %501 = vsyncadd [#allocation3], %s500
      %s503 = sshll.u32 [#allocation2], 4
      %s504 = int_to_ptr.vmem [resolvable:$true] %s503
      %506 = dma.vmem_to_hbm [thread:$0]  %s504, 32, %s4, [#allocation3]
    $region21: #{mini_conv_forward.7} parent=1 // pred_fallthru
      _
    // Predicated region
    $region22: #{mini_conv_forward.7} parent=1 // pred_check
      _
    $region23: #{mini_conv_forward.7} parent=1 // pred_check_branch
      %508 = sbr.rel (0) target = $region25
    $region24: #{mini_conv_forward.7} parent=1 // pred_region
      _
    $region25: #{mini_conv_forward.7} parent=1 // pred_fallthru
      _
    // Predicated region
    $region26: #{mini_conv_forward.7} parent=1 // pred_check
      _
    $region27: #{mini_conv_forward.7} parent=1 // pred_check_branch
      %510 = sbr.rel (0) target = $region29
    $region28: #{mini_conv_forward.7} parent=1 // pred_region
      %511 = dma.done [#allocation3], 32
    $region29: #{mini_conv_forward.7} parent=1 // pred_fallthru
      _
    // Predicated region
    $region30: #{mini_conv_forward.7} parent=1 // pred_check
      _
    $region31: #{mini_conv_forward.7} parent=1 // pred_check_branch
      %513 = sbr.rel (0) target = $region33
    $region32: #{mini_conv_forward.7} parent=1 // pred_region
      _
    $region33: #{mini_conv_forward.7} parent=1 // pred_fallthru
      _
    %514 = vsyncpa [#allocation3], 1

// kernel: mini_conv_forward.6
$region0: #{mini_conv_forward.6}
  #allocation0 [shape = 'u32[]', space=smem, size = 0x4, offset = 0x4, fixed_abs, tag = 'smem constant byte address 0x4 - core index']
  #allocation1 [shape = 'u32[144,128]{1,0:T(1,128)}', space=vmem, size = 0x12000, scoped, tag = 'internal scratch']
  %s0 = inlined_call_operand.vmem [shape: bf16[32,512], index: 0, kind: input, shape index: {}]
  %s1 = inlined_call_operand.vmem [shape: bf16[512,512], index: 1, kind: input, shape index: {}]
  %s2 = inlined_call_operand.vmem [shape: f32[1,128], index: 2, kind: input, shape index: {}]
  %s3 = inlined_call_operand.vmem [shape: f32[1,128], index: 3, kind: input, shape index: {}]
  %s4 = inlined_call_operand.vmem [shape: f32[1,128], index: 4, kind: input, shape index: {}]
  %s5 = inlined_call_operand.vmem [shape: f32[32,128], index: 5, kind: output, shape index: {}]
  %s6 = sld [smem:[#allocation0]]
  $region30: #{mini_conv_forward.6} parent=0
    _
  %s8 = ssub.s32 1, %s6
  %s9 = scalar_select 0, %s8, %s6
  // Predicated region
  $region2: #{mini_conv_forward.6} parent=0 // pred_check
    _
  $region3: #{mini_conv_forward.6} parent=0 // pred_check_branch
    %11 = sbr.rel (0) target = $region5
  $region4: #{mini_conv_forward.6} parent=0 // pred_region
    _
  $region5: #{mini_conv_forward.6} parent=0 // pred_fallthru
    _
  // Predicated region
  $region6: #{mini_conv_forward.6} parent=0 // pred_check
    _
  $region7: #{mini_conv_forward.6} parent=0 // pred_check_branch
    %13 = sbr.rel (0) target = $region9
  $region8: #{mini_conv_forward.6} parent=0 // pred_region
    _
  $region9: #{mini_conv_forward.6} parent=0 // pred_fallthru
    _
  // Predicated region
  $region10: #{mini_conv_forward.6} parent=0 // pred_check
    _
  $region11: #{mini_conv_forward.6} parent=0 // pred_check_branch
    %15 = sbr.rel (0) target = $region13
  $region12: #{mini_conv_forward.6} parent=0 // pred_region
    _
  $region13: #{mini_conv_forward.6} parent=0 // pred_fallthru
    _
  // Predicated region
  $region14: #{mini_conv_forward.6} parent=0 // pred_check
    _
  $region15: #{mini_conv_forward.6} parent=0 // pred_check_branch
    %17 = sbr.rel (0) target = $region17
  $region16: #{mini_conv_forward.6} parent=0 // pred_region
    _
  $region17: #{mini_conv_forward.6} parent=0 // pred_fallthru
    _
  // Predicated region
  $region18: #{mini_conv_forward.6} parent=0 // pred_check
    _
  $region19: #{mini_conv_forward.6} parent=0 // pred_check_branch
    %19 = sbr.rel (0) target = $region21
  $region20: #{mini_conv_forward.6} parent=0 // pred_region
    _
  $region21: #{mini_conv_forward.6} parent=0 // pred_fallthru
    _
  %v20 = vld [vmem:[%s0] sm:$0xff]
  %v21 = vld [vmem:[%s0 + $0x8] sm:$0xff]
  %v22 = vld [vmem:[%s0 + $0x10] sm:$0xff]
  %v23 = vld [vmem:[%s0 + $0x18] sm:$0xff]
  %v24 = vld [vmem:[%s0 + $0x20] sm:$0xff]
  %v25 = vld [vmem:[%s0 + $0x28] sm:$0xff]
  %v26 = vld [vmem:[%s0 + $0x30] sm:$0xff]
  %v27 = vld [vmem:[%s0 + $0x38] sm:$0xff]
  %v28 = vld [vmem:[%s1] sm:$0xff]
  %v29 = vld [vmem:[%s1 + $0x8] sm:$0xff]
  %v30 = vld [vmem:[%s1 + $0x10] sm:$0xff]
  %v31 = vld [vmem:[%s1 + $0x18] sm:$0xff]
  %v32 = vld [vmem:[%s1 + $0x20] sm:$0xff]
  %v33 = vld [vmem:[%s1 + $0x28] sm:$0xff]
  %v34 = vld [vmem:[%s1 + $0x30] sm:$0xff]
  %v35 = vld [vmem:[%s1 + $0x38] sm:$0xff]
  %v36 = vld [vmem:[%s1 + $0x40] sm:$0xff]
  %v37 = vld [vmem:[%s1 + $0x48] sm:$0xff]
  %v38 = vld [vmem:[%s1 + $0x50] sm:$0xff]
  %v39 = vld [vmem:[%s1 + $0x58] sm:$0xff]
  %v40 = vld [vmem:[%s1 + $0x60] sm:$0xff]
  %v41 = vld [vmem:[%s1 + $0x68] sm:$0xff]
  %v42 = vld [vmem:[%s1 + $0x70] sm:$0xff]
  %v43 = vld [vmem:[%s1 + $0x78] sm:$0xff]
  %v44 = vld [vmem:[%s1 + $0x80] sm:$0xff]
  %v45 = vld [vmem:[%s1 + $0x88] sm:$0xff]
  %v46 = vld [vmem:[%s1 + $0x90] sm:$0xff]
  %v47 = vld [vmem:[%s1 + $0x98] sm:$0xff]
  %v48 = vld [vmem:[%s1 + $0xa0] sm:$0xff]
  %v49 = vld [vmem:[%s1 + $0xa8] sm:$0xff]
  %v50 = vld [vmem:[%s1 + $0xb0] sm:$0xff]
  %v51 = vld [vmem:[%s1 + $0xb8] sm:$0xff]
  %v52 = vld [vmem:[%s1 + $0xc0] sm:$0xff]
  %v53 = vld [vmem:[%s1 + $0xc8] sm:$0xff]
  %v54 = vld [vmem:[%s1 + $0xd0] sm:$0xff]
  %v55 = vld [vmem:[%s1 + $0xd8] sm:$0xff]
  %v56 = vld [vmem:[%s1 + $0xe0] sm:$0xff]
  %v57 = vld [vmem:[%s1 + $0xe8] sm:$0xff]
  %v58 = vld [vmem:[%s1 + $0xf0] sm:$0xff]
  %v59 = vld [vmem:[%s1 + $0xf8] sm:$0xff]
  %v60 = vld [vmem:[%s1 + $0x100] sm:$0xff]
  %v61 = vld [vmem:[%s1 + $0x108] sm:$0xff]
  %v62 = vld [vmem:[%s1 + $0x110] sm:$0xff]
  %v63 = vld [vmem:[%s1 + $0x118] sm:$0xff]
  %v64 = vld [vmem:[%s1 + $0x120] sm:$0xff]
  %v65 = vld [vmem:[%s1 + $0x128] sm:$0xff]
  %v66 = vld [vmem:[%s1 + $0x130] sm:$0xff]
  %v67 = vld [vmem:[%s1 + $0x138] sm:$0xff]
  %v68 = vld [vmem:[%s1 + $0x140] sm:$0xff]
  %v69 = vld [vmem:[%s1 + $0x148] sm:$0xff]
  %v70 = vld [vmem:[%s1 + $0x150] sm:$0xff]
  %v71 = vld [vmem:[%s1 + $0x158] sm:$0xff]
  %v72 = vld [vmem:[%s1 + $0x160] sm:$0xff]
  %v73 = vld [vmem:[%s1 + $0x168] sm:$0xff]
  %v74 = vld [vmem:[%s1 + $0x170] sm:$0xff]
  %v75 = vld [vmem:[%s1 + $0x178] sm:$0xff]
  %v76 = vld [vmem:[%s1 + $0x180] sm:$0xff]
  %v77 = vld [vmem:[%s1 + $0x188] sm:$0xff]
  %v78 = vld [vmem:[%s1 + $0x190] sm:$0xff]
  %v79 = vld [vmem:[%s1 + $0x198] sm:$0xff]
  %v80 = vld [vmem:[%s1 + $0x1a0] sm:$0xff]
  %v81 = vld [vmem:[%s1 + $0x1a8] sm:$0xff]
  %v82 = vld [vmem:[%s1 + $0x1b0] sm:$0xff]
  %v83 = vld [vmem:[%s1 + $0x1b8] sm:$0xff]
  %v84 = vld [vmem:[%s1 + $0x1c0] sm:$0xff]
  %v85 = vld [vmem:[%s1 + $0x1c8] sm:$0xff]
  %v86 = vld [vmem:[%s1 + $0x1d0] sm:$0xff]
  %v87 = vld [vmem:[%s1 + $0x1d8] sm:$0xff]
  %v88 = vld [vmem:[%s1 + $0x1e0] sm:$0xff]
  %v89 = vld [vmem:[%s1 + $0x1e8] sm:$0xff]
  %v90 = vld [vmem:[%s1 + $0x1f0] sm:$0xff]
  %v91 = vld [vmem:[%s1 + $0x1f8] sm:$0xff]
  %v92 = vld [vmem:[%s1 + $0x200] sm:$0xff]
  %v93 = vld [vmem:[%s1 + $0x208] sm:$0xff]
  %v94 = vld [vmem:[%s1 + $0x210] sm:$0xff]
  %v95 = vld [vmem:[%s1 + $0x218] sm:$0xff]
  %v96 = vld [vmem:[%s1 + $0x220] sm:$0xff]
  %v97 = vld [vmem:[%s1 + $0x228] sm:$0xff]
  %v98 = vld [vmem:[%s1 + $0x230] sm:$0xff]
  %v99 = vld [vmem:[%s1 + $0x238] sm:$0xff]
  %v100 = vld [vmem:[%s1 + $0x240] sm:$0xff]
  %v101 = vld [vmem:[%s1 + $0x248] sm:$0xff]
  %v102 = vld [vmem:[%s1 + $0x250] sm:$0xff]
  %v103 = vld [vmem:[%s1 + $0x258] sm:$0xff]
  %v104 = vld [vmem:[%s1 + $0x260] sm:$0xff]
  %v105 = vld [vmem:[%s1 + $0x268] sm:$0xff]
  %v106 = vld [vmem:[%s1 + $0x270] sm:$0xff]
  %v107 = vld [vmem:[%s1 + $0x278] sm:$0xff]
  %v108 = vld [vmem:[%s1 + $0x280] sm:$0xff]
  %v109 = vld [vmem:[%s1 + $0x288] sm:$0xff]
  %v110 = vld [vmem:[%s1 + $0x290] sm:$0xff]
  %v111 = vld [vmem:[%s1 + $0x298] sm:$0xff]
  %v112 = vld [vmem:[%s1 + $0x2a0] sm:$0xff]
  %v113 = vld [vmem:[%s1 + $0x2a8] sm:$0xff]
  %v114 = vld [vmem:[%s1 + $0x2b0] sm:$0xff]
  %v115 = vld [vmem:[%s1 + $0x2b8] sm:$0xff]
  %v116 = vld [vmem:[%s1 + $0x2c0] sm:$0xff]
  %v117 = vld [vmem:[%s1 + $0x2c8] sm:$0xff]
  %v118 = vld [vmem:[%s1 + $0x2d0] sm:$0xff]
  %v119 = vld [vmem:[%s1 + $0x2d8] sm:$0xff]
  %v120 = vld [vmem:[%s1 + $0x2e0] sm:$0xff]
  %v121 = vld [vmem:[%s1 + $0x2e8] sm:$0xff]
  %v122 = vld [vmem:[%s1 + $0x2f0] sm:$0xff]
  %v123 = vld [vmem:[%s1 + $0x2f8] sm:$0xff]
  %v124 = vld [vmem:[%s1 + $0x300] sm:$0xff]
  %v125 = vld [vmem:[%s1 + $0x308] sm:$0xff]
  %v126 = vld [vmem:[%s1 + $0x310] sm:$0xff]
  %v127 = vld [vmem:[%s1 + $0x318] sm:$0xff]
  %v128 = vld [vmem:[%s1 + $0x320] sm:$0xff]
  %v129 = vld [vmem:[%s1 + $0x328] sm:$0xff]
  %v130 = vld [vmem:[%s1 + $0x330] sm:$0xff]
  %v131 = vld [vmem:[%s1 + $0x338] sm:$0xff]
  %v132 = vld [vmem:[%s1 + $0x340] sm:$0xff]
  %v133 = vld [vmem:[%s1 + $0x348] sm:$0xff]
  %v134 = vld [vmem:[%s1 + $0x350] sm:$0xff]
  %v135 = vld [vmem:[%s1 + $0x358] sm:$0xff]
  %v136 = vld [vmem:[%s1 + $0x360] sm:$0xff]
  %v137 = vld [vmem:[%s1 + $0x368] sm:$0xff]
  %v138 = vld [vmem:[%s1 + $0x370] sm:$0xff]
  %v139 = vld [vmem:[%s1 + $0x378] sm:$0xff]
  %v140 = vld [vmem:[%s1 + $0x380] sm:$0xff]
  %v141 = vld [vmem:[%s1 + $0x388] sm:$0xff]
  %v142 = vld [vmem:[%s1 + $0x390] sm:$0xff]
  %v143 = vld [vmem:[%s1 + $0x398] sm:$0xff]
  %v144 = vld [vmem:[%s1 + $0x3a0] sm:$0xff]
  %v145 = vld [vmem:[%s1 + $0x3a8] sm:$0xff]
  %v146 = vld [vmem:[%s1 + $0x3b0] sm:$0xff]
  %v147 = vld [vmem:[%s1 + $0x3b8] sm:$0xff]
  %v148 = vld [vmem:[%s1 + $0x3c0] sm:$0xff]
  %v149 = vld [vmem:[%s1 + $0x3c8] sm:$0xff]
  %v150 = vld [vmem:[%s1 + $0x3d0] sm:$0xff]
  %v151 = vld [vmem:[%s1 + $0x3d8] sm:$0xff]
  %v152 = vld [vmem:[%s1 + $0x3e0] sm:$0xff]
  %v153 = vld [vmem:[%s1 + $0x3e8] sm:$0xff]
  %v154 = vld [vmem:[%s1 + $0x3f0] sm:$0xff]
  %v155 = vld [vmem:[%s1 + $0x3f8] sm:$0xff]
  %v164 = vunpack.c.l.b16 %v20
  %v165 = vunpack.c.h.b16 %v20
  %v166 = vunpack.c.l.b16 %v21
  %v167 = vunpack.c.h.b16 %v21
  %v168 = vunpack.c.l.b16 %v22
  %v169 = vunpack.c.h.b16 %v22
  %v170 = vunpack.c.l.b16 %v23
  %v171 = vunpack.c.h.b16 %v23
  %v172 = vunpack.c.l.b16 %v24
  %v173 = vunpack.c.h.b16 %v24
  %v174 = vunpack.c.l.b16 %v25
  %v175 = vunpack.c.h.b16 %v25
  %v176 = vunpack.c.l.b16 %v26
  %v177 = vunpack.c.h.b16 %v26
  %v178 = vunpack.c.l.b16 %v27
  %v179 = vunpack.c.h.b16 %v27
  %v180 = vpack.c.b16 %v168, %v164
  %v181 = vpack.c.b16 %v169, %v165
  %v182 = vpack.c.b16 %v170, %v166
  %v183 = vpack.c.b16 %v171, %v167
  %v184 = vpack.c.b16 %v176, %v172
  %v185 = vpack.c.b16 %v177, %v173
  %v186 = vpack.c.b16 %v178, %v174
  %v187 = vpack.c.b16 %v179, %v175
  %v324 = vunpack.c.l.b16 %v28
  %v325 = vunpack.c.h.b16 %v28
  %v326 = vunpack.c.l.b16 %v29
  %v327 = vunpack.c.h.b16 %v29
  %v328 = vunpack.c.l.b16 %v30
  %v329 = vunpack.c.h.b16 %v30
  %v330 = vunpack.c.l.b16 %v31
  %v331 = vunpack.c.h.b16 %v31
  %v332 = vunpack.c.l.b16 %v32
  %v333 = vunpack.c.h.b16 %v32
  %v334 = vunpack.c.l.b16 %v33
  %v335 = vunpack.c.h.b16 %v33
  %v336 = vunpack.c.l.b16 %v34
  %v337 = vunpack.c.h.b16 %v34
  %v338 = vunpack.c.l.b16 %v35
  %v339 = vunpack.c.h.b16 %v35
  %v340 = vunpack.c.l.b16 %v36
  %v341 = vunpack.c.h.b16 %v36
  %v342 = vunpack.c.l.b16 %v37
  %v343 = vunpack.c.h.b16 %v37
  %v344 = vunpack.c.l.b16 %v38
  %v345 = vunpack.c.h.b16 %v38
  %v346 = vunpack.c.l.b16 %v39
  %v347 = vunpack.c.h.b16 %v39
  %v348 = vunpack.c.l.b16 %v40
  %v349 = vunpack.c.h.b16 %v40
  %v350 = vunpack.c.l.b16 %v41
  %v351 = vunpack.c.h.b16 %v41
  %v352 = vunpack.c.l.b16 %v42
  %v353 = vunpack.c.h.b16 %v42
  %v354 = vunpack.c.l.b16 %v43
  %v355 = vunpack.c.h.b16 %v43
  %v356 = vunpack.c.l.b16 %v44
  %v357 = vunpack.c.h.b16 %v44
  %v358 = vunpack.c.l.b16 %v45
  %v359 = vunpack.c.h.b16 %v45
  %v360 = vunpack.c.l.b16 %v46
  %v361 = vunpack.c.h.b16 %v46
  %v362 = vunpack.c.l.b16 %v47
  %v363 = vunpack.c.h.b16 %v47
  %v364 = vunpack.c.l.b16 %v48
  %v365 = vunpack.c.h.b16 %v48
  %v366 = vunpack.c.l.b16 %v49
  %v367 = vunpack.c.h.b16 %v49
  %v368 = vunpack.c.l.b16 %v50
  %v369 = vunpack.c.h.b16 %v50
  %v370 = vunpack.c.l.b16 %v51
  %v371 = vunpack.c.h.b16 %v51
  %v372 = vunpack.c.l.b16 %v52
  %v373 = vunpack.c.h.b16 %v52
  %v374 = vunpack.c.l.b16 %v53
  %v375 = vunpack.c.h.b16 %v53
  %v376 = vunpack.c.l.b16 %v54
  %v377 = vunpack.c.h.b16 %v54
  %v378 = vunpack.c.l.b16 %v55
  %v379 = vunpack.c.h.b16 %v55
  %v380 = vunpack.c.l.b16 %v56
  %v381 = vunpack.c.h.b16 %v56
  %v382 = vunpack.c.l.b16 %v57
  %v383 = vunpack.c.h.b16 %v57
  %v384 = vunpack.c.l.b16 %v58
  %v385 = vunpack.c.h.b16 %v58
  %v386 = vunpack.c.l.b16 %v59
  %v387 = vunpack.c.h.b16 %v59
  %v388 = vunpack.c.l.b16 %v60
  %v389 = vunpack.c.h.b16 %v60
  %v390 = vunpack.c.l.b16 %v61
  %v391 = vunpack.c.h.b16 %v61
  %v392 = vunpack.c.l.b16 %v62
  %v393 = vunpack.c.h.b16 %v62
  %v394 = vunpack.c.l.b16 %v63
  %v395 = vunpack.c.h.b16 %v63
  %v396 = vunpack.c.l.b16 %v64
  %v397 = vunpack.c.h.b16 %v64
  %v398 = vunpack.c.l.b16 %v65
  %v399 = vunpack.c.h.b16 %v65
  %v400 = vunpack.c.l.b16 %v66
  %v401 = vunpack.c.h.b16 %v66
  %v402 = vunpack.c.l.b16 %v67
  %v403 = vunpack.c.h.b16 %v67
  %v404 = vunpack.c.l.b16 %v68
  %v405 = vunpack.c.h.b16 %v68
  %v406 = vunpack.c.l.b16 %v69
  %v407 = vunpack.c.h.b16 %v69
  %v408 = vunpack.c.l.b16 %v70
  %v409 = vunpack.c.h.b16 %v70
  %v410 = vunpack.c.l.b16 %v71
  %v411 = vunpack.c.h.b16 %v71
  %v412 = vunpack.c.l.b16 %v72
  %v413 = vunpack.c.h.b16 %v72
  %v414 = vunpack.c.l.b16 %v73
  %v415 = vunpack.c.h.b16 %v73
  %v416 = vunpack.c.l.b16 %v74
  %v417 = vunpack.c.h.b16 %v74
  %v418 = vunpack.c.l.b16 %v75
  %v419 = vunpack.c.h.b16 %v75
  %v420 = vunpack.c.l.b16 %v76
  %v421 = vunpack.c.h.b16 %v76
  %v422 = vunpack.c.l.b16 %v77
  %v423 = vunpack.c.h.b16 %v77
  %v424 = vunpack.c.l.b16 %v78
  %v425 = vunpack.c.h.b16 %v78
  %v426 = vunpack.c.l.b16 %v79
  %v427 = vunpack.c.h.b16 %v79
  %v428 = vunpack.c.l.b16 %v80
  %v429 = vunpack.c.h.b16 %v80
  %v430 = vunpack.c.l.b16 %v81
  %v431 = vunpack.c.h.b16 %v81
  %v432 = vunpack.c.l.b16 %v82
  %v433 = vunpack.c.h.b16 %v82
  %v434 = vunpack.c.l.b16 %v83
  %v435 = vunpack.c.h.b16 %v83
  %v436 = vunpack.c.l.b16 %v84
  %v437 = vunpack.c.h.b16 %v84
  %v438 = vunpack.c.l.b16 %v85
  %v439 = vunpack.c.h.b16 %v85
  %v440 = vunpack.c.l.b16 %v86
  %v441 = vunpack.c.h.b16 %v86
  %v442 = vunpack.c.l.b16 %v87
  %v443 = vunpack.c.h.b16 %v87
  %v444 = vunpack.c.l.b16 %v88
  %v445 = vunpack.c.h.b16 %v88
  %v446 = vunpack.c.l.b16 %v89
  %v447 = vunpack.c.h.b16 %v89
  %v448 = vunpack.c.l.b16 %v90
  %v449 = vunpack.c.h.b16 %v90
  %v450 = vunpack.c.l.b16 %v91
  %v451 = vunpack.c.h.b16 %v91
  %v452 = vunpack.c.l.b16 %v92
  %v453 = vunpack.c.h.b16 %v92
  %v454 = vunpack.c.l.b16 %v93
  %v455 = vunpack.c.h.b16 %v93
  %v456 = vunpack.c.l.b16 %v94
  %v457 = vunpack.c.h.b16 %v94
  %v458 = vunpack.c.l.b16 %v95
  %v459 = vunpack.c.h.b16 %v95
  %v460 = vunpack.c.l.b16 %v96
  %v461 = vunpack.c.h.b16 %v96
  %v462 = vunpack.c.l.b16 %v97
  %v463 = vunpack.c.h.b16 %v97
  %v464 = vunpack.c.l.b16 %v98
  %v465 = vunpack.c.h.b16 %v98
  %v466 = vunpack.c.l.b16 %v99
  %v467 = vunpack.c.h.b16 %v99
  %v468 = vunpack.c.l.b16 %v100
  %v469 = vunpack.c.h.b16 %v100
  %v470 = vunpack.c.l.b16 %v101
  %v471 = vunpack.c.h.b16 %v101
  %v472 = vunpack.c.l.b16 %v102
  %v473 = vunpack.c.h.b16 %v102
  %v474 = vunpack.c.l.b16 %v103
  %v475 = vunpack.c.h.b16 %v103
  %v476 = vunpack.c.l.b16 %v104
  %v477 = vunpack.c.h.b16 %v104
  %v478 = vunpack.c.l.b16 %v105
  %v479 = vunpack.c.h.b16 %v105
  %v480 = vunpack.c.l.b16 %v106
  %v481 = vunpack.c.h.b16 %v106
  %v482 = vunpack.c.l.b16 %v107
  %v483 = vunpack.c.h.b16 %v107
  %v484 = vunpack.c.l.b16 %v108
  %v485 = vunpack.c.h.b16 %v108
  %v486 = vunpack.c.l.b16 %v109
  %v487 = vunpack.c.h.b16 %v109
  %v488 = vunpack.c.l.b16 %v110
  %v489 = vunpack.c.h.b16 %v110
  %v490 = vunpack.c.l.b16 %v111
  %v491 = vunpack.c.h.b16 %v111
  %v492 = vunpack.c.l.b16 %v112
  %v493 = vunpack.c.h.b16 %v112
  %v494 = vunpack.c.l.b16 %v113
  %v495 = vunpack.c.h.b16 %v113
  %v496 = vunpack.c.l.b16 %v114
  %v497 = vunpack.c.h.b16 %v114
  %v498 = vunpack.c.l.b16 %v115
  %v499 = vunpack.c.h.b16 %v115
  %v500 = vunpack.c.l.b16 %v116
  %v501 = vunpack.c.h.b16 %v116
  %v502 = vunpack.c.l.b16 %v117
  %v503 = vunpack.c.h.b16 %v117
  %v504 = vunpack.c.l.b16 %v118
  %v505 = vunpack.c.h.b16 %v118
  %v506 = vunpack.c.l.b16 %v119
  %v507 = vunpack.c.h.b16 %v119
  %v508 = vunpack.c.l.b16 %v120
  %v509 = vunpack.c.h.b16 %v120
  %v510 = vunpack.c.l.b16 %v121
  %v511 = vunpack.c.h.b16 %v121
  %v512 = vunpack.c.l.b16 %v122
  %v513 = vunpack.c.h.b16 %v122
  %v514 = vunpack.c.l.b16 %v123
  %v515 = vunpack.c.h.b16 %v123
  %v516 = vunpack.c.l.b16 %v124
  %v517 = vunpack.c.h.b16 %v124
  %v518 = vunpack.c.l.b16 %v125
  %v519 = vunpack.c.h.b16 %v125
  %v520 = vunpack.c.l.b16 %v126
  %v521 = vunpack.c.h.b16 %v126
  %v522 = vunpack.c.l.b16 %v127
  %v523 = vunpack.c.h.b16 %v127
  %v524 = vunpack.c.l.b16 %v128
  %v525 = vunpack.c.h.b16 %v128
  %v526 = vunpack.c.l.b16 %v129
  %v527 = vunpack.c.h.b16 %v129
  %v528 = vunpack.c.l.b16 %v130
  %v529 = vunpack.c.h.b16 %v130
  %v530 = vunpack.c.l.b16 %v131
  %v531 = vunpack.c.h.b16 %v131
  %v532 = vunpack.c.l.b16 %v132
  %v533 = vunpack.c.h.b16 %v132
  %v534 = vunpack.c.l.b16 %v133
  %v535 = vunpack.c.h.b16 %v133
  %v536 = vunpack.c.l.b16 %v134
  %v537 = vunpack.c.h.b16 %v134
  %v538 = vunpack.c.l.b16 %v135
  %v539 = vunpack.c.h.b16 %v135
  %v540 = vunpack.c.l.b16 %v136
  %v541 = vunpack.c.h.b16 %v136
  %v542 = vunpack.c.l.b16 %v137
  %v543 = vunpack.c.h.b16 %v137
  %v544 = vunpack.c.l.b16 %v138
  %v545 = vunpack.c.h.b16 %v138
  %v546 = vunpack.c.l.b16 %v139
  %v547 = vunpack.c.h.b16 %v139
  %v548 = vunpack.c.l.b16 %v140
  %v549 = vunpack.c.h.b16 %v140
  %v550 = vunpack.c.l.b16 %v141
  %v551 = vunpack.c.h.b16 %v141
  %v552 = vunpack.c.l.b16 %v142
  %v553 = vunpack.c.h.b16 %v142
  %v554 = vunpack.c.l.b16 %v143
  %v555 = vunpack.c.h.b16 %v143
  %v556 = vunpack.c.l.b16 %v144
  %v557 = vunpack.c.h.b16 %v144
  %v558 = vunpack.c.l.b16 %v145
  %v559 = vunpack.c.h.b16 %v145
  %v560 = vunpack.c.l.b16 %v146
  %v561 = vunpack.c.h.b16 %v146
  %v562 = vunpack.c.l.b16 %v147
  %v563 = vunpack.c.h.b16 %v147
  %v564 = vunpack.c.l.b16 %v148
  %v565 = vunpack.c.h.b16 %v148
  %v566 = vunpack.c.l.b16 %v149
  %v567 = vunpack.c.h.b16 %v149
  %v568 = vunpack.c.l.b16 %v150
  %v569 = vunpack.c.h.b16 %v150
  %v570 = vunpack.c.l.b16 %v151
  %v571 = vunpack.c.h.b16 %v151
  %v572 = vunpack.c.l.b16 %v152
  %v573 = vunpack.c.h.b16 %v152
  %v574 = vunpack.c.l.b16 %v153
  %v575 = vunpack.c.h.b16 %v153
  %v576 = vunpack.c.l.b16 %v154
  %v577 = vunpack.c.h.b16 %v154
  %v578 = vunpack.c.l.b16 %v155
  %v579 = vunpack.c.h.b16 %v155
  %v580 = vpack.c.b16 %v328, %v324
  %v581 = vpack.c.b16 %v329, %v325
  %v582 = vpack.c.b16 %v330, %v326
  %v583 = vpack.c.b16 %v331, %v327
  %v584 = vpack.c.b16 %v336, %v332
  %v585 = vpack.c.b16 %v337, %v333
  %v586 = vpack.c.b16 %v338, %v334
  %v587 = vpack.c.b16 %v339, %v335
  %v588 = vpack.c.b16 %v344, %v340
  %v589 = vpack.c.b16 %v345, %v341
  %v590 = vpack.c.b16 %v346, %v342
  %v591 = vpack.c.b16 %v347, %v343
  %v592 = vpack.c.b16 %v352, %v348
  %v593 = vpack.c.b16 %v353, %v349
  %v594 = vpack.c.b16 %v354, %v350
  %v595 = vpack.c.b16 %v355, %v351
  %v596 = vpack.c.b16 %v360, %v356
  %v597 = vpack.c.b16 %v361, %v357
  %v598 = vpack.c.b16 %v362, %v358
  %v599 = vpack.c.b16 %v363, %v359
  %v600 = vpack.c.b16 %v368, %v364
  %v601 = vpack.c.b16 %v369, %v365
  %v602 = vpack.c.b16 %v370, %v366
  %v603 = vpack.c.b16 %v371, %v367
  %v604 = vpack.c.b16 %v376, %v372
  %v605 = vpack.c.b16 %v377, %v373
  %v606 = vpack.c.b16 %v378, %v374
  %v607 = vpack.c.b16 %v379, %v375
  %v608 = vpack.c.b16 %v384, %v380
  %v609 = vpack.c.b16 %v385, %v381
  %v610 = vpack.c.b16 %v386, %v382
  %v611 = vpack.c.b16 %v387, %v383
  %v612 = vpack.c.b16 %v392, %v388
  %v613 = vpack.c.b16 %v393, %v389
  %v614 = vpack.c.b16 %v394, %v390
  %v615 = vpack.c.b16 %v395, %v391
  %v616 = vpack.c.b16 %v400, %v396
  %v617 = vpack.c.b16 %v401, %v397
  %v618 = vpack.c.b16 %v402, %v398
  %v619 = vpack.c.b16 %v403, %v399
  %v620 = vpack.c.b16 %v408, %v404
  %v621 = vpack.c.b16 %v409, %v405
  %v622 = vpack.c.b16 %v410, %v406
  %v623 = vpack.c.b16 %v411, %v407
  %v624 = vpack.c.b16 %v416, %v412
  %v625 = vpack.c.b16 %v417, %v413
  %v626 = vpack.c.b16 %v418, %v414
  %v627 = vpack.c.b16 %v419, %v415
  %v628 = vpack.c.b16 %v424, %v420
  %v629 = vpack.c.b16 %v425, %v421
  %v630 = vpack.c.b16 %v426, %v422
  %v631 = vpack.c.b16 %v427, %v423
  %v632 = vpack.c.b16 %v432, %v428
  %v633 = vpack.c.b16 %v433, %v429
  %v634 = vpack.c.b16 %v434, %v430
  %v635 = vpack.c.b16 %v435, %v431
  %v636 = vpack.c.b16 %v440, %v436
  %v637 = vpack.c.b16 %v441, %v437
  %v638 = vpack.c.b16 %v442, %v438
  %v639 = vpack.c.b16 %v443, %v439
  %v640 = vpack.c.b16 %v448, %v444
  %v641 = vpack.c.b16 %v449, %v445
  %v642 = vpack.c.b16 %v450, %v446
  %v643 = vpack.c.b16 %v451, %v447
  %v644 = vpack.c.b16 %v456, %v452
  %v645 = vpack.c.b16 %v457, %v453
  %v646 = vpack.c.b16 %v458, %v454
  %v647 = vpack.c.b16 %v459, %v455
  %v648 = vpack.c.b16 %v464, %v460
  %v649 = vpack.c.b16 %v465, %v461
  %v650 = vpack.c.b16 %v466, %v462
  %v651 = vpack.c.b16 %v467, %v463
  %v652 = vpack.c.b16 %v472, %v468
  %v653 = vpack.c.b16 %v473, %v469
  %v654 = vpack.c.b16 %v474, %v470
  %v655 = vpack.c.b16 %v475, %v471
  %v656 = vpack.c.b16 %v480, %v476
  %v657 = vpack.c.b16 %v481, %v477
  %v658 = vpack.c.b16 %v482, %v478
  %v659 = vpack.c.b16 %v483, %v479
  %v660 = vpack.c.b16 %v488, %v484
  %v661 = vpack.c.b16 %v489, %v485
  %v662 = vpack.c.b16 %v490, %v486
  %v663 = vpack.c.b16 %v491, %v487
  %v664 = vpack.c.b16 %v496, %v492
  %v665 = vpack.c.b16 %v497, %v493
  %v666 = vpack.c.b16 %v498, %v494
  %v667 = vpack.c.b16 %v499, %v495
  %v668 = vpack.c.b16 %v504, %v500
  %v669 = vpack.c.b16 %v505, %v501
  %v670 = vpack.c.b16 %v506, %v502
  %v671 = vpack.c.b16 %v507, %v503
  %v672 = vpack.c.b16 %v512, %v508
  %v673 = vpack.c.b16 %v513, %v509
  %v674 = vpack.c.b16 %v514, %v510
  %v675 = vpack.c.b16 %v515, %v511
  %v676 = vpack.c.b16 %v520, %v516
  %v677 = vpack.c.b16 %v521, %v517
  %v678 = vpack.c.b16 %v522, %v518
  %v679 = vpack.c.b16 %v523, %v519
  %v680 = vpack.c.b16 %v528, %v524
  %v681 = vpack.c.b16 %v529, %v525
  %v682 = vpack.c.b16 %v530, %v526
  %v683 = vpack.c.b16 %v531, %v527
  %v684 = vpack.c.b16 %v536, %v532
  %v685 = vpack.c.b16 %v537, %v533
  %v686 = vpack.c.b16 %v538, %v534
  %v687 = vpack.c.b16 %v539, %v535
  %v688 = vpack.c.b16 %v544, %v540
  %v689 = vpack.c.b16 %v545, %v541
  %v690 = vpack.c.b16 %v546, %v542
  %v691 = vpack.c.b16 %v547, %v543
  %v692 = vpack.c.b16 %v552, %v548
  %v693 = vpack.c.b16 %v553, %v549
  %v694 = vpack.c.b16 %v554, %v550
  %v695 = vpack.c.b16 %v555, %v551
  %v696 = vpack.c.b16 %v560, %v556
  %v697 = vpack.c.b16 %v561, %v557
  %v698 = vpack.c.b16 %v562, %v558
  %v699 = vpack.c.b16 %v563, %v559
  %v700 = vpack.c.b16 %v568, %v564
  %v701 = vpack.c.b16 %v569, %v565
  %v702 = vpack.c.b16 %v570, %v566
  %v703 = vpack.c.b16 %v571, %v567
  %v704 = vpack.c.b16 %v576, %v572
  %v705 = vpack.c.b16 %v577, %v573
  %v706 = vpack.c.b16 %v578, %v574
  %v707 = vpack.c.b16 %v579, %v575
  %836 = vmatprep.subr.bf16.mxu0 %v581
  %837 = vmatpush1.bf16.msra.mxu0 %v580
  %838 = vmatprep.subr.bf16.mxu0 %v585
  %839 = vmatpush1.bf16.msra.mxu0 %v584
  %840 = vmatprep.subr.bf16.mxu0 %v589
  %841 = vmatpush1.bf16.msra.mxu0 %v588
  %842 = vmatprep.subr.bf16.mxu0 %v593
  %843 = vmatpush1.bf16.msra.mxu0 %v592
  %844 = vmatprep.subr.bf16.mxu0 %v597
  %845 = vmatpush1.bf16.msra.mxu0 %v596
  %846 = vmatprep.subr.bf16.mxu0 %v601
  %847 = vmatpush1.bf16.msra.mxu0 %v600
  %848 = vmatprep.subr.bf16.mxu0 %v605
  %849 = vmatpush1.bf16.msra.mxu0 %v604
  %850 = vmatprep.subr.bf16.mxu0 %v609
  %851 = vmatpush1.bf16.msra.mxu0 %v608
  %852 = vmatprep.subr.bf16.mxu0 %v613
  %853 = vmatpush1.bf16.msra.mxu0 %v612
  %854 = vmatprep.subr.bf16.mxu0 %v617
  %855 = vmatpush1.bf16.msra.mxu0 %v616
  %856 = vmatprep.subr.bf16.mxu0 %v621
  %857 = vmatpush1.bf16.msra.mxu0 %v620
  %858 = vmatprep.subr.bf16.mxu0 %v625
  %859 = vmatpush1.bf16.msra.mxu0 %v624
  %860 = vmatprep.subr.bf16.mxu0 %v629
  %861 = vmatpush1.bf16.msra.mxu0 %v628
  %862 = vmatprep.subr.bf16.mxu0 %v633
  %863 = vmatpush1.bf16.msra.mxu0 %v632
  %864 = vmatprep.subr.bf16.mxu0 %v637
  %865 = vmatpush1.bf16.msra.mxu0 %v636
  %866 = vmatprep.subr.bf16.mxu0 %v641
  %867 = vmatpush1.bf16.msra.mxu0 %v640
  %868 = vmatprep.mubr.bf16.mxu0 %v181
  %869 = vmatmul.mubr.bf16.gmra.mrb[0].mxu0 %v180
  %v870 = vpop.f32.mrb[0].mxu0
  %v871 = vadd.f32 0.0, %v870
  %v872 = vpop.f32.mrb[0].mxu0
  %v873 = vadd.f32 0.0, %v872
  %v874 = vpop.f32.mrb[0].mxu0
  %v875 = vadd.f32 0.0, %v874
  %v876 = vpop.f32.mrb[0].mxu0
  %v877 = vadd.f32 0.0, %v876
  %878 = vmatprep.mubr.bf16.mxu0 %v185
  %879 = vmatmul.mubr.bf16.gmra.mrb[0].mxu0 %v184
  %v880 = vpop.f32.mrb[0].mxu0
  %v881 = vadd.f32 0.0, %v880
  %v882 = vpop.f32.mrb[0].mxu0
  %v883 = vadd.f32 0.0, %v882
  %v884 = vpop.f32.mrb[0].mxu0
  %v885 = vadd.f32 0.0, %v884
  %v886 = vpop.f32.mrb[0].mxu0
  %v887 = vadd.f32 0.0, %v886
  %888 = vdwg.mxu0
  %889 = vmatprep.subr.bf16.mxu0 %v645
  %890 = vmatpush1.bf16.msra.mxu0 %v644
  %891 = vmatprep.subr.bf16.mxu0 %v649
  %892 = vmatpush1.bf16.msra.mxu0 %v648
  %893 = vmatprep.subr.bf16.mxu0 %v653
  %894 = vmatpush1.bf16.msra.mxu0 %v652
  %895 = vmatprep.subr.bf16.mxu0 %v657
  %896 = vmatpush1.bf16.msra.mxu0 %v656
  %897 = vmatprep.subr.bf16.mxu0 %v661
  %898 = vmatpush1.bf16.msra.mxu0 %v660
  %899 = vmatprep.subr.bf16.mxu0 %v665
  %900 = vmatpush1.bf16.msra.mxu0 %v664
  %901 = vmatprep.subr.bf16.mxu0 %v669
  %902 = vmatpush1.bf16.msra.mxu0 %v668
  %903 = vmatprep.subr.bf16.mxu0 %v673
  %904 = vmatpush1.bf16.msra.mxu0 %v672
  %905 = vmatprep.subr.bf16.mxu0 %v677
  %906 = vmatpush1.bf16.msra.mxu0 %v676
  %907 = vmatprep.subr.bf16.mxu0 %v681
  %908 = vmatpush1.bf16.msra.mxu0 %v680
  %909 = vmatprep.subr.bf16.mxu0 %v685
  %910 = vmatpush1.bf16.msra.mxu0 %v684
  %911 = vmatprep.subr.bf16.mxu0 %v689
  %912 = vmatpush1.bf16.msra.mxu0 %v688
  %913 = vmatprep.subr.bf16.mxu0 %v693
  %914 = vmatpush1.bf16.msra.mxu0 %v692
  %915 = vmatprep.subr.bf16.mxu0 %v697
  %916 = vmatpush1.bf16.msra.mxu0 %v696
  %917 = vmatprep.subr.bf16.mxu0 %v701
  %918 = vmatpush1.bf16.msra.mxu0 %v700
  %919 = vmatprep.subr.bf16.mxu0 %v705
  %920 = vmatpush1.bf16.msra.mxu0 %v704
  %921 = vmatprep.mubr.bf16.mxu0 %v183
  %922 = vmatmul.mubr.bf16.gmra.mrb[0].mxu0 %v182
  %v923 = vpop.f32.mrb[0].mxu0
  %v924 = vadd.f32 %v871, %v923
  %v925 = vpop.f32.mrb[0].mxu0
  %v926 = vadd.f32 %v873, %v925
  %v927 = vpop.f32.mrb[0].mxu0
  %v928 = vadd.f32 %v875, %v927
  %v929 = vpop.f32.mrb[0].mxu0
  %v930 = vadd.f32 %v877, %v929
  %931 = vmatprep.mubr.bf16.mxu0 %v187
  %932 = vmatmul.mubr.bf16.gmra.mrb[0].mxu0 %v186
  %v933 = vpop.f32.mrb[0].mxu0
  %v934 = vadd.f32 %v881, %v933
  %v935 = vpop.f32.mrb[0].mxu0
  %v936 = vadd.f32 %v883, %v935
  %v937 = vpop.f32.mrb[0].mxu0
  %v938 = vadd.f32 %v885, %v937
  %v939 = vpop.f32.mrb[0].mxu0
  %v940 = vadd.f32 %v887, %v939
  %941 = vdwg.mxu0
  %942 = vmatprep.subr.bf16.mxu0 %v583
  %943 = vmatpush1.bf16.msra.mxu0 %v582
  %944 = vmatprep.subr.bf16.mxu0 %v587
  %945 = vmatpush1.bf16.msra.mxu0 %v586
  %946 = vmatprep.subr.bf16.mxu0 %v591
  %947 = vmatpush1.bf16.msra.mxu0 %v590
  %948 = vmatprep.subr.bf16.mxu0 %v595
  %949 = vmatpush1.bf16.msra.mxu0 %v594
  %950 = vmatprep.subr.bf16.mxu0 %v599
  %951 = vmatpush1.bf16.msra.mxu0 %v598
  %952 = vmatprep.subr.bf16.mxu0 %v603
  %953 = vmatpush1.bf16.msra.mxu0 %v602
  %954 = vmatprep.subr.bf16.mxu0 %v607
  %955 = vmatpush1.bf16.msra.mxu0 %v606
  %956 = vmatprep.subr.bf16.mxu0 %v611
  %957 = vmatpush1.bf16.msra.mxu0 %v610
  %958 = vmatprep.subr.bf16.mxu0 %v615
  %959 = vmatpush1.bf16.msra.mxu0 %v614
  %960 = vmatprep.subr.bf16.mxu0 %v619
  %961 = vmatpush1.bf16.msra.mxu0 %v618
  %962 = vmatprep.subr.bf16.mxu0 %v623
  %963 = vmatpush1.bf16.msra.mxu0 %v622
  %964 = vmatprep.subr.bf16.mxu0 %v627
  %965 = vmatpush1.bf16.msra.mxu0 %v626
  %966 = vmatprep.subr.bf16.mxu0 %v631
  %967 = vmatpush1.bf16.msra.mxu0 %v630
  %968 = vmatprep.subr.bf16.mxu0 %v635
  %969 = vmatpush1.bf16.msra.mxu0 %v634
  %970 = vmatprep.subr.bf16.mxu0 %v639
  %971 = vmatpush1.bf16.msra.mxu0 %v638
  %972 = vmatprep.subr.bf16.mxu0 %v643
  %973 = vmatpush1.bf16.msra.mxu0 %v642
  %974 = vmatprep.mubr.bf16.mxu0 %v181
  %975 = vmatmul.mubr.bf16.gmra.mrb[0].mxu0 %v180
  %v976 = vpop.f32.mrb[0].mxu0
  %v977 = vadd.f32 0.0, %v976
  %v978 = vpop.f32.mrb[0].mxu0
  %v979 = vadd.f32 0.0, %v978
  %v980 = vpop.f32.mrb[0].mxu0
  %v981 = vadd.f32 0.0, %v980
  %v982 = vpop.f32.mrb[0].mxu0
  %v983 = vadd.f32 0.0, %v982
  %984 = vmatprep.mubr.bf16.mxu0 %v185
  %985 = vmatmul.mubr.bf16.gmra.mrb[0].mxu0 %v184
  %v986 = vpop.f32.mrb[0].mxu0
  %v987 = vadd.f32 0.0, %v986
  %v988 = vpop.f32.mrb[0].mxu0
  %v989 = vadd.f32 0.0, %v988
  %v990 = vpop.f32.mrb[0].mxu0
  %v991 = vadd.f32 0.0, %v990
  %v992 = vpop.f32.mrb[0].mxu0
  %v993 = vadd.f32 0.0, %v992
  %994 = vdwg.mxu0
  %995 = vmatprep.subr.bf16.mxu0 %v647
  %996 = vmatpush1.bf16.msra.mxu0 %v646
  %997 = vmatprep.subr.bf16.mxu0 %v651
  %998 = vmatpush1.bf16.msra.mxu0 %v650
  %999 = vmatprep.subr.bf16.mxu0 %v655
  %1000 = vmatpush1.bf16.msra.mxu0 %v654
  %1001 = vmatprep.subr.bf16.mxu0 %v659
  %1002 = vmatpush1.bf16.msra.mxu0 %v658
  %1003 = vmatprep.subr.bf16.mxu0 %v663
  %1004 = vmatpush1.bf16.msra.mxu0 %v662
  %1005 = vmatprep.subr.bf16.mxu0 %v667
  %1006 = vmatpush1.bf16.msra.mxu0 %v666
  %1007 = vmatprep.subr.bf16.mxu0 %v671
  %1008 = vmatpush1.bf16.msra.mxu0 %v670
  %1009 = vmatprep.subr.bf16.mxu0 %v675
  %1010 = vmatpush1.bf16.msra.mxu0 %v674
  %1011 = vmatprep.subr.bf16.mxu0 %v679
  %1012 = vmatpush1.bf16.msra.mxu0 %v678
  %1013 = vmatprep.subr.bf16.mxu0 %v683
  %1014 = vmatpush1.bf16.msra.mxu0 %v682
  %1015 = vmatprep.subr.bf16.mxu0 %v687
  %1016 = vmatpush1.bf16.msra.mxu0 %v686
  %1017 = vmatprep.subr.bf16.mxu0 %v691
  %1018 = vmatpush1.bf16.msra.mxu0 %v690
  %1019 = vmatprep.subr.bf16.mxu0 %v695
  %1020 = vmatpush1.bf16.msra.mxu0 %v694
  %1021 = vmatprep.subr.bf16.mxu0 %v699
  %1022 = vmatpush1.bf16.msra.mxu0 %v698
  %1023 = vmatprep.subr.bf16.mxu0 %v703
  %1024 = vmatpush1.bf16.msra.mxu0 %v702
  %1025 = vmatprep.subr.bf16.mxu0 %v707
  %1026 = vmatpush1.bf16.msra.mxu0 %v706
  %1027 = vmatprep.mubr.bf16.mxu0 %v183
  %1028 = vmatmul.mubr.bf16.gmra.mrb[0].mxu0 %v182
  %v1029 = vpop.f32.mrb[0].mxu0
  %v1030 = vadd.f32 %v977, %v1029
  %v1031 = vpop.f32.mrb[0].mxu0
  %v1032 = vadd.f32 %v979, %v1031
  %v1033 = vpop.f32.mrb[0].mxu0
  %v1034 = vadd.f32 %v981, %v1033
  %v1035 = vpop.f32.mrb[0].mxu0
  %v1036 = vadd.f32 %v983, %v1035
  %1037 = vmatprep.mubr.bf16.mxu0 %v187
  %1038 = vmatmul.mubr.bf16.gmra.mrb[0].mxu0 %v186
  %v1039 = vpop.f32.mrb[0].mxu0
  %v1040 = vadd.f32 %v987, %v1039
  %v1041 = vpop.f32.mrb[0].mxu0
  %v1042 = vadd.f32 %v989, %v1041
  %v1043 = vpop.f32.mrb[0].mxu0
  %v1044 = vadd.f32 %v991, %v1043
  %v1045 = vpop.f32.mrb[0].mxu0
  %v1046 = vadd.f32 %v993, %v1045
  %1047 = vdwg.mxu0
  %v1048 = vmax.f32 %v924, %v926
  %v1049 = vmax.f32 %v928, %v930
  %v1050 = vmax.f32 %v934, %v936
  %v1051 = vmax.f32 %v938, %v940
  %v1052 = vmax.f32 %v1030, %v1032
  %v1053 = vmax.f32 %v1034, %v1036
  %v1054 = vmax.f32 %v1040, %v1042
  %v1055 = vmax.f32 %v1044, %v1046
  %v1056 = vmax.f32 %v1048, %v1052
  %v1057 = vmax.f32 %v1049, %v1053
  %v1058 = vmax.f32 %v1050, %v1054
  %v1059 = vmax.f32 %v1051, %v1055
  %v1060 = vld [vmem:[%s2] sm:$0x1]
  %v1062 = vlaneseq
  %v1063 = vshrl.u32 %v1062, 7
  %v1064 = vsub.s32 0, %v1063
  %v1065 = vrot.slane %v1060, %v1064
  %v1067 = vadd.f32 %v1056, %v1065
  %v1068 = vadd.f32 %v1057, %v1065
  %v1069 = vadd.f32 %v1058, %v1065
  %v1070 = vadd.f32 %v1059, %v1065
  %v1071 = vmax.f32 %v1067, 0.0
  %v1072 = vmax.f32 %v1068, 0.0
  %v1073 = vmax.f32 %v1069, 0.0
  %v1074 = vmax.f32 %v1070, 0.0
  %v1075 = vadd.f32 %v1071, %v1072
  %v1076 = vadd.f32 %v1075, %v1073
  %v1077 = vadd.f32 %v1076, %v1074
  %v1078 = vrot.slane %v1077, 4
  %v1079 = vadd.f32 %v1077, %v1078
  %v1080 = vrot.slane %v1079, 2
  %v1081 = vadd.f32 %v1079, %v1080
  %v1082 = vrot.slane %v1081, 1
  %v1083 = vadd.f32 %v1081, %v1082
  %v1084 = vmul.f32 %v1083, 0.03125
  %v1085 = vmul.f32 %v1071, %v1071
  %v1086 = vmul.f32 %v1072, %v1072
  %v1087 = vmul.f32 %v1073, %v1073
  %v1088 = vmul.f32 %v1074, %v1074
  %v1089 = vadd.f32 %v1085, %v1086
  %v1090 = vadd.f32 %v1089, %v1087
  %v1091 = vadd.f32 %v1090, %v1088
  %v1092 = vrot.slane %v1091, 4
  %v1093 = vadd.f32 %v1091, %v1092
  %v1094 = vrot.slane %v1093, 2
  %v1095 = vadd.f32 %v1093, %v1094
  %v1096 = vrot.slane %v1095, 1
  %v1097 = vadd.f32 %v1095, %v1096
  %v1098 = vmul.f32 %v1097, 0.03125
  %v1099 = vmul.f32 %v1084, %v1084
  %v1100 = vsub.f32 %v1098, %v1099
  %v1101 = vmax.f32 %v1100, 0.0
  %v1102 = vld [vmem:[%s3] sm:$0x1]
  %v1103 = vadd.f32 %v1101, 1e-05
  %v1104 = vrsqrt.pop %v1103
  %v1105 = vmul.f32 %v1102, %v1104
  %v1106 = vld [vmem:[%s4] sm:$0x1]
  %v1107 = vmul.f32 %v1084, %v1105
  %v1108 = vsub.f32 %v1106, %v1107
  %v1110 = vlaneseq
  %v1111 = vshrl.u32 %v1110, 7
  %v1112 = vsub.s32 0, %v1111
  %v1113 = vrot.slane %v1105, %v1112
  %v1115 = vmul.f32 %v1071, %v1113
  %v1116 = vmul.f32 %v1072, %v1113
  %v1117 = vmul.f32 %v1073, %v1113
  %v1118 = vmul.f32 %v1074, %v1113
  %v1120 = vlaneseq
  %v1121 = vshrl.u32 %v1120, 7
  %v1122 = vsub.s32 0, %v1121
  %v1123 = vrot.slane %v1108, %v1122
  %v1125 = vadd.f32 %v1115, %v1123
  %v1126 = vadd.f32 %v1116, %v1123
  %v1127 = vadd.f32 %v1117, %v1123
  %v1128 = vadd.f32 %v1118, %v1123
  %1129 = vst [vmem:[%s5] sm:$0xff] %v1125
  %1130 = vst [vmem:[%s5 + $0x8] sm:$0xff] %v1126
  %1131 = vst [vmem:[%s5 + $0x10] sm:$0xff] %v1127
  %1132 = vst [vmem:[%s5 + $0x18] sm:$0xff] %v1128
  // Predicated region
  $region22: #{mini_conv_forward.6} parent=0 // pred_check
    _
  $region23: #{mini_conv_forward.6} parent=0 // pred_check_branch
    %1134 = sbr.rel (0) target = $region25
  $region24: #{mini_conv_forward.6} parent=0 // pred_region
    _
  $region25: #{mini_conv_forward.6} parent=0 // pred_fallthru
    _
  // Predicated region
  $region26: #{mini_conv_forward.6} parent=0 // pred_check
    _
  $region27: #{mini_conv_forward.6} parent=0 // pred_check_branch
    %1136 = sbr.rel (0) target = $region29
  $region28: #{mini_conv_forward.6} parent=0 // pred_region
    _
  $region29: #{mini_conv_forward.6} parent=0 // pred_fallthru
    _

</llo_original>
